<compile_context>
chip_gen: v7x
topology: tpu7x:2x2x1
jax: 0.10.0
libtpu: 0.0.40
codegen_flags: <defaults>
</compile_context>

<pallas_src>
import functools

import jax
import jax.numpy as jnp
from jax.experimental import pallas as pl
from jax.experimental.pallas import tpu as pltpu

_EPS = 1e-5   # BatchNorm2d default eps


# ----------------------------------------------------------------------------
# Shared in-kernel conv helper: 3x3, stride 1, pad 1, as 9 accumulating
# matmuls on lane-shifted slices of a flat zero-padded image.
# ----------------------------------------------------------------------------
def _border_masks(width, hw):
    # Built once per grid step (hoisted out of the 9-tap loop).
    lane = jax.lax.broadcasted_iota(jnp.int32, (1, hw), 1)
    wcol = lane % width
    return wcol != 0, wcol != (width - 1)     # keep-mask for dw=-1 / dw=+1


def _conv3x3_image(x_ref, img, w_ref, bias, m_left, m_right, *, width, hw, pad):
    """Conv3x3(pad=1) + bias for image `img` of the current block.

    x_ref : (B, Cin, hw + 2*pad) ref; each image row-major flattened with
            `pad = width + 1` zero lanes on both sides.
    w_ref : (9, Cout, Cin) ref; tap index t = kh*3 + kw.
    Returns (Cout, hw) float32.
    """
    contribs = []
    for dw in (-1, 0, 1):
        acc = None
        for dh in (-1, 0, 1):
            t = (dh + 1) * 3 + (dw + 1)
            start = pad + dh * width + dw            # static, always in-bounds
            xs = x_ref[img, :, pl.ds(start, hw)]     # (Cin, hw)
            c = jnp.dot(w_ref[t], xs, preferred_element_type=jnp.float32)
            acc = c if acc is None else acc + c
        contribs.append(acc)
    # Left/right image borders: zero the dw=+-1 tap-group contributions at the
    # border columns (2 hoisted selects total; top/bottom rows already read
    # the flat zero padding).
    return (contribs[1]
            + jnp.where(m_left, contribs[0], 0.0)
            + jnp.where(m_right, contribs[2], 0.0)
            + bias)


# ----------------------------------------------------------------------------
# Kernels.
# ----------------------------------------------------------------------------
def conv_prelu_kernel(x_ref, w_ref, b_ref, a_ref, o_ref, *, width, hw, pad):
    # x_ref: (B, Cin, hw+2*pad)   w_ref: (9, Cout, Cin)   b_ref: (Cout, 1)
    # a_ref: SMEM (1,)            o_ref: (B, Cout, hw)
    m_left, m_right = _border_masks(width, hw)
    bias = b_ref[...]
    alpha = a_ref[0]
    for img in range(o_ref.shape[0]):
        y = _conv3x3_image(x_ref, img, w_ref, bias, m_left, m_right,
                           width=width, hw=hw, pad=pad)
        o_ref[img] = jnp.where(y >= 0.0, y, alpha * y).astype(o_ref.dtype)


def conv_stats_kernel(x_ref, w_ref, b_ref, y_ref, mean_ref, var_ref,
                      sum_ref, ssq_ref, *, width, hw, pad, inv_count):
    # Pass 1 of the BN path: conv + bias, streamed over batch blocks; per
    # channel sum / sum-of-squares accumulate in VMEM scratch across steps.
    step = pl.program_id(0)

    @pl.when(step == 0)
    def _init():
        sum_ref[...] = jnp.zeros_like(sum_ref)
        ssq_ref[...] = jnp.zeros_like(ssq_ref)

    m_left, m_right = _border_masks(width, hw)
    bias = b_ref[...]
    for img in range(y_ref.shape[0]):
        y = _conv3x3_image(x_ref, img, w_ref, bias, m_left, m_right,
                           width=width, hw=hw, pad=pad)
        y_ref[img] = y.astype(y_ref.dtype)
        sum_ref[...] += jnp.sum(y, axis=1, keepdims=True)
        ssq_ref[...] += jnp.sum(y * y, axis=1, keepdims=True)

    @pl.when(step == pl.num_programs(0) - 1)
    def _finalize():
        mean = sum_ref[...] * inv_count
        mean_ref[...] = mean
        var_ref[...] = ssq_ref[...] * inv_count - mean * mean   # biased var


def bn_prelu_kernel(y_ref, mean_ref, var_ref, g_ref, bt_ref, a_ref, o_ref):
    # Pass 2 of the BN path: normalize + affine + PReLU.
    y = y_ref[...]                                   # (B, Cout, hw) f32
    mean = mean_ref[...][None]                       # (1, Cout, 1)
    inv_std = jax.lax.rsqrt(var_ref[...] + _EPS)[None]
    z = (y - mean) * inv_std * g_ref[...][None] + bt_ref[...][None]
    alpha = a_ref[0]
    o_ref[...] = jnp.where(z >= 0.0, z, alpha * z).astype(o_ref.dtype)


# ----------------------------------------------------------------------------
# Wrappers.
# ----------------------------------------------------------------------------
def _pick_block_n(n, bytes_per_image, max_images, vmem_budget=8 << 20):
    """Largest divisor of n (<= max_images) whose block fits the VMEM budget."""
    best = 1
    for cand in range(1, max_images + 1):
        if n % cand == 0 and cand * bytes_per_image <= vmem_budget:
            best = cand
    return best


def _vmem_limit(block_bytes):
    # Double-buffered blocks + slack, clamped below v7x physical VMEM.
    return int(min(max(2 * block_bytes + (2 << 20), 4 << 20), 64 << 20))


def _prep(x, w_oihw, compute_dtype):
    n, cin, h, w = x.shape
    cout = w_oihw.shape[0]
    hw = h * w
    pad = w + 1                                      # flat zero pad per image
    x_pad = jnp.pad(x.reshape(n, cin, hw), ((0, 0), (0, 0), (pad, pad)))
    w_taps = jnp.transpose(w_oihw, (2, 3, 0, 1)).reshape(9, cout, cin)
    return x_pad.astype(compute_dtype), w_taps.astype(compute_dtype), hw, pad


@functools.partial(jax.jit,
                   static_argnames=("max_images_per_step", "compute_dtype"))
def conv_prelu_forward(x, w_oihw, bias, prelu_a, *,
                       max_images_per_step=4, compute_dtype=jnp.float32):
    """Default ConvModule: conv3x3(pad=1, bias) -> PReLU (norm=None)."""
    n, cin, h, w = x.shape
    cout = w_oihw.shape[0]
    x_pad, w_taps, hw, pad = _prep(x, w_oihw, compute_dtype)
    lpad = hw + 2 * pad
    b2 = bias.reshape(cout, 1).astype(jnp.float32)
    alpha = prelu_a.reshape(1).astype(jnp.float32)

    isz = jnp.dtype(compute_dtype).itemsize
    bytes_per_image = cin * lpad * isz + cout * hw * 4
    bn = _pick_block_n(n, bytes_per_image, max_images_per_step)
    params = pltpu.CompilerParams(
        dimension_semantics=("parallel",),
        vmem_limit_bytes=_vmem_limit(
            bn * bytes_per_image + w_taps.size * isz + cout * 4))

    out = pl.pallas_call(
        functools.partial(conv_prelu_kernel, width=w, hw=hw, pad=pad),
        out_shape=jax.ShapeDtypeStruct((n, cout, hw), jnp.float32),
        grid=(n // bn,),
        in_specs=[
            pl.BlockSpec((bn, cin, lpad), lambda i: (i, 0, 0)),
            pl.BlockSpec((9, cout, cin), lambda i: (0, 0, 0)),
            pl.BlockSpec((cout, 1), lambda i: (0, 0)),
            pl.BlockSpec(memory_space=pltpu.MemorySpace.SMEM),
        ],
        out_specs=pl.BlockSpec((bn, cout, hw), lambda i: (i, 0, 0)),
        compiler_params=params,
    )(x_pad, w_taps, b2, alpha)
    return out.reshape(n, cout, h, w)


@functools.partial(jax.jit,
                   static_argnames=("max_images_per_step", "compute_dtype"))
def conv_bn_prelu_forward(x, w_oihw, bias, gamma, beta, prelu_a, *,
                          max_images_per_step=4, compute_dtype=jnp.float32):
    """ConvModule with norm='batch': conv3x3 -> BatchNorm2d(train) -> PReLU."""
    n, cin, h, w = x.shape
    cout = w_oihw.shape[0]
    x_pad, w_taps, hw, pad = _prep(x, w_oihw, compute_dtype)
    lpad = hw + 2 * pad
    b2 = bias.reshape(cout, 1).astype(jnp.float32)
    g2 = gamma.reshape(cout, 1).astype(jnp.float32)
    bt2 = beta.reshape(cout, 1).astype(jnp.float32)
    alpha = prelu_a.reshape(1).astype(jnp.float32)

    isz = jnp.dtype(compute_dtype).itemsize
    bytes_per_image = cin * lpad * isz + cout * hw * 4
    bn = _pick_block_n(n, bytes_per_image, max_images_per_step)
    inv_count = 1.0 / float(n * hw)

    # Pass 1: streamed conv + bias, per-channel sum/sumsq accumulated across
    # grid steps (reduction axis -> "arbitrary").
    p1_params = pltpu.CompilerParams(
        dimension_semantics=("arbitrary",),
        vmem_limit_bytes=_vmem_limit(
            bn * bytes_per_image + w_taps.size * isz + cout * 4))
    y, mean, var = pl.pallas_call(
        functools.partial(conv_stats_kernel, width=w, hw=hw, pad=pad,
                          inv_count=inv_count),
        out_shape=(jax.ShapeDtypeStruct((n, cout, hw), jnp.float32),
                   jax.ShapeDtypeStruct((cout, 1), jnp.float32),
                   jax.ShapeDtypeStruct((cout, 1), jnp.float32)),
        grid=(n // bn,),
        in_specs=[
            pl.BlockSpec((bn, cin, lpad), lambda i: (i, 0, 0)),
            pl.BlockSpec((9, cout, cin), lambda i: (0, 0, 0)),
            pl.BlockSpec((cout, 1), lambda i: (0, 0)),
        ],
        out_specs=(pl.BlockSpec((bn, cout, hw), lambda i: (i, 0, 0)),
                   pl.BlockSpec((cout, 1), lambda i: (0, 0)),
                   pl.BlockSpec((cout, 1), lambda i: (0, 0))),
        scratch_shapes=[pltpu.VMEM((cout, 1), jnp.float32),
                        pltpu.VMEM((cout, 1), jnp.float32)],
        compiler_params=p1_params,
    )(x_pad, w_taps, b2)

    # Pass 2: normalize + affine + PReLU, parallel over batch blocks.
    p2_params = pltpu.CompilerParams(
        dimension_semantics=("parallel",),
        vmem_limit_bytes=_vmem_limit(2 * bn * cout * hw * 4))
    out = pl.pallas_call(
        bn_prelu_kernel,
        out_shape=jax.ShapeDtypeStruct((n, cout, hw), jnp.float32),
        grid=(n // bn,),
        in_specs=[
            pl.BlockSpec((bn, cout, hw), lambda i: (i, 0, 0)),
            pl.BlockSpec((cout, 1), lambda i: (0, 0)),
            pl.BlockSpec((cout, 1), lambda i: (0, 0)),
            pl.BlockSpec((cout, 1), lambda i: (0, 0)),
            pl.BlockSpec((cout, 1), lambda i: (0, 0)),
            pl.BlockSpec(memory_space=pltpu.MemorySpace.SMEM),
        ],
        out_specs=pl.BlockSpec((bn, cout, hw), lambda i: (i, 0, 0)),
        compiler_params=p2_params,
    )(y, mean, var, g2, bt2, alpha)
    return out.reshape(n, cout, h, w)


# ----------------------------------------------------------------------------
# Pure-JAX references for correctness checks.
# ----------------------------------------------------------------------------
def _ref_conv(x, w_oihw, bias):
    y = jax.lax.conv_general_dilated(
        x, w_oihw, window_strides=(1, 1), padding=((1, 1), (1, 1)),
        dimension_numbers=("NCHW", "OIHW", "NCHW"),
        precision=jax.lax.Precision.HIGHEST)
    return y + bias[None, :, None, None]


def ref_conv_prelu(x, w_oihw, bias, a):
    y = _ref_conv(x, w_oihw, bias)
    return jnp.where(y >= 0.0, y, a * y)


def ref_conv_bn_prelu(x, w_oihw, bias, gamma, beta, a):
    y = _ref_conv(x, w_oihw, bias)
    mean = jnp.mean(y, axis=(0, 2, 3), keepdims=True)
    var = jnp.mean(jnp.square(y - mean), axis=(0, 2, 3), keepdims=True)
    y = (y - mean) * jax.lax.rsqrt(var + _EPS)
    y = y * gamma[None, :, None, None] + beta[None, :, None, None]
    return jnp.where(y >= 0.0, y, a * y)


if __name__ == "__main__":
    # ConvModule(in_ch=4, out_ch=4, kernel_size=3, stride=1, padding=1,
    #            bias=True, activation='prelu', norm=None / 'batch')
    # N=8 so both the multi-step "parallel" grid and the multi-step BN stats
    # accumulation ("arbitrary" grid) paths are exercised (block_n=4 -> grid 2).
    N, Cin, H, W = 8, 4, 16, 16
    Cout = 4

    key = jax.random.PRNGKey(0)
    kx, kw, kb, kg, kbeta = jax.random.split(key, 5)

    x = jax.random.normal(kx, (N, Cin, H, W), jnp.float32)

    fan_in = Cin * 3 * 3
    bound = 1.0 / (fan_in ** 0.5)
    weight = jax.random.uniform(kw, (Cout, Cin, 3, 3), jnp.float32, -bound, bound)
    bias = jax.random.uniform(kb, (Cout,), jnp.float32, -bound, bound)
    prelu_a = jnp.full((1,), 0.25, jnp.float32)       # nn.PReLU() default
    gamma = jax.random.uniform(kg, (Cout,), jnp.float32, 0.5, 1.5)
    beta = 0.1 * jax.random.normal(kbeta, (Cout,), jnp.float32)

    # Default config: conv -> PReLU.
    out = jax.block_until_ready(conv_prelu_forward(x, weight, bias, prelu_a))
    ref = ref_conv_prelu(x, weight, bias, prelu_a)
    assert out.shape == (N, Cout, H, W)
    assert jnp.allclose(out, ref, atol=2e-4, rtol=2e-4), \
        float(jnp.max(jnp.abs(out - ref)))

    # norm='batch' config: conv -> BatchNorm2d(train stats) -> PReLU.
    out_bn = jax.block_until_ready(
        conv_bn_prelu_forward(x, weight, bias, gamma, beta, prelu_a))
    ref_bn = ref_conv_bn_prelu(x, weight, bias, gamma, beta, prelu_a)
    assert out_bn.shape == (N, Cout, H, W)
    assert jnp.allclose(out_bn, ref_bn, atol=2e-4, rtol=2e-4), \
        float(jnp.max(jnp.abs(out_bn - ref_bn)))

    print("KERNEL_OK")
</pallas_src>

<mosaic_0001>
module attributes {stable_mosaic.version = 11 : i64} {
  func.func @conv_prelu_kernel(%arg0: i32, %arg1: memref<4x4x290xf32, #tpu.memory_space<vmem>>, %arg2: memref<9x4x4xf32, #tpu.memory_space<vmem>>, %arg3: memref<4x1xf32, #tpu.memory_space<vmem>>, %arg4: memref<1xf32, #tpu.memory_space<smem>>, %arg5: memref<4x4x256xf32, #tpu.memory_space<vmem>>) attributes {dimension_semantics = [#tpu.dimension_semantics<parallel>], iteration_bounds = array<i64: 2>, scalar_prefetch = 0 : i64, scratch_operands = 0 : i64, tpu.core_type = #tpu.core_type<tc>, window_params = [{transform_indices = @transform_0, window_bounds = array<i64: 4, 4, 290>}, {pipeline_mode = #tpu.pipeline_mode<synchronous>, transform_indices = @transform_1, window_bounds = array<i64: 9, 4, 4>}, {pipeline_mode = #tpu.pipeline_mode<synchronous>, transform_indices = @transform_2, window_bounds = array<i64: 4, 1>}, {transform_indices = @transform_3, window_bounds = array<i64: 1>}, {transform_indices = @transform_4, window_bounds = array<i64: 4, 4, 256>}]} {
    %0 = tpu.iota {dimensions = array<i32: 1>} : vector<1x256xi32>
    %c16_i32 = arith.constant 16 : i32
    %c0_i32 = arith.constant 0 : i32
    %1 = arith.cmpi eq, %c16_i32, %c0_i32 : i32
    %c1_i32 = arith.constant 1 : i32
    %2 = arith.select %1, %c1_i32, %c16_i32 : i32
    %3 = vector.broadcast %2 : i32 to vector<1x256xi32>
    %4 = arith.remsi %0, %3 : vector<1x256xi32>
    %c0_i32_0 = arith.constant 0 : i32
    %5 = vector.broadcast %c0_i32_0 : i32 to vector<1x256xi32>
    %6 = arith.cmpi ne, %4, %5 : vector<1x256xi32>
    %c0_i32_1 = arith.constant 0 : i32
    %7 = vector.broadcast %c0_i32_1 : i32 to vector<1x256xi32>
    %8 = arith.cmpi slt, %4, %7 : vector<1x256xi32>
    %c0_i32_2 = arith.constant 0 : i32
    %9 = arith.cmpi slt, %2, %c0_i32_2 : i32
    %10 = vector.broadcast %9 : i1 to vector<1x256xi1>
    %11 = vector.broadcast %10 : vector<1x256xi1> to vector<1x256xi1>
    %12 = arith.xori %8, %11 : vector<1x256xi1>
    %13 = arith.andi %12, %6 : vector<1x256xi1>
    %14 = vector.broadcast %2 : i32 to vector<1x256xi32>
    %15 = arith.addi %4, %14 : vector<1x256xi32>
    %16 = arith.select %13, %15, %4 : vector<1x256xi1>, vector<1x256xi32>
    %c0_i32_3 = arith.constant 0 : i32
    %17 = vector.broadcast %c0_i32_3 : i32 to vector<1x256xi32>
    %18 = arith.cmpi ne, %16, %17 : vector<1x256xi32>
    %c15_i32 = arith.constant 15 : i32
    %19 = vector.broadcast %c15_i32 : i32 to vector<1x256xi32>
    %20 = arith.cmpi ne, %16, %19 : vector<1x256xi32>
    %c0 = arith.constant 0 : index
    %c0_4 = arith.constant 0 : index
    %21 = vector.load %arg3[%c0, %c0_4] : memref<4x1xf32, #tpu.memory_space<vmem>>, vector<4x1xf32>
    %c0_5 = arith.constant 0 : index
    %22 = memref.load %arg4[%c0_5] : memref<1xf32, #tpu.memory_space<smem>>
    %c0_6 = arith.constant 0 : index
    %c0_7 = arith.constant 0 : index
    %c0_8 = arith.constant 0 : index
    %23 = vector.load %arg1[%c0_6, %c0_7, %c0_8] : memref<4x4x290xf32, #tpu.memory_space<vmem>>, vector<1x4x256xf32>
    %24 = vector.shape_cast %23 : vector<1x4x256xf32> to vector<4x256xf32>
    %c0_9 = arith.constant 0 : index
    %c0_10 = arith.constant 0 : index
    %c0_11 = arith.constant 0 : index
    %25 = vector.load %arg2[%c0_9, %c0_10, %c0_11] : memref<9x4x4xf32, #tpu.memory_space<vmem>>, vector<1x4x4xf32>
    %26 = vector.shape_cast %25 : vector<1x4x4xf32> to vector<4x4xf32>
    %cst = arith.constant dense<0.000000e+00> : vector<4x256xf32>
    %27 = tpu.matmul %26, %24, %cst {dimension_numbers = #tpu.dot_dimension_numbers<[1], [0], [0], [1], [0, 0, 1, 1], [], []>} : vector<4x4xf32>, vector<4x256xf32>, vector<4x256xf32> -> vector<4x256xf32>
    %c0_12 = arith.constant 0 : index
    %c0_13 = arith.constant 0 : index
    %c16 = arith.constant 16 : index
    %28 = vector.load %arg1[%c0_12, %c0_13, %c16] : memref<4x4x290xf32, #tpu.memory_space<vmem>>, vector<1x4x256xf32>
    %29 = vector.shape_cast %28 : vector<1x4x256xf32> to vector<4x256xf32>
    %c3 = arith.constant 3 : index
    %c0_14 = arith.constant 0 : index
    %c0_15 = arith.constant 0 : index
    %30 = vector.load %arg2[%c3, %c0_14, %c0_15] : memref<9x4x4xf32, #tpu.memory_space<vmem>>, vector<1x4x4xf32>
    %31 = vector.shape_cast %30 : vector<1x4x4xf32> to vector<4x4xf32>
    %cst_16 = arith.constant dense<0.000000e+00> : vector<4x256xf32>
    %32 = tpu.matmul %31, %29, %cst_16 {dimension_numbers = #tpu.dot_dimension_numbers<[1], [0], [0], [1], [0, 0, 1, 1], [], []>} : vector<4x4xf32>, vector<4x256xf32>, vector<4x256xf32> -> vector<4x256xf32>
    %33 = arith.addf %27, %32 : vector<4x256xf32>
    %c0_17 = arith.constant 0 : index
    %c0_18 = arith.constant 0 : index
    %c32 = arith.constant 32 : index
    %34 = vector.load %arg1[%c0_17, %c0_18, %c32] : memref<4x4x290xf32, #tpu.memory_space<vmem>>, vector<1x4x256xf32>
    %35 = vector.shape_cast %34 : vector<1x4x256xf32> to vector<4x256xf32>
    %c6 = arith.constant 6 : index
    %c0_19 = arith.constant 0 : index
    %c0_20 = arith.constant 0 : index
    %36 = vector.load %arg2[%c6, %c0_19, %c0_20] : memref<9x4x4xf32, #tpu.memory_space<vmem>>, vector<1x4x4xf32>
    %37 = vector.shape_cast %36 : vector<1x4x4xf32> to vector<4x4xf32>
    %cst_21 = arith.constant dense<0.000000e+00> : vector<4x256xf32>
    %38 = tpu.matmul %37, %35, %cst_21 {dimension_numbers = #tpu.dot_dimension_numbers<[1], [0], [0], [1], [0, 0, 1, 1], [], []>} : vector<4x4xf32>, vector<4x256xf32>, vector<4x256xf32> -> vector<4x256xf32>
    %39 = arith.addf %33, %38 : vector<4x256xf32>
    %c0_22 = arith.constant 0 : index
    %c0_23 = arith.constant 0 : index
    %c1 = arith.constant 1 : index
    %40 = vector.load %arg1[%c0_22, %c0_23, %c1] : memref<4x4x290xf32, #tpu.memory_space<vmem>>, vector<1x4x256xf32>
    %41 = vector.shape_cast %40 : vector<1x4x256xf32> to vector<4x256xf32>
    %c1_24 = arith.constant 1 : index
    %c0_25 = arith.constant 0 : index
    %c0_26 = arith.constant 0 : index
    %42 = vector.load %arg2[%c1_24, %c0_25, %c0_26] : memref<9x4x4xf32, #tpu.memory_space<vmem>>, vector<1x4x4xf32>
    %43 = vector.shape_cast %42 : vector<1x4x4xf32> to vector<4x4xf32>
    %cst_27 = arith.constant dense<0.000000e+00> : vector<4x256xf32>
    %44 = tpu.matmul %43, %41, %cst_27 {dimension_numbers = #tpu.dot_dimension_numbers<[1], [0], [0], [1], [0, 0, 1, 1], [], []>} : vector<4x4xf32>, vector<4x256xf32>, vector<4x256xf32> -> vector<4x256xf32>
    %c0_28 = arith.constant 0 : index
    %c0_29 = arith.constant 0 : index
    %c17 = arith.constant 17 : index
    %45 = vector.load %arg1[%c0_28, %c0_29, %c17] : memref<4x4x290xf32, #tpu.memory_space<vmem>>, vector<1x4x256xf32>
    %46 = vector.shape_cast %45 : vector<1x4x256xf32> to vector<4x256xf32>
    %c4 = arith.constant 4 : index
    %c0_30 = arith.constant 0 : index
    %c0_31 = arith.constant 0 : index
    %47 = vector.load %arg2[%c4, %c0_30, %c0_31] : memref<9x4x4xf32, #tpu.memory_space<vmem>>, vector<1x4x4xf32>
    %48 = vector.shape_cast %47 : vector<1x4x4xf32> to vector<4x4xf32>
    %cst_32 = arith.constant dense<0.000000e+00> : vector<4x256xf32>
    %49 = tpu.matmul %48, %46, %cst_32 {dimension_numbers = #tpu.dot_dimension_numbers<[1], [0], [0], [1], [0, 0, 1, 1], [], []>} : vector<4x4xf32>, vector<4x256xf32>, vector<4x256xf32> -> vector<4x256xf32>
    %50 = arith.addf %44, %49 : vector<4x256xf32>
    %c0_33 = arith.constant 0 : index
    %c0_34 = arith.constant 0 : index
    %c33 = arith.constant 33 : index
    %51 = vector.load %arg1[%c0_33, %c0_34, %c33] : memref<4x4x290xf32, #tpu.memory_space<vmem>>, vector<1x4x256xf32>
    %52 = vector.shape_cast %51 : vector<1x4x256xf32> to vector<4x256xf32>
    %c7 = arith.constant 7 : index
    %c0_35 = arith.constant 0 : index
    %c0_36 = arith.constant 0 : index
    %53 = vector.load %arg2[%c7, %c0_35, %c0_36] : memref<9x4x4xf32, #tpu.memory_space<vmem>>, vector<1x4x4xf32>
    %54 = vector.shape_cast %53 : vector<1x4x4xf32> to vector<4x4xf32>
    %cst_37 = arith.constant dense<0.000000e+00> : vector<4x256xf32>
    %55 = tpu.matmul %54, %52, %cst_37 {dimension_numbers = #tpu.dot_dimension_numbers<[1], [0], [0], [1], [0, 0, 1, 1], [], []>} : vector<4x4xf32>, vector<4x256xf32>, vector<4x256xf32> -> vector<4x256xf32>
    %56 = arith.addf %50, %55 : vector<4x256xf32>
    %c0_38 = arith.constant 0 : index
    %c0_39 = arith.constant 0 : index
    %c2 = arith.constant 2 : index
    %57 = vector.load %arg1[%c0_38, %c0_39, %c2] : memref<4x4x290xf32, #tpu.memory_space<vmem>>, vector<1x4x256xf32>
    %58 = vector.shape_cast %57 : vector<1x4x256xf32> to vector<4x256xf32>
    %c2_40 = arith.constant 2 : index
    %c0_41 = arith.constant 0 : index
    %c0_42 = arith.constant 0 : index
    %59 = vector.load %arg2[%c2_40, %c0_41, %c0_42] : memref<9x4x4xf32, #tpu.memory_space<vmem>>, vector<1x4x4xf32>
    %60 = vector.shape_cast %59 : vector<1x4x4xf32> to vector<4x4xf32>
    %cst_43 = arith.constant dense<0.000000e+00> : vector<4x256xf32>
    %61 = tpu.matmul %60, %58, %cst_43 {dimension_numbers = #tpu.dot_dimension_numbers<[1], [0], [0], [1], [0, 0, 1, 1], [], []>} : vector<4x4xf32>, vector<4x256xf32>, vector<4x256xf32> -> vector<4x256xf32>
    %c0_44 = arith.constant 0 : index
    %c0_45 = arith.constant 0 : index
    %c18 = arith.constant 18 : index
    %62 = vector.load %arg1[%c0_44, %c0_45, %c18] : memref<4x4x290xf32, #tpu.memory_space<vmem>>, vector<1x4x256xf32>
    %63 = vector.shape_cast %62 : vector<1x4x256xf32> to vector<4x256xf32>
    %c5 = arith.constant 5 : index
    %c0_46 = arith.constant 0 : index
    %c0_47 = arith.constant 0 : index
    %64 = vector.load %arg2[%c5, %c0_46, %c0_47] : memref<9x4x4xf32, #tpu.memory_space<vmem>>, vector<1x4x4xf32>
    %65 = vector.shape_cast %64 : vector<1x4x4xf32> to vector<4x4xf32>
    %cst_48 = arith.constant dense<0.000000e+00> : vector<4x256xf32>
    %66 = tpu.matmul %65, %63, %cst_48 {dimension_numbers = #tpu.dot_dimension_numbers<[1], [0], [0], [1], [0, 0, 1, 1], [], []>} : vector<4x4xf32>, vector<4x256xf32>, vector<4x256xf32> -> vector<4x256xf32>
    %67 = arith.addf %61, %66 : vector<4x256xf32>
    %c0_49 = arith.constant 0 : index
    %c0_50 = arith.constant 0 : index
    %c34 = arith.constant 34 : index
    %68 = vector.load %arg1[%c0_49, %c0_50, %c34] : memref<4x4x290xf32, #tpu.memory_space<vmem>>, vector<1x4x256xf32>
    %69 = vector.shape_cast %68 : vector<1x4x256xf32> to vector<4x256xf32>
    %c8 = arith.constant 8 : index
    %c0_51 = arith.constant 0 : index
    %c0_52 = arith.constant 0 : index
    %70 = vector.load %arg2[%c8, %c0_51, %c0_52] : memref<9x4x4xf32, #tpu.memory_space<vmem>>, vector<1x4x4xf32>
    %71 = vector.shape_cast %70 : vector<1x4x4xf32> to vector<4x4xf32>
    %cst_53 = arith.constant dense<0.000000e+00> : vector<4x256xf32>
    %72 = tpu.matmul %71, %69, %cst_53 {dimension_numbers = #tpu.dot_dimension_numbers<[1], [0], [0], [1], [0, 0, 1, 1], [], []>} : vector<4x4xf32>, vector<4x256xf32>, vector<4x256xf32> -> vector<4x256xf32>
    %73 = arith.addf %67, %72 : vector<4x256xf32>
    %cst_54 = arith.constant 0.000000e+00 : f32
    %74 = vector.shape_cast %18 : vector<1x256xi1> to vector<1x256xi1>
    %75 = vector.broadcast %74 : vector<1x256xi1> to vector<4x256xi1>
    %76 = vector.broadcast %cst_54 : f32 to vector<4x256xf32>
    %77 = arith.select %75, %39, %76 : vector<4x256xi1>, vector<4x256xf32>
    %78 = arith.addf %56, %77 : vector<4x256xf32>
    %cst_55 = arith.constant 0.000000e+00 : f32
    %79 = vector.shape_cast %20 : vector<1x256xi1> to vector<1x256xi1>
    %80 = vector.broadcast %79 : vector<1x256xi1> to vector<4x256xi1>
    %81 = vector.broadcast %cst_55 : f32 to vector<4x256xf32>
    %82 = arith.select %80, %73, %81 : vector<4x256xi1>, vector<4x256xf32>
    %83 = arith.addf %78, %82 : vector<4x256xf32>
    %84 = vector.broadcast %21 : vector<4x1xf32> to vector<4x256xf32>
    %85 = arith.addf %83, %84 : vector<4x256xf32>
    %cst_56 = arith.constant 0.000000e+00 : f32
    %86 = vector.broadcast %cst_56 : f32 to vector<4x256xf32>
    %87 = arith.cmpf oge, %85, %86 : vector<4x256xf32>
    %88 = vector.broadcast %22 : f32 to vector<4x256xf32>
    %89 = arith.mulf %88, %85 : vector<4x256xf32>
    %90 = arith.select %87, %85, %89 : vector<4x256xi1>, vector<4x256xf32>
    %c0_57 = arith.constant 0 : index
    %c0_58 = arith.constant 0 : index
    %c0_59 = arith.constant 0 : index
    %91 = vector.load %arg5[%c0_57, %c0_58, %c0_59] : memref<4x4x256xf32, #tpu.memory_space<vmem>>, vector<1x4x256xf32>
    %92 = vector.shape_cast %91 : vector<1x4x256xf32> to vector<4x256xf32>
    %93 = vector.shape_cast %90 : vector<4x256xf32> to vector<1x4x256xf32>
    tpu.vector_store %arg5[%c0_57, %c0_58, %c0_59], %93 {strides = array<i32>} : memref<4x4x256xf32, #tpu.memory_space<vmem>>, vector<1x4x256xf32>,
    %c1_60 = arith.constant 1 : index
    %c0_61 = arith.constant 0 : index
    %c0_62 = arith.constant 0 : index
    %94 = vector.load %arg1[%c1_60, %c0_61, %c0_62] : memref<4x4x290xf32, #tpu.memory_space<vmem>>, vector<1x4x256xf32>
    %95 = vector.shape_cast %94 : vector<1x4x256xf32> to vector<4x256xf32>
    %c0_63 = arith.constant 0 : index
    %c0_64 = arith.constant 0 : index
    %c0_65 = arith.constant 0 : index
    %96 = vector.load %arg2[%c0_63, %c0_64, %c0_65] : memref<9x4x4xf32, #tpu.memory_space<vmem>>, vector<1x4x4xf32>
    %97 = vector.shape_cast %96 : vector<1x4x4xf32> to vector<4x4xf32>
    %cst_66 = arith.constant dense<0.000000e+00> : vector<4x256xf32>
    %98 = tpu.matmul %97, %95, %cst_66 {dimension_numbers = #tpu.dot_dimension_numbers<[1], [0], [0], [1], [0, 0, 1, 1], [], []>} : vector<4x4xf32>, vector<4x256xf32>, vector<4x256xf32> -> vector<4x256xf32>
    %c1_67 = arith.constant 1 : index
    %c0_68 = arith.constant 0 : index
    %c16_69 = arith.constant 16 : index
    %99 = vector.load %arg1[%c1_67, %c0_68, %c16_69] : memref<4x4x290xf32, #tpu.memory_space<vmem>>, vector<1x4x256xf32>
    %100 = vector.shape_cast %99 : vector<1x4x256xf32> to vector<4x256xf32>
    %c3_70 = arith.constant 3 : index
    %c0_71 = arith.constant 0 : index
    %c0_72 = arith.constant 0 : index
    %101 = vector.load %arg2[%c3_70, %c0_71, %c0_72] : memref<9x4x4xf32, #tpu.memory_space<vmem>>, vector<1x4x4xf32>
    %102 = vector.shape_cast %101 : vector<1x4x4xf32> to vector<4x4xf32>
    %cst_73 = arith.constant dense<0.000000e+00> : vector<4x256xf32>
    %103 = tpu.matmul %102, %100, %cst_73 {dimension_numbers = #tpu.dot_dimension_numbers<[1], [0], [0], [1], [0, 0, 1, 1], [], []>} : vector<4x4xf32>, vector<4x256xf32>, vector<4x256xf32> -> vector<4x256xf32>
    %104 = arith.addf %98, %103 : vector<4x256xf32>
    %c1_74 = arith.constant 1 : index
    %c0_75 = arith.constant 0 : index
    %c32_76 = arith.constant 32 : index
    %105 = vector.load %arg1[%c1_74, %c0_75, %c32_76] : memref<4x4x290xf32, #tpu.memory_space<vmem>>, vector<1x4x256xf32>
    %106 = vector.shape_cast %105 : vector<1x4x256xf32> to vector<4x256xf32>
    %c6_77 = arith.constant 6 : index
    %c0_78 = arith.constant 0 : index
    %c0_79 = arith.constant 0 : index
    %107 = vector.load %arg2[%c6_77, %c0_78, %c0_79] : memref<9x4x4xf32, #tpu.memory_space<vmem>>, vector<1x4x4xf32>
    %108 = vector.shape_cast %107 : vector<1x4x4xf32> to vector<4x4xf32>
    %cst_80 = arith.constant dense<0.000000e+00> : vector<4x256xf32>
    %109 = tpu.matmul %108, %106, %cst_80 {dimension_numbers = #tpu.dot_dimension_numbers<[1], [0], [0], [1], [0, 0, 1, 1], [], []>} : vector<4x4xf32>, vector<4x256xf32>, vector<4x256xf32> -> vector<4x256xf32>
    %110 = arith.addf %104, %109 : vector<4x256xf32>
    %c1_81 = arith.constant 1 : index
    %c0_82 = arith.constant 0 : index
    %c1_83 = arith.constant 1 : index
    %111 = vector.load %arg1[%c1_81, %c0_82, %c1_83] : memref<4x4x290xf32, #tpu.memory_space<vmem>>, vector<1x4x256xf32>
    %112 = vector.shape_cast %111 : vector<1x4x256xf32> to vector<4x256xf32>
    %c1_84 = arith.constant 1 : index
    %c0_85 = arith.constant 0 : index
    %c0_86 = arith.constant 0 : index
    %113 = vector.load %arg2[%c1_84, %c0_85, %c0_86] : memref<9x4x4xf32, #tpu.memory_space<vmem>>, vector<1x4x4xf32>
    %114 = vector.shape_cast %113 : vector<1x4x4xf32> to vector<4x4xf32>
    %cst_87 = arith.constant dense<0.000000e+00> : vector<4x256xf32>
    %115 = tpu.matmul %114, %112, %cst_87 {dimension_numbers = #tpu.dot_dimension_numbers<[1], [0], [0], [1], [0, 0, 1, 1], [], []>} : vector<4x4xf32>, vector<4x256xf32>, vector<4x256xf32> -> vector<4x256xf32>
    %c1_88 = arith.constant 1 : index
    %c0_89 = arith.constant 0 : index
    %c17_90 = arith.constant 17 : index
    %116 = vector.load %arg1[%c1_88, %c0_89, %c17_90] : memref<4x4x290xf32, #tpu.memory_space<vmem>>, vector<1x4x256xf32>
    %117 = vector.shape_cast %116 : vector<1x4x256xf32> to vector<4x256xf32>
    %c4_91 = arith.constant 4 : index
    %c0_92 = arith.constant 0 : index
    %c0_93 = arith.constant 0 : index
    %118 = vector.load %arg2[%c4_91, %c0_92, %c0_93] : memref<9x4x4xf32, #tpu.memory_space<vmem>>, vector<1x4x4xf32>
    %119 = vector.shape_cast %118 : vector<1x4x4xf32> to vector<4x4xf32>
    %cst_94 = arith.constant dense<0.000000e+00> : vector<4x256xf32>
    %120 = tpu.matmul %119, %117, %cst_94 {dimension_numbers = #tpu.dot_dimension_numbers<[1], [0], [0], [1], [0, 0, 1, 1], [], []>} : vector<4x4xf32>, vector<4x256xf32>, vector<4x256xf32> -> vector<4x256xf32>
    %121 = arith.addf %115, %120 : vector<4x256xf32>
    %c1_95 = arith.constant 1 : index
    %c0_96 = arith.constant 0 : index
    %c33_97 = arith.constant 33 : index
    %122 = vector.load %arg1[%c1_95, %c0_96, %c33_97] : memref<4x4x290xf32, #tpu.memory_space<vmem>>, vector<1x4x256xf32>
    %123 = vector.shape_cast %122 : vector<1x4x256xf32> to vector<4x256xf32>
    %c7_98 = arith.constant 7 : index
    %c0_99 = arith.constant 0 : index
    %c0_100 = arith.constant 0 : index
    %124 = vector.load %arg2[%c7_98, %c0_99, %c0_100] : memref<9x4x4xf32, #tpu.memory_space<vmem>>, vector<1x4x4xf32>
    %125 = vector.shape_cast %124 : vector<1x4x4xf32> to vector<4x4xf32>
    %cst_101 = arith.constant dense<0.000000e+00> : vector<4x256xf32>
    %126 = tpu.matmul %125, %123, %cst_101 {dimension_numbers = #tpu.dot_dimension_numbers<[1], [0], [0], [1], [0, 0, 1, 1], [], []>} : vector<4x4xf32>, vector<4x256xf32>, vector<4x256xf32> -> vector<4x256xf32>
    %127 = arith.addf %121, %126 : vector<4x256xf32>
    %c1_102 = arith.constant 1 : index
    %c0_103 = arith.constant 0 : index
    %c2_104 = arith.constant 2 : index
    %128 = vector.load %arg1[%c1_102, %c0_103, %c2_104] : memref<4x4x290xf32, #tpu.memory_space<vmem>>, vector<1x4x256xf32>
    %129 = vector.shape_cast %128 : vector<1x4x256xf32> to vector<4x256xf32>
    %c2_105 = arith.constant 2 : index
    %c0_106 = arith.constant 0 : index
    %c0_107 = arith.constant 0 : index
    %130 = vector.load %arg2[%c2_105, %c0_106, %c0_107] : memref<9x4x4xf32, #tpu.memory_space<vmem>>, vector<1x4x4xf32>
    %131 = vector.shape_cast %130 : vector<1x4x4xf32> to vector<4x4xf32>
    %cst_108 = arith.constant dense<0.000000e+00> : vector<4x256xf32>
    %132 = tpu.matmul %131, %129, %cst_108 {dimension_numbers = #tpu.dot_dimension_numbers<[1], [0], [0], [1], [0, 0, 1, 1], [], []>} : vector<4x4xf32>, vector<4x256xf32>, vector<4x256xf32> -> vector<4x256xf32>
    %c1_109 = arith.constant 1 : index
    %c0_110 = arith.constant 0 : index
    %c18_111 = arith.constant 18 : index
    %133 = vector.load %arg1[%c1_109, %c0_110, %c18_111] : memref<4x4x290xf32, #tpu.memory_space<vmem>>, vector<1x4x256xf32>
    %134 = vector.shape_cast %133 : vector<1x4x256xf32> to vector<4x256xf32>
    %c5_112 = arith.constant 5 : index
    %c0_113 = arith.constant 0 : index
    %c0_114 = arith.constant 0 : index
    %135 = vector.load %arg2[%c5_112, %c0_113, %c0_114] : memref<9x4x4xf32, #tpu.memory_space<vmem>>, vector<1x4x4xf32>
    %136 = vector.shape_cast %135 : vector<1x4x4xf32> to vector<4x4xf32>
    %cst_115 = arith.constant dense<0.000000e+00> : vector<4x256xf32>
    %137 = tpu.matmul %136, %134, %cst_115 {dimension_numbers = #tpu.dot_dimension_numbers<[1], [0], [0], [1], [0, 0, 1, 1], [], []>} : vector<4x4xf32>, vector<4x256xf32>, vector<4x256xf32> -> vector<4x256xf32>
    %138 = arith.addf %132, %137 : vector<4x256xf32>
    %c1_116 = arith.constant 1 : index
    %c0_117 = arith.constant 0 : index
    %c34_118 = arith.constant 34 : index
    %139 = vector.load %arg1[%c1_116, %c0_117, %c34_118] : memref<4x4x290xf32, #tpu.memory_space<vmem>>, vector<1x4x256xf32>
    %140 = vector.shape_cast %139 : vector<1x4x256xf32> to vector<4x256xf32>
    %c8_119 = arith.constant 8 : index
    %c0_120 = arith.constant 0 : index
    %c0_121 = arith.constant 0 : index
    %141 = vector.load %arg2[%c8_119, %c0_120, %c0_121] : memref<9x4x4xf32, #tpu.memory_space<vmem>>, vector<1x4x4xf32>
    %142 = vector.shape_cast %141 : vector<1x4x4xf32> to vector<4x4xf32>
    %cst_122 = arith.constant dense<0.000000e+00> : vector<4x256xf32>
    %143 = tpu.matmul %142, %140, %cst_122 {dimension_numbers = #tpu.dot_dimension_numbers<[1], [0], [0], [1], [0, 0, 1, 1], [], []>} : vector<4x4xf32>, vector<4x256xf32>, vector<4x256xf32> -> vector<4x256xf32>
    %144 = arith.addf %138, %143 : vector<4x256xf32>
    %cst_123 = arith.constant 0.000000e+00 : f32
    %145 = vector.shape_cast %18 : vector<1x256xi1> to vector<1x256xi1>
    %146 = vector.broadcast %145 : vector<1x256xi1> to vector<4x256xi1>
    %147 = vector.broadcast %cst_123 : f32 to vector<4x256xf32>
    %148 = arith.select %146, %110, %147 : vector<4x256xi1>, vector<4x256xf32>
    %149 = arith.addf %127, %148 : vector<4x256xf32>
    %cst_124 = arith.constant 0.000000e+00 : f32
    %150 = vector.shape_cast %20 : vector<1x256xi1> to vector<1x256xi1>
    %151 = vector.broadcast %150 : vector<1x256xi1> to vector<4x256xi1>
    %152 = vector.broadcast %cst_124 : f32 to vector<4x256xf32>
    %153 = arith.select %151, %144, %152 : vector<4x256xi1>, vector<4x256xf32>
    %154 = arith.addf %149, %153 : vector<4x256xf32>
    %155 = vector.broadcast %21 : vector<4x1xf32> to vector<4x256xf32>
    %156 = arith.addf %154, %155 : vector<4x256xf32>
    %cst_125 = arith.constant 0.000000e+00 : f32
    %157 = vector.broadcast %cst_125 : f32 to vector<4x256xf32>
    %158 = arith.cmpf oge, %156, %157 : vector<4x256xf32>
    %159 = vector.broadcast %22 : f32 to vector<4x256xf32>
    %160 = arith.mulf %159, %156 : vector<4x256xf32>
    %161 = arith.select %158, %156, %160 : vector<4x256xi1>, vector<4x256xf32>
    %c1_126 = arith.constant 1 : index
    %c0_127 = arith.constant 0 : index
    %c0_128 = arith.constant 0 : index
    %162 = vector.load %arg5[%c1_126, %c0_127, %c0_128] : memref<4x4x256xf32, #tpu.memory_space<vmem>>, vector<1x4x256xf32>
    %163 = vector.shape_cast %162 : vector<1x4x256xf32> to vector<4x256xf32>
    %164 = vector.shape_cast %161 : vector<4x256xf32> to vector<1x4x256xf32>
    tpu.vector_store %arg5[%c1_126, %c0_127, %c0_128], %164 {strides = array<i32>} : memref<4x4x256xf32, #tpu.memory_space<vmem>>, vector<1x4x256xf32>,
    %c2_129 = arith.constant 2 : index
    %c0_130 = arith.constant 0 : index
    %c0_131 = arith.constant 0 : index
    %165 = vector.load %arg1[%c2_129, %c0_130, %c0_131] : memref<4x4x290xf32, #tpu.memory_space<vmem>>, vector<1x4x256xf32>
    %166 = vector.shape_cast %165 : vector<1x4x256xf32> to vector<4x256xf32>
    %c0_132 = arith.constant 0 : index
    %c0_133 = arith.constant 0 : index
    %c0_134 = arith.constant 0 : index
    %167 = vector.load %arg2[%c0_132, %c0_133, %c0_134] : memref<9x4x4xf32, #tpu.memory_space<vmem>>, vector<1x4x4xf32>
    %168 = vector.shape_cast %167 : vector<1x4x4xf32> to vector<4x4xf32>
    %cst_135 = arith.constant dense<0.000000e+00> : vector<4x256xf32>
    %169 = tpu.matmul %168, %166, %cst_135 {dimension_numbers = #tpu.dot_dimension_numbers<[1], [0], [0], [1], [0, 0, 1, 1], [], []>} : vector<4x4xf32>, vector<4x256xf32>, vector<4x256xf32> -> vector<4x256xf32>
    %c2_136 = arith.constant 2 : index
    %c0_137 = arith.constant 0 : index
    %c16_138 = arith.constant 16 : index
    %170 = vector.load %arg1[%c2_136, %c0_137, %c16_138] : memref<4x4x290xf32, #tpu.memory_space<vmem>>, vector<1x4x256xf32>
    %171 = vector.shape_cast %170 : vector<1x4x256xf32> to vector<4x256xf32>
    %c3_139 = arith.constant 3 : index
    %c0_140 = arith.constant 0 : index
    %c0_141 = arith.constant 0 : index
    %172 = vector.load %arg2[%c3_139, %c0_140, %c0_141] : memref<9x4x4xf32, #tpu.memory_space<vmem>>, vector<1x4x4xf32>
    %173 = vector.shape_cast %172 : vector<1x4x4xf32> to vector<4x4xf32>
    %cst_142 = arith.constant dense<0.000000e+00> : vector<4x256xf32>
    %174 = tpu.matmul %173, %171, %cst_142 {dimension_numbers = #tpu.dot_dimension_numbers<[1], [0], [0], [1], [0, 0, 1, 1], [], []>} : vector<4x4xf32>, vector<4x256xf32>, vector<4x256xf32> -> vector<4x256xf32>
    %175 = arith.addf %169, %174 : vector<4x256xf32>
    %c2_143 = arith.constant 2 : index
    %c0_144 = arith.constant 0 : index
    %c32_145 = arith.constant 32 : index
    %176 = vector.load %arg1[%c2_143, %c0_144, %c32_145] : memref<4x4x290xf32, #tpu.memory_space<vmem>>, vector<1x4x256xf32>
    %177 = vector.shape_cast %176 : vector<1x4x256xf32> to vector<4x256xf32>
    %c6_146 = arith.constant 6 : index
    %c0_147 = arith.constant 0 : index
    %c0_148 = arith.constant 0 : index
    %178 = vector.load %arg2[%c6_146, %c0_147, %c0_148] : memref<9x4x4xf32, #tpu.memory_space<vmem>>, vector<1x4x4xf32>
    %179 = vector.shape_cast %178 : vector<1x4x4xf32> to vector<4x4xf32>
    %cst_149 = arith.constant dense<0.000000e+00> : vector<4x256xf32>
    %180 = tpu.matmul %179, %177, %cst_149 {dimension_numbers = #tpu.dot_dimension_numbers<[1], [0], [0], [1], [0, 0, 1, 1], [], []>} : vector<4x4xf32>, vector<4x256xf32>, vector<4x256xf32> -> vector<4x256xf32>
    %181 = arith.addf %175, %180 : vector<4x256xf32>
    %c2_150 = arith.constant 2 : index
    %c0_151 = arith.constant 0 : index
    %c1_152 = arith.constant 1 : index
    %182 = vector.load %arg1[%c2_150, %c0_151, %c1_152] : memref<4x4x290xf32, #tpu.memory_space<vmem>>, vector<1x4x256xf32>
    %183 = vector.shape_cast %182 : vector<1x4x256xf32> to vector<4x256xf32>
    %c1_153 = arith.constant 1 : index
    %c0_154 = arith.constant 0 : index
    %c0_155 = arith.constant 0 : index
    %184 = vector.load %arg2[%c1_153, %c0_154, %c0_155] : memref<9x4x4xf32, #tpu.memory_space<vmem>>, vector<1x4x4xf32>
    %185 = vector.shape_cast %184 : vector<1x4x4xf32> to vector<4x4xf32>
    %cst_156 = arith.constant dense<0.000000e+00> : vector<4x256xf32>
    %186 = tpu.matmul %185, %183, %cst_156 {dimension_numbers = #tpu.dot_dimension_numbers<[1], [0], [0], [1], [0, 0, 1, 1], [], []>} : vector<4x4xf32>, vector<4x256xf32>, vector<4x256xf32> -> vector<4x256xf32>
    %c2_157 = arith.constant 2 : index
    %c0_158 = arith.constant 0 : index
    %c17_159 = arith.constant 17 : index
    %187 = vector.load %arg1[%c2_157, %c0_158, %c17_159] : memref<4x4x290xf32, #tpu.memory_space<vmem>>, vector<1x4x256xf32>
    %188 = vector.shape_cast %187 : vector<1x4x256xf32> to vector<4x256xf32>
    %c4_160 = arith.constant 4 : index
    %c0_161 = arith.constant 0 : index
    %c0_162 = arith.constant 0 : index
    %189 = vector.load %arg2[%c4_160, %c0_161, %c0_162] : memref<9x4x4xf32, #tpu.memory_space<vmem>>, vector<1x4x4xf32>
    %190 = vector.shape_cast %189 : vector<1x4x4xf32> to vector<4x4xf32>
    %cst_163 = arith.constant dense<0.000000e+00> : vector<4x256xf32>
    %191 = tpu.matmul %190, %188, %cst_163 {dimension_numbers = #tpu.dot_dimension_numbers<[1], [0], [0], [1], [0, 0, 1, 1], [], []>} : vector<4x4xf32>, vector<4x256xf32>, vector<4x256xf32> -> vector<4x256xf32>
    %192 = arith.addf %186, %191 : vector<4x256xf32>
    %c2_164 = arith.constant 2 : index
    %c0_165 = arith.constant 0 : index
    %c33_166 = arith.constant 33 : index
    %193 = vector.load %arg1[%c2_164, %c0_165, %c33_166] : memref<4x4x290xf32, #tpu.memory_space<vmem>>, vector<1x4x256xf32>
    %194 = vector.shape_cast %193 : vector<1x4x256xf32> to vector<4x256xf32>
    %c7_167 = arith.constant 7 : index
    %c0_168 = arith.constant 0 : index
    %c0_169 = arith.constant 0 : index
    %195 = vector.load %arg2[%c7_167, %c0_168, %c0_169] : memref<9x4x4xf32, #tpu.memory_space<vmem>>, vector<1x4x4xf32>
    %196 = vector.shape_cast %195 : vector<1x4x4xf32> to vector<4x4xf32>
    %cst_170 = arith.constant dense<0.000000e+00> : vector<4x256xf32>
    %197 = tpu.matmul %196, %194, %cst_170 {dimension_numbers = #tpu.dot_dimension_numbers<[1], [0], [0], [1], [0, 0, 1, 1], [], []>} : vector<4x4xf32>, vector<4x256xf32>, vector<4x256xf32> -> vector<4x256xf32>
    %198 = arith.addf %192, %197 : vector<4x256xf32>
    %c2_171 = arith.constant 2 : index
    %c0_172 = arith.constant 0 : index
    %c2_173 = arith.constant 2 : index
    %199 = vector.load %arg1[%c2_171, %c0_172, %c2_173] : memref<4x4x290xf32, #tpu.memory_space<vmem>>, vector<1x4x256xf32>
    %200 = vector.shape_cast %199 : vector<1x4x256xf32> to vector<4x256xf32>
    %c2_174 = arith.constant 2 : index
    %c0_175 = arith.constant 0 : index
    %c0_176 = arith.constant 0 : index
    %201 = vector.load %arg2[%c2_174, %c0_175, %c0_176] : memref<9x4x4xf32, #tpu.memory_space<vmem>>, vector<1x4x4xf32>
    %202 = vector.shape_cast %201 : vector<1x4x4xf32> to vector<4x4xf32>
    %cst_177 = arith.constant dense<0.000000e+00> : vector<4x256xf32>
    %203 = tpu.matmul %202, %200, %cst_177 {dimension_numbers = #tpu.dot_dimension_numbers<[1], [0], [0], [1], [0, 0, 1, 1], [], []>} : vector<4x4xf32>, vector<4x256xf32>, vector<4x256xf32> -> vector<4x256xf32>
    %c2_178 = arith.constant 2 : index
    %c0_179 = arith.constant 0 : index
    %c18_180 = arith.constant 18 : index
    %204 = vector.load %arg1[%c2_178, %c0_179, %c18_180] : memref<4x4x290xf32, #tpu.memory_space<vmem>>, vector<1x4x256xf32>
    %205 = vector.shape_cast %204 : vector<1x4x256xf32> to vector<4x256xf32>
    %c5_181 = arith.constant 5 : index
    %c0_182 = arith.constant 0 : index
    %c0_183 = arith.constant 0 : index
    %206 = vector.load %arg2[%c5_181, %c0_182, %c0_183] : memref<9x4x4xf32, #tpu.memory_space<vmem>>, vector<1x4x4xf32>
    %207 = vector.shape_cast %206 : vector<1x4x4xf32> to vector<4x4xf32>
    %cst_184 = arith.constant dense<0.000000e+00> : vector<4x256xf32>
    %208 = tpu.matmul %207, %205, %cst_184 {dimension_numbers = #tpu.dot_dimension_numbers<[1], [0], [0], [1], [0, 0, 1, 1], [], []>} : vector<4x4xf32>, vector<4x256xf32>, vector<4x256xf32> -> vector<4x256xf32>
    %209 = arith.addf %203, %208 : vector<4x256xf32>
    %c2_185 = arith.constant 2 : index
    %c0_186 = arith.constant 0 : index
    %c34_187 = arith.constant 34 : index
    %210 = vector.load %arg1[%c2_185, %c0_186, %c34_187] : memref<4x4x290xf32, #tpu.memory_space<vmem>>, vector<1x4x256xf32>
    %211 = vector.shape_cast %210 : vector<1x4x256xf32> to vector<4x256xf32>
    %c8_188 = arith.constant 8 : index
    %c0_189 = arith.constant 0 : index
    %c0_190 = arith.constant 0 : index
    %212 = vector.load %arg2[%c8_188, %c0_189, %c0_190] : memref<9x4x4xf32, #tpu.memory_space<vmem>>, vector<1x4x4xf32>
    %213 = vector.shape_cast %212 : vector<1x4x4xf32> to vector<4x4xf32>
    %cst_191 = arith.constant dense<0.000000e+00> : vector<4x256xf32>
    %214 = tpu.matmul %213, %211, %cst_191 {dimension_numbers = #tpu.dot_dimension_numbers<[1], [0], [0], [1], [0, 0, 1, 1], [], []>} : vector<4x4xf32>, vector<4x256xf32>, vector<4x256xf32> -> vector<4x256xf32>
    %215 = arith.addf %209, %214 : vector<4x256xf32>
    %cst_192 = arith.constant 0.000000e+00 : f32
    %216 = vector.shape_cast %18 : vector<1x256xi1> to vector<1x256xi1>
    %217 = vector.broadcast %216 : vector<1x256xi1> to vector<4x256xi1>
    %218 = vector.broadcast %cst_192 : f32 to vector<4x256xf32>
    %219 = arith.select %217, %181, %218 : vector<4x256xi1>, vector<4x256xf32>
    %220 = arith.addf %198, %219 : vector<4x256xf32>
    %cst_193 = arith.constant 0.000000e+00 : f32
    %221 = vector.shape_cast %20 : vector<1x256xi1> to vector<1x256xi1>
    %222 = vector.broadcast %221 : vector<1x256xi1> to vector<4x256xi1>
    %223 = vector.broadcast %cst_193 : f32 to vector<4x256xf32>
    %224 = arith.select %222, %215, %223 : vector<4x256xi1>, vector<4x256xf32>
    %225 = arith.addf %220, %224 : vector<4x256xf32>
    %226 = vector.broadcast %21 : vector<4x1xf32> to vector<4x256xf32>
    %227 = arith.addf %225, %226 : vector<4x256xf32>
    %cst_194 = arith.constant 0.000000e+00 : f32
    %228 = vector.broadcast %cst_194 : f32 to vector<4x256xf32>
    %229 = arith.cmpf oge, %227, %228 : vector<4x256xf32>
    %230 = vector.broadcast %22 : f32 to vector<4x256xf32>
    %231 = arith.mulf %230, %227 : vector<4x256xf32>
    %232 = arith.select %229, %227, %231 : vector<4x256xi1>, vector<4x256xf32>
    %c2_195 = arith.constant 2 : index
    %c0_196 = arith.constant 0 : index
    %c0_197 = arith.constant 0 : index
    %233 = vector.load %arg5[%c2_195, %c0_196, %c0_197] : memref<4x4x256xf32, #tpu.memory_space<vmem>>, vector<1x4x256xf32>
    %234 = vector.shape_cast %233 : vector<1x4x256xf32> to vector<4x256xf32>
    %235 = vector.shape_cast %232 : vector<4x256xf32> to vector<1x4x256xf32>
    tpu.vector_store %arg5[%c2_195, %c0_196, %c0_197], %235 {strides = array<i32>} : memref<4x4x256xf32, #tpu.memory_space<vmem>>, vector<1x4x256xf32>,
    %c3_198 = arith.constant 3 : index
    %c0_199 = arith.constant 0 : index
    %c0_200 = arith.constant 0 : index
    %236 = vector.load %arg1[%c3_198, %c0_199, %c0_200] : memref<4x4x290xf32, #tpu.memory_space<vmem>>, vector<1x4x256xf32>
    %237 = vector.shape_cast %236 : vector<1x4x256xf32> to vector<4x256xf32>
    %c0_201 = arith.constant 0 : index
    %c0_202 = arith.constant 0 : index
    %c0_203 = arith.constant 0 : index
    %238 = vector.load %arg2[%c0_201, %c0_202, %c0_203] : memref<9x4x4xf32, #tpu.memory_space<vmem>>, vector<1x4x4xf32>
    %239 = vector.shape_cast %238 : vector<1x4x4xf32> to vector<4x4xf32>
    %cst_204 = arith.constant dense<0.000000e+00> : vector<4x256xf32>
    %240 = tpu.matmul %239, %237, %cst_204 {dimension_numbers = #tpu.dot_dimension_numbers<[1], [0], [0], [1], [0, 0, 1, 1], [], []>} : vector<4x4xf32>, vector<4x256xf32>, vector<4x256xf32> -> vector<4x256xf32>
    %c3_205 = arith.constant 3 : index
    %c0_206 = arith.constant 0 : index
    %c16_207 = arith.constant 16 : index
    %241 = vector.load %arg1[%c3_205, %c0_206, %c16_207] : memref<4x4x290xf32, #tpu.memory_space<vmem>>, vector<1x4x256xf32>
    %242 = vector.shape_cast %241 : vector<1x4x256xf32> to vector<4x256xf32>
    %c3_208 = arith.constant 3 : index
    %c0_209 = arith.constant 0 : index
    %c0_210 = arith.constant 0 : index
    %243 = vector.load %arg2[%c3_208, %c0_209, %c0_210] : memref<9x4x4xf32, #tpu.memory_space<vmem>>, vector<1x4x4xf32>
    %244 = vector.shape_cast %243 : vector<1x4x4xf32> to vector<4x4xf32>
    %cst_211 = arith.constant dense<0.000000e+00> : vector<4x256xf32>
    %245 = tpu.matmul %244, %242, %cst_211 {dimension_numbers = #tpu.dot_dimension_numbers<[1], [0], [0], [1], [0, 0, 1, 1], [], []>} : vector<4x4xf32>, vector<4x256xf32>, vector<4x256xf32> -> vector<4x256xf32>
    %246 = arith.addf %240, %245 : vector<4x256xf32>
    %c3_212 = arith.constant 3 : index
    %c0_213 = arith.constant 0 : index
    %c32_214 = arith.constant 32 : index
    %247 = vector.load %arg1[%c3_212, %c0_213, %c32_214] : memref<4x4x290xf32, #tpu.memory_space<vmem>>, vector<1x4x256xf32>
    %248 = vector.shape_cast %247 : vector<1x4x256xf32> to vector<4x256xf32>
    %c6_215 = arith.constant 6 : index
    %c0_216 = arith.constant 0 : index
    %c0_217 = arith.constant 0 : index
    %249 = vector.load %arg2[%c6_215, %c0_216, %c0_217] : memref<9x4x4xf32, #tpu.memory_space<vmem>>, vector<1x4x4xf32>
    %250 = vector.shape_cast %249 : vector<1x4x4xf32> to vector<4x4xf32>
    %cst_218 = arith.constant dense<0.000000e+00> : vector<4x256xf32>
    %251 = tpu.matmul %250, %248, %cst_218 {dimension_numbers = #tpu.dot_dimension_numbers<[1], [0], [0], [1], [0, 0, 1, 1], [], []>} : vector<4x4xf32>, vector<4x256xf32>, vector<4x256xf32> -> vector<4x256xf32>
    %252 = arith.addf %246, %251 : vector<4x256xf32>
    %c3_219 = arith.constant 3 : index
    %c0_220 = arith.constant 0 : index
    %c1_221 = arith.constant 1 : index
    %253 = vector.load %arg1[%c3_219, %c0_220, %c1_221] : memref<4x4x290xf32, #tpu.memory_space<vmem>>, vector<1x4x256xf32>
    %254 = vector.shape_cast %253 : vector<1x4x256xf32> to vector<4x256xf32>
    %c1_222 = arith.constant 1 : index
    %c0_223 = arith.constant 0 : index
    %c0_224 = arith.constant 0 : index
    %255 = vector.load %arg2[%c1_222, %c0_223, %c0_224] : memref<9x4x4xf32, #tpu.memory_space<vmem>>, vector<1x4x4xf32>
    %256 = vector.shape_cast %255 : vector<1x4x4xf32> to vector<4x4xf32>
    %cst_225 = arith.constant dense<0.000000e+00> : vector<4x256xf32>
    %257 = tpu.matmul %256, %254, %cst_225 {dimension_numbers = #tpu.dot_dimension_numbers<[1], [0], [0], [1], [0, 0, 1, 1], [], []>} : vector<4x4xf32>, vector<4x256xf32>, vector<4x256xf32> -> vector<4x256xf32>
    %c3_226 = arith.constant 3 : index
    %c0_227 = arith.constant 0 : index
    %c17_228 = arith.constant 17 : index
    %258 = vector.load %arg1[%c3_226, %c0_227, %c17_228] : memref<4x4x290xf32, #tpu.memory_space<vmem>>, vector<1x4x256xf32>
    %259 = vector.shape_cast %258 : vector<1x4x256xf32> to vector<4x256xf32>
    %c4_229 = arith.constant 4 : index
    %c0_230 = arith.constant 0 : index
    %c0_231 = arith.constant 0 : index
    %260 = vector.load %arg2[%c4_229, %c0_230, %c0_231] : memref<9x4x4xf32, #tpu.memory_space<vmem>>, vector<1x4x4xf32>
    %261 = vector.shape_cast %260 : vector<1x4x4xf32> to vector<4x4xf32>
    %cst_232 = arith.constant dense<0.000000e+00> : vector<4x256xf32>
    %262 = tpu.matmul %261, %259, %cst_232 {dimension_numbers = #tpu.dot_dimension_numbers<[1], [0], [0], [1], [0, 0, 1, 1], [], []>} : vector<4x4xf32>, vector<4x256xf32>, vector<4x256xf32> -> vector<4x256xf32>
    %263 = arith.addf %257, %262 : vector<4x256xf32>
    %c3_233 = arith.constant 3 : index
    %c0_234 = arith.constant 0 : index
    %c33_235 = arith.constant 33 : index
    %264 = vector.load %arg1[%c3_233, %c0_234, %c33_235] : memref<4x4x290xf32, #tpu.memory_space<vmem>>, vector<1x4x256xf32>
    %265 = vector.shape_cast %264 : vector<1x4x256xf32> to vector<4x256xf32>
    %c7_236 = arith.constant 7 : index
    %c0_237 = arith.constant 0 : index
    %c0_238 = arith.constant 0 : index
    %266 = vector.load %arg2[%c7_236, %c0_237, %c0_238] : memref<9x4x4xf32, #tpu.memory_space<vmem>>, vector<1x4x4xf32>
    %267 = vector.shape_cast %266 : vector<1x4x4xf32> to vector<4x4xf32>
    %cst_239 = arith.constant dense<0.000000e+00> : vector<4x256xf32>
    %268 = tpu.matmul %267, %265, %cst_239 {dimension_numbers = #tpu.dot_dimension_numbers<[1], [0], [0], [1], [0, 0, 1, 1], [], []>} : vector<4x4xf32>, vector<4x256xf32>, vector<4x256xf32> -> vector<4x256xf32>
    %269 = arith.addf %263, %268 : vector<4x256xf32>
    %c3_240 = arith.constant 3 : index
    %c0_241 = arith.constant 0 : index
    %c2_242 = arith.constant 2 : index
    %270 = vector.load %arg1[%c3_240, %c0_241, %c2_242] : memref<4x4x290xf32, #tpu.memory_space<vmem>>, vector<1x4x256xf32>
    %271 = vector.shape_cast %270 : vector<1x4x256xf32> to vector<4x256xf32>
    %c2_243 = arith.constant 2 : index
    %c0_244 = arith.constant 0 : index
    %c0_245 = arith.constant 0 : index
    %272 = vector.load %arg2[%c2_243, %c0_244, %c0_245] : memref<9x4x4xf32, #tpu.memory_space<vmem>>, vector<1x4x4xf32>
    %273 = vector.shape_cast %272 : vector<1x4x4xf32> to vector<4x4xf32>
    %cst_246 = arith.constant dense<0.000000e+00> : vector<4x256xf32>
    %274 = tpu.matmul %273, %271, %cst_246 {dimension_numbers = #tpu.dot_dimension_numbers<[1], [0], [0], [1], [0, 0, 1, 1], [], []>} : vector<4x4xf32>, vector<4x256xf32>, vector<4x256xf32> -> vector<4x256xf32>
    %c3_247 = arith.constant 3 : index
    %c0_248 = arith.constant 0 : index
    %c18_249 = arith.constant 18 : index
    %275 = vector.load %arg1[%c3_247, %c0_248, %c18_249] : memref<4x4x290xf32, #tpu.memory_space<vmem>>, vector<1x4x256xf32>
    %276 = vector.shape_cast %275 : vector<1x4x256xf32> to vector<4x256xf32>
    %c5_250 = arith.constant 5 : index
    %c0_251 = arith.constant 0 : index
    %c0_252 = arith.constant 0 : index
    %277 = vector.load %arg2[%c5_250, %c0_251, %c0_252] : memref<9x4x4xf32, #tpu.memory_space<vmem>>, vector<1x4x4xf32>
    %278 = vector.shape_cast %277 : vector<1x4x4xf32> to vector<4x4xf32>
    %cst_253 = arith.constant dense<0.000000e+00> : vector<4x256xf32>
    %279 = tpu.matmul %278, %276, %cst_253 {dimension_numbers = #tpu.dot_dimension_numbers<[1], [0], [0], [1], [0, 0, 1, 1], [], []>} : vector<4x4xf32>, vector<4x256xf32>, vector<4x256xf32> -> vector<4x256xf32>
    %280 = arith.addf %274, %279 : vector<4x256xf32>
    %c3_254 = arith.constant 3 : index
    %c0_255 = arith.constant 0 : index
    %c34_256 = arith.constant 34 : index
    %281 = vector.load %arg1[%c3_254, %c0_255, %c34_256] : memref<4x4x290xf32, #tpu.memory_space<vmem>>, vector<1x4x256xf32>
    %282 = vector.shape_cast %281 : vector<1x4x256xf32> to vector<4x256xf32>
    %c8_257 = arith.constant 8 : index
    %c0_258 = arith.constant 0 : index
    %c0_259 = arith.constant 0 : index
    %283 = vector.load %arg2[%c8_257, %c0_258, %c0_259] : memref<9x4x4xf32, #tpu.memory_space<vmem>>, vector<1x4x4xf32>
    %284 = vector.shape_cast %283 : vector<1x4x4xf32> to vector<4x4xf32>
    %cst_260 = arith.constant dense<0.000000e+00> : vector<4x256xf32>
    %285 = tpu.matmul %284, %282, %cst_260 {dimension_numbers = #tpu.dot_dimension_numbers<[1], [0], [0], [1], [0, 0, 1, 1], [], []>} : vector<4x4xf32>, vector<4x256xf32>, vector<4x256xf32> -> vector<4x256xf32>
    %286 = arith.addf %280, %285 : vector<4x256xf32>
    %cst_261 = arith.constant 0.000000e+00 : f32
    %287 = vector.shape_cast %18 : vector<1x256xi1> to vector<1x256xi1>
    %288 = vector.broadcast %287 : vector<1x256xi1> to vector<4x256xi1>
    %289 = vector.broadcast %cst_261 : f32 to vector<4x256xf32>
    %290 = arith.select %288, %252, %289 : vector<4x256xi1>, vector<4x256xf32>
    %291 = arith.addf %269, %290 : vector<4x256xf32>
    %cst_262 = arith.constant 0.000000e+00 : f32
    %292 = vector.shape_cast %20 : vector<1x256xi1> to vector<1x256xi1>
    %293 = vector.broadcast %292 : vector<1x256xi1> to vector<4x256xi1>
    %294 = vector.broadcast %cst_262 : f32 to vector<4x256xf32>
    %295 = arith.select %293, %286, %294 : vector<4x256xi1>, vector<4x256xf32>
    %296 = arith.addf %291, %295 : vector<4x256xf32>
    %297 = vector.broadcast %21 : vector<4x1xf32> to vector<4x256xf32>
    %298 = arith.addf %296, %297 : vector<4x256xf32>
    %cst_263 = arith.constant 0.000000e+00 : f32
    %299 = vector.broadcast %cst_263 : f32 to vector<4x256xf32>
    %300 = arith.cmpf oge, %298, %299 : vector<4x256xf32>
    %301 = vector.broadcast %22 : f32 to vector<4x256xf32>
    %302 = arith.mulf %301, %298 : vector<4x256xf32>
    %303 = arith.select %300, %298, %302 : vector<4x256xi1>, vector<4x256xf32>
    %c3_264 = arith.constant 3 : index
    %c0_265 = arith.constant 0 : index
    %c0_266 = arith.constant 0 : index
    %304 = vector.load %arg5[%c3_264, %c0_265, %c0_266] : memref<4x4x256xf32, #tpu.memory_space<vmem>>, vector<1x4x256xf32>
    %305 = vector.shape_cast %304 : vector<1x4x256xf32> to vector<4x256xf32>
    %306 = vector.shape_cast %303 : vector<4x256xf32> to vector<1x4x256xf32>
    tpu.vector_store %arg5[%c3_264, %c0_265, %c0_266], %306 {strides = array<i32>} : memref<4x4x256xf32, #tpu.memory_space<vmem>>, vector<1x4x256xf32>,
    return
  }
  func.func @transform_0(%arg0: i32) -> (i32, i32, i32) {
    %c0_i32 = arith.constant 0 : i32
    %c0_i32_0 = arith.constant 0 : i32
    %c0_i32_1 = arith.constant 0 : i32
    return %arg0, %c0_i32, %c0_i32_0 : i32, i32, i32
  }
  func.func @transform_1(%arg0: i32) -> (i32, i32, i32) {
    %c0_i32 = arith.constant 0 : i32
    %c0_i32_0 = arith.constant 0 : i32
    %c0_i32_1 = arith.constant 0 : i32
    %c0_i32_2 = arith.constant 0 : i32
    return %c0_i32, %c0_i32_0, %c0_i32_1 : i32, i32, i32
  }
  func.func @transform_2(%arg0: i32) -> (i32, i32) {
    %c0_i32 = arith.constant 0 : i32
    %c0_i32_0 = arith.constant 0 : i32
    %c0_i32_1 = arith.constant 0 : i32
    return %c0_i32, %c0_i32_0 : i32, i32
  }
  func.func @transform_3(%arg0: i32) -> i32 {
    %c0_i32 = arith.constant 0 : i32
    %c0_i32_0 = arith.constant 0 : i32
    return %c0_i32 : i32
  }
  func.func @transform_4(%arg0: i32) -> (i32, i32, i32) {
    %c0_i32 = arith.constant 0 : i32
    %c0_i32_0 = arith.constant 0 : i32
    %c0_i32_1 = arith.constant 0 : i32
    return %arg0, %c0_i32, %c0_i32_0 : i32, i32, i32
  }
}

</mosaic_0001>

<llo_original>
// kernel: conv_prelu_forward.1
$region0: #{conv_prelu_forward.1}
  #allocation0 [shape = 'u32[]', space=smem, size = 0x4, offset = 0x4, fixed_abs, tag = 'smem constant byte address 0x4 - core index']
  #allocation1 [shape = 'u32[144,128]{1,0:T(1,128)}', space=vmem, size = 0x12000, scoped, tag = 'internal scratch']
  #allocation2 [shape = 'f32[1]{0:T(128)S(6)}', space=smem, size = 0x200, scoped, tag = 'scoped memory for conv_prelu_forward.1']
  %s0 = inlined_call_operand.vmem [shape: f32[8,4,290], index: 0, kind: input, shape index: {}]
  %s1 = inlined_call_operand.vmem [shape: f32[9,4,4], index: 1, kind: input, shape index: {}]
  %s2 = inlined_call_operand.vmem [shape: f32[4,1], index: 2, kind: input, shape index: {}]
  %s3 = inlined_call_operand.<no memory space> [shape: f32[1], index: 3, kind: input, shape index: {}]
  %s4 = inlined_call_operand.vmem [shape: f32[8,4,256], index: 4, kind: output, shape index: {}]
  %s5 = sld [smem:[#allocation0]]
  $region49: #{conv_prelu_forward.1} parent=0
    _
  %s7 = ssub.s32 1, %s5
  %s8 = scalar_select 0, %s7, %s5
  %9 = sst [smem:[#allocation2]] %s3
  loop: start=0, step=1, limit=4
  $region2: #{conv_prelu_forward.1} parent=0 // loop_pre_header
    _
  $region3: #{conv_prelu_forward.1} parent=0 // loop_header
    %s11 = sphi 0, %s15
    %p12 = scmp.ge.s32.totalorder %s11, 4
    %s21 = sphi 0, %s23
    %s24 = sphi 0, %s21
    %s25 = sphi 0, %s24
    %s41 = sphi 0, %s25
    %s45 = sphi 0, %s45
    %s47 = sphi 0, %s45
    %s48 = sphi 0, %s47
    %s62 = sphi 0, %s48
    %s66 = sphi 0, %s66
    %s68 = sphi 0, %s66
    %s69 = sphi 0, %s68
    %s83 = sphi 0, %s69
    %s87 = sphi 0, %s87
    %s89 = sphi 0, %s87
    %s90 = sphi 0, %s89
    %s104 = sphi 0, %s90
    %s110 = sphi 0, %s112
    %s113 = sphi 0, %s110
    %s114 = sphi 0, %s113
    %s130 = sphi 0, %s114
  $region4: #{conv_prelu_forward.1} parent=0 // loop_header_branch
    %14 = sbr.rel (%p12) target = $region8
  $region5: #{conv_prelu_forward.1} parent=0 // loop_body
    %s16 = ssub.s32 %s11, 1
    %s17 = ssub.s32 %s11, 2
    %s18 = sadd.s32 %s11, 1
    %s19 = ssub.s32 %s11, %s18
    %p20 = scmp.eq.s32.totalorder %s19, 0
    %s22 = sadd.s32 %s21, 1
    %s23 = scalar_select %p20, %s21, %s22
    %p26 = pneg %p20
    %p27 = scmp.eq.s32.totalorder %s11, 1
    %p28 = por %p26, %p27
    %p29 = scmp.ne.s32.totalorder %s21, %s24
    %p30 = scmp.eq.s32.totalorder %s11, 0
    %p31 = por %p29, %p30
    %p32 = scmp.ne.s32.totalorder %s21, %s24
    %p33 = scmp.eq.s32.totalorder %s16, 1
    %p34 = por %p32, %p33
    %p35 = scmp.ne.s32.totalorder %s24, %s25
    %p36 = scmp.eq.s32.totalorder %s16, 0
    %p37 = por %p35, %p36
    %p38 = scmp.ne.s32.totalorder %s24, %s25
    %p39 = scmp.eq.s32.totalorder %s17, 1
    %p40 = por %p38, %p39
    %p42 = scmp.ne.s32.totalorder %s25, %s41
    %p43 = scmp.eq.s32.totalorder %s17, 0
    %p44 = por %p42, %p43
    %s46 = sadd.s32 %s45, 1
    %p49 = scmp.eq.s32.totalorder %s11, 1
    %p50 = scmp.ne.s32.totalorder %s45, %s47
    %p51 = scmp.eq.s32.totalorder %s11, 0
    %p52 = por %p50, %p51
    %p53 = scmp.ne.s32.totalorder %s45, %s47
    %p54 = scmp.eq.s32.totalorder %s16, 1
    %p55 = por %p53, %p54
    %p56 = scmp.ne.s32.totalorder %s47, %s48
    %p57 = scmp.eq.s32.totalorder %s16, 0
    %p58 = por %p56, %p57
    %p59 = scmp.ne.s32.totalorder %s47, %s48
    %p60 = scmp.eq.s32.totalorder %s17, 1
    %p61 = por %p59, %p60
    %p63 = scmp.ne.s32.totalorder %s48, %s62
    %p64 = scmp.eq.s32.totalorder %s17, 0
    %p65 = por %p63, %p64
    %s67 = sadd.s32 %s66, 1
    %p70 = scmp.eq.s32.totalorder %s11, 1
    %p71 = scmp.ne.s32.totalorder %s66, %s68
    %p72 = scmp.eq.s32.totalorder %s11, 0
    %p73 = por %p71, %p72
    %p74 = scmp.ne.s32.totalorder %s66, %s68
    %p75 = scmp.eq.s32.totalorder %s16, 1
    %p76 = por %p74, %p75
    %p77 = scmp.ne.s32.totalorder %s68, %s69
    %p78 = scmp.eq.s32.totalorder %s16, 0
    %p79 = por %p77, %p78
    %p80 = scmp.ne.s32.totalorder %s68, %s69
    %p81 = scmp.eq.s32.totalorder %s17, 1
    %p82 = por %p80, %p81
    %p84 = scmp.ne.s32.totalorder %s69, %s83
    %p85 = scmp.eq.s32.totalorder %s17, 0
    %p86 = por %p84, %p85
    %s88 = sadd.s32 %s87, 1
    %p91 = scmp.eq.s32.totalorder %s11, 1
    %p92 = scmp.ne.s32.totalorder %s87, %s89
    %p93 = scmp.eq.s32.totalorder %s11, 0
    %p94 = por %p92, %p93
    %p95 = scmp.ne.s32.totalorder %s87, %s89
    %p96 = scmp.eq.s32.totalorder %s16, 1
    %p97 = por %p95, %p96
    %p98 = scmp.ne.s32.totalorder %s89, %s90
    %p99 = scmp.eq.s32.totalorder %s16, 0
    %p100 = por %p98, %p99
    %p101 = scmp.ne.s32.totalorder %s89, %s90
    %p102 = scmp.eq.s32.totalorder %s17, 1
    %p103 = por %p101, %p102
    %p105 = scmp.ne.s32.totalorder %s90, %s104
    %p106 = scmp.eq.s32.totalorder %s17, 0
    %p107 = por %p105, %p106
    %s108 = ssub.s32 %s11, %s18
    %p109 = scmp.eq.s32.totalorder %s108, 0
    %s111 = sadd.s32 %s110, 1
    %s112 = scalar_select %p109, %s110, %s111
    %p115 = pneg %p109
    %p116 = scmp.eq.s32.totalorder %s11, 1
    %p117 = por %p115, %p116
    %p118 = scmp.ne.s32.totalorder %s110, %s113
    %p119 = scmp.eq.s32.totalorder %s11, 0
    %p120 = por %p118, %p119
    %p121 = scmp.ne.s32.totalorder %s110, %s113
    %p122 = scmp.eq.s32.totalorder %s16, 1
    %p123 = por %p121, %p122
    %p124 = scmp.ne.s32.totalorder %s113, %s114
    %p125 = scmp.eq.s32.totalorder %s16, 0
    %p126 = por %p124, %p125
    %p127 = scmp.ne.s32.totalorder %s113, %s114
    %p128 = scmp.eq.s32.totalorder %s17, 1
    %p129 = por %p127, %p128
    %p131 = scmp.ne.s32.totalorder %s114, %s130
    %p132 = scmp.eq.s32.totalorder %s17, 0
    %p133 = por %p131, %p132
    %p134 = scmp.le.s32.totalorder 1, %s11
    %p135 = scmp.lt.s32.totalorder %s11, 3
    %p136 = pnand %p134, %p135
    %p137 = pneg %p136
    // Predicated region
    $region9: #{conv_prelu_forward.1} parent=5 // pred_check
      _
    $region10: #{conv_prelu_forward.1} parent=5 // pred_check_branch
      %139 = sbr.rel (%p136) target = $region12
    $region11: #{conv_prelu_forward.1} parent=5 // pred_region
      %s140 = ssub.s32 %s11, 1
      // Predicated region
      $region13: #{conv_prelu_forward.1} parent=11 // pred_check
        %p141 = pneg %p58
      $region14: #{conv_prelu_forward.1} parent=11 // pred_check_branch
        %143 = sbr.rel (%p141) target = $region16
      $region15: #{conv_prelu_forward.1} parent=11 // pred_region
        _
      $region16: #{conv_prelu_forward.1} parent=11 // pred_fallthru
        _
      // Predicated region
      $region17: #{conv_prelu_forward.1} parent=11 // pred_check
        %p144 = pneg %p79
      $region18: #{conv_prelu_forward.1} parent=11 // pred_check_branch
        %146 = sbr.rel (%p144) target = $region20
      $region19: #{conv_prelu_forward.1} parent=11 // pred_region
        _
      $region20: #{conv_prelu_forward.1} parent=11 // pred_fallthru
        _
      // Predicated region
      $region21: #{conv_prelu_forward.1} parent=11 // pred_check
        %p147 = pneg %p100
      $region22: #{conv_prelu_forward.1} parent=11 // pred_check_branch
        %149 = sbr.rel (%p147) target = $region24
      $region23: #{conv_prelu_forward.1} parent=11 // pred_region
        _
      $region24: #{conv_prelu_forward.1} parent=11 // pred_fallthru
        _
    $region12: #{conv_prelu_forward.1} parent=5 // pred_fallthru
      _
    %p150 = scmp.lt.s32.totalorder %s11, 2
    // Predicated region
    $region25: #{conv_prelu_forward.1} parent=5 // pred_check
      %p151 = pneg %p150
    $region26: #{conv_prelu_forward.1} parent=5 // pred_check_branch
      %153 = sbr.rel (%p151) target = $region28
    $region27: #{conv_prelu_forward.1} parent=5 // pred_region
      // Predicated region
      $region29: #{conv_prelu_forward.1} parent=27 // pred_check
        %p154 = pneg %p31
      $region30: #{conv_prelu_forward.1} parent=27 // pred_check_branch
        %156 = sbr.rel (%p154) target = $region32
      $region31: #{conv_prelu_forward.1} parent=27 // pred_region
        %s157 = smul.u32 4, %s11
        %p158 = scmp.lt.s32.totalorder %s157, 7
        %s159 = scalar_select %p158, %s157, 7
        %s160 = smul.addr %s159, 3
        %s161 = smul.addr %s160, 4
        %s162 = scalar_lea.vmem %s0, %s161
        %s163 = smul.u32 4, %s11
      $region32: #{conv_prelu_forward.1} parent=27 // pred_fallthru
        _
    $region28: #{conv_prelu_forward.1} parent=5 // pred_fallthru
      _
    %p164 = scmp.le.s32.totalorder 1, %s11
    %p165 = scmp.lt.s32.totalorder %s11, 3
    %p166 = pnand %p164, %p165
    %p167 = pneg %p166
    // Predicated region
    $region33: #{conv_prelu_forward.1} parent=5 // pred_check
      _
    $region34: #{conv_prelu_forward.1} parent=5 // pred_check_branch
      %169 = sbr.rel (%p166) target = $region36
    $region35: #{conv_prelu_forward.1} parent=5 // pred_region
      %s170 = ssub.s32 %s11, 1
      %s171 = smul.u32 4, %s16
      %p172 = scmp.lt.s32.totalorder %s171, 7
      %s173 = scalar_select %p172, %s171, 7
      %s174 = smul.addr %s173, 3
      %s175 = smul.addr %s174, 4
      %s176 = scalar_lea.vmem %s0, %s175
      %p177 = pneg %p37
      %p178 = pneg %p34
      %p179 = pneg %p58
      %p180 = pneg %p55
      %p181 = pneg %p79
      %p182 = pneg %p76
      %p183 = pneg %p100
      %p184 = pneg %p97
      %p185 = pneg %p126
      %p186 = pneg %p123
      %s187 = smul.u32 4, %s16
      %p188 = scmp.lt.s32.totalorder %s187, 7
      %s189 = scalar_select %p188, %s187, 7
      %s190 = smul.addr %s189, 2
      %s191 = smul.addr %s190, 4
      %s192 = scalar_lea.vmem %s4, %s191
      %s193 = smul.u32 4, %s16
      %p194 = scmp.lt.s32.totalorder %s193, 7
      %s195 = scalar_select %p194, %s193, 7
      %s196 = smul.addr %s195, 3
      %s197 = smul.addr %s196, 4
      %s198 = scalar_lea.vmem %s0, %s197
      %s199 = smul.u32 4, %s16
      %s200 = smul.u32 4, %s16
      %p201 = scmp.lt.s32.totalorder %s200, 7
      %s202 = scalar_select %p201, %s200, 7
      %s203 = smul.addr %s202, 2
      %s204 = smul.addr %s203, 4
      %s205 = scalar_lea.vmem %s4, %s204
      %s206 = smul.u32 4, %s16
      %v207 = vlaneseq
      %v208 = vand.u32 %v207, 127
      %v209 = vadd.s32 %v208, 128
      %vm210 = vcmp.lt.s32.totalorder %v208, 0
      %v211 = vsub.s32 0, %v208
      %v212 = vsel %vm210, %v211, %v208
      %v213 = vshrl.u32 %v212, 4
      %v214 = vand.u32 %v212, 15
      %v215 = vsub.s32 0, %v214
      %v216 = vsel %vm210, %v215, %v214
      %vm217 = vcmp.lt.s32.totalorder %v209, 0
      %v218 = vsub.s32 0, %v209
      %v219 = vsel %vm217, %v218, %v209
      %v220 = vshrl.u32 %v219, 4
      %v221 = vand.u32 %v219, 15
      %v222 = vsub.s32 0, %v221
      %v223 = vsel %vm217, %v222, %v221
      %vm224 = vcmp.ne.s32.totalorder %v216, 0
      %vm225 = vcmp.ne.s32.totalorder %v223, 0
      %vm226 = vcmp.lt.s32.totalorder %v216, 0
      %vm227 = vcmp.lt.s32.totalorder %v223, 0
      %vm228 = vmand %vm226, %vm224
      %vm229 = vmand %vm227, %vm225
      %v230 = vadd.s32 %v216, 16
      %v231 = vadd.s32 %v223, 16
      %v232 = vsel %vm228, %v230, %v216
      %v233 = vsel %vm229, %v231, %v223
      %vm234 = vcmp.ne.s32.totalorder %v232, 0
      %vm235 = vcmp.ne.s32.totalorder %v233, 0
      %vm236 = vcmp.ne.s32.totalorder %v232, 15
      %vm237 = vcmp.ne.s32.totalorder %v233, 15
      %v238 = vld [vmem:[%s2] sm:$0xf]
      %s239 = sld [smem:[#allocation2]]
      %v240 = vld [vmem:[%s198] sm:$0xff]
      %v241 = vld [vmem:[%s1] sm:$0xf]
      %v242 = vld [vmem:[%s198 + $0x8] sm:$0xf]
      %s243 = scalar_lea.vmem %s1, 12
      %v244 = vld [vmem:[%s243] sm:$0xf]
      %v247 = vcombine.high %v240, %v240
      %248 = vrot.lane.b32.xlu0 %v240, 112
      %v249 = vpop.permute.xlu0 %248
      %250 = vrot.lane.b32.xlu0 %v247, 112
      %v251 = vpop.permute.xlu0 %250
      %252 = vrot.lane.b32.xlu0 %v242, 112
      %v253 = vpop.permute.xlu0 %252
      %vm254 = vcmask 916480
      %v255 = vsel %vm254, %v249, %v251
      %v256 = vsel %vm254, %v251, %v253
      %vm257 = vcmask 31744
      %v259 = vsel %vm257, %v244, 0
      %vm261 = vcmask 1043456
      %v262 = vsel %vm261, %v255, 0
      %v264 = vsel %vm261, %v256, 0
      %266 = vmatprep.subr.mxu0 %v264
      %267 = vmatpush1.msra.mxu0 %v262
      %268 = vmatprep.subr.mxu0 0.0
      %269 = vmatpush1.msra.mxu0 0.0
      %270 = vmatprep.subr.mxu0 0.0
      %271 = vmatpush1.msra.mxu0 0.0
      %272 = vmatprep.subr.mxu0 0.0
      %273 = vmatpush1.msra.mxu0 0.0
      %274 = vmatprep.subr.mxu0 0.0
      %275 = vmatpush1.msra.mxu0 0.0
      %276 = vmatprep.subr.mxu0 0.0
      %277 = vmatpush1.msra.mxu0 0.0
      %278 = vmatprep.subr.mxu0 0.0
      %279 = vmatpush1.msra.mxu0 0.0
      %280 = vmatprep.subr.mxu0 0.0
      %281 = vmatpush1.msra.mxu0 0.0
      %282 = vmatprep.subr.mxu0 0.0
      %283 = vmatpush1.msra.mxu0 0.0
      %284 = vmatprep.subr.mxu0 0.0
      %285 = vmatpush1.msra.mxu0 0.0
      %286 = vmatprep.subr.mxu0 0.0
      %287 = vmatpush1.msra.mxu0 0.0
      %288 = vmatprep.subr.mxu0 0.0
      %289 = vmatpush1.msra.mxu0 0.0
      %290 = vmatprep.subr.mxu0 0.0
      %291 = vmatpush1.msra.mxu0 0.0
      %292 = vmatprep.subr.mxu0 0.0
      %293 = vmatpush1.msra.mxu0 0.0
      %294 = vmatprep.subr.mxu0 0.0
      %295 = vmatpush1.msra.mxu0 0.0
      %296 = vmatprep.subr.mxu0 0.0
      %297 = vmatpush1.msra.mxu0 0.0
      %298 = vmatprep.subr.mxu0 0.0
      %299 = vmatpush1.msra.mxu0 0.0
      %300 = vmatprep.subr.mxu0 0.0
      %301 = vmatpush1.msra.mxu0 0.0
      %302 = vmatprep.subr.mxu0 0.0
      %303 = vmatpush1.msra.mxu0 0.0
      %304 = vmatprep.subr.mxu0 0.0
      %305 = vmatpush1.msra.mxu0 0.0
      %306 = vmatprep.subr.mxu0 0.0
      %307 = vmatpush1.msra.mxu0 0.0
      %308 = vmatprep.subr.mxu0 0.0
      %309 = vmatpush1.msra.mxu0 0.0
      %310 = vmatprep.subr.mxu0 0.0
      %311 = vmatpush1.msra.mxu0 0.0
      %312 = vmatprep.subr.mxu0 0.0
      %313 = vmatpush1.msra.mxu0 0.0
      %314 = vmatprep.subr.mxu0 0.0
      %315 = vmatpush1.msra.mxu0 0.0
      %316 = vmatprep.subr.mxu0 0.0
      %317 = vmatpush1.msra.mxu0 0.0
      %318 = vmatprep.subr.mxu0 0.0
      %319 = vmatpush1.msra.mxu0 0.0
      %320 = vmatprep.subr.mxu0 0.0
      %321 = vmatpush1.msra.mxu0 0.0
      %322 = vmatprep.subr.mxu0 0.0
      %323 = vmatpush1.msra.mxu0 0.0
      %324 = vmatprep.subr.mxu0 0.0
      %325 = vmatpush1.msra.mxu0 0.0
      %326 = vmatprep.subr.mxu0 0.0
      %327 = vmatpush1.msra.mxu0 0.0
      %328 = vmatprep.subr.mxu0 0.0
      %329 = vmatpush1.msra.mxu0 0.0
      %330 = vmatprep.mubr.f32.mxu0 0.0
      %331 = vmatmul.mubr.f32.gmra.mrb[0].mxu0 %v259
      %v332 = vpop.f32.mrb[0].mxu0
      %v333 = vadd.f32 0.0, %v332
      %v334 = vpop.f32.mrb[0].mxu0
      %v335 = vadd.f32 0.0, %v334
      %336 = vdwg.mxu0
      %v338 = vsel %vm257, %v241, 0
      %v340 = vsel %vm261, %v240, 0
      %v342 = vsel %vm261, %v247, 0
      %344 = vmatprep.subr.mxu0 %v342
      %345 = vmatpush1.msra.mxu0 %v340
      %346 = vmatprep.subr.mxu0 0.0
      %347 = vmatpush1.msra.mxu0 0.0
      %348 = vmatprep.subr.mxu0 0.0
      %349 = vmatpush1.msra.mxu0 0.0
      %350 = vmatprep.subr.mxu0 0.0
      %351 = vmatpush1.msra.mxu0 0.0
      %352 = vmatprep.subr.mxu0 0.0
      %353 = vmatpush1.msra.mxu0 0.0
      %354 = vmatprep.subr.mxu0 0.0
      %355 = vmatpush1.msra.mxu0 0.0
      %356 = vmatprep.subr.mxu0 0.0
      %357 = vmatpush1.msra.mxu0 0.0
      %358 = vmatprep.subr.mxu0 0.0
      %359 = vmatpush1.msra.mxu0 0.0
      %360 = vmatprep.subr.mxu0 0.0
      %361 = vmatpush1.msra.mxu0 0.0
      %362 = vmatprep.subr.mxu0 0.0
      %363 = vmatpush1.msra.mxu0 0.0
      %364 = vmatprep.subr.mxu0 0.0
      %365 = vmatpush1.msra.mxu0 0.0
      %366 = vmatprep.subr.mxu0 0.0
      %367 = vmatpush1.msra.mxu0 0.0
      %368 = vmatprep.subr.mxu0 0.0
      %369 = vmatpush1.msra.mxu0 0.0
      %370 = vmatprep.subr.mxu0 0.0
      %371 = vmatpush1.msra.mxu0 0.0
      %372 = vmatprep.subr.mxu0 0.0
      %373 = vmatpush1.msra.mxu0 0.0
      %374 = vmatprep.subr.mxu0 0.0
      %375 = vmatpush1.msra.mxu0 0.0
      %376 = vmatprep.subr.mxu0 0.0
      %377 = vmatpush1.msra.mxu0 0.0
      %378 = vmatprep.subr.mxu0 0.0
      %379 = vmatpush1.msra.mxu0 0.0
      %380 = vmatprep.subr.mxu0 0.0
      %381 = vmatpush1.msra.mxu0 0.0
      %382 = vmatprep.subr.mxu0 0.0
      %383 = vmatpush1.msra.mxu0 0.0
      %384 = vmatprep.subr.mxu0 0.0
      %385 = vmatpush1.msra.mxu0 0.0
      %386 = vmatprep.subr.mxu0 0.0
      %387 = vmatpush1.msra.mxu0 0.0
      %388 = vmatprep.subr.mxu0 0.0
      %389 = vmatpush1.msra.mxu0 0.0
      %390 = vmatprep.subr.mxu0 0.0
      %391 = vmatpush1.msra.mxu0 0.0
      %392 = vmatprep.subr.mxu0 0.0
      %393 = vmatpush1.msra.mxu0 0.0
      %394 = vmatprep.subr.mxu0 0.0
      %395 = vmatpush1.msra.mxu0 0.0
      %396 = vmatprep.subr.mxu0 0.0
      %397 = vmatpush1.msra.mxu0 0.0
      %398 = vmatprep.subr.mxu0 0.0
      %399 = vmatpush1.msra.mxu0 0.0
      %400 = vmatprep.subr.mxu0 0.0
      %401 = vmatpush1.msra.mxu0 0.0
      %402 = vmatprep.subr.mxu0 0.0
      %403 = vmatpush1.msra.mxu0 0.0
      %404 = vmatprep.subr.mxu0 0.0
      %405 = vmatpush1.msra.mxu0 0.0
      %406 = vmatprep.subr.mxu0 0.0
      %407 = vmatpush1.msra.mxu0 0.0
      %408 = vmatprep.mubr.f32.mxu0 0.0
      %409 = vmatmul.mubr.f32.gmra.mrb[0].mxu0 %v338
      %v410 = vpop.f32.mrb[0].mxu0
      %v411 = vadd.f32 %v333, %v410
      %v412 = vpop.f32.mrb[0].mxu0
      %v413 = vadd.f32 %v335, %v412
      %414 = vdwg.mxu0
      %v415 = vld [vmem:[%s198] sm:$0xff]
      %v416 = vld [vmem:[%s198 + $0x8] sm:$0xf]
      %s417 = scalar_lea.vmem %s1, 24
      %v418 = vld [vmem:[%s417] sm:$0xf]
      %v421 = vcombine.high %v415, %v415
      %422 = vrot.lane.b32.xlu0 %v415, 96
      %v423 = vpop.permute.xlu0 %422
      %424 = vrot.lane.b32.xlu0 %v421, 96
      %v425 = vpop.permute.xlu0 %424
      %426 = vrot.lane.b32.xlu0 %v416, 96
      %v427 = vpop.permute.xlu0 %426
      %vm428 = vcmask 785408
      %v429 = vsel %vm428, %v423, %v425
      %v430 = vsel %vm428, %v425, %v427
      %v432 = vsel %vm257, %v418, 0
      %v434 = vsel %vm261, %v429, 0
      %v436 = vsel %vm261, %v430, 0
      %438 = vmatprep.subr.mxu0 %v436
      %439 = vmatpush1.msra.mxu0 %v434
      %440 = vmatprep.subr.mxu0 0.0
      %441 = vmatpush1.msra.mxu0 0.0
      %442 = vmatprep.subr.mxu0 0.0
      %443 = vmatpush1.msra.mxu0 0.0
      %444 = vmatprep.subr.mxu0 0.0
      %445 = vmatpush1.msra.mxu0 0.0
      %446 = vmatprep.subr.mxu0 0.0
      %447 = vmatpush1.msra.mxu0 0.0
      %448 = vmatprep.subr.mxu0 0.0
      %449 = vmatpush1.msra.mxu0 0.0
      %450 = vmatprep.subr.mxu0 0.0
      %451 = vmatpush1.msra.mxu0 0.0
      %452 = vmatprep.subr.mxu0 0.0
      %453 = vmatpush1.msra.mxu0 0.0
      %454 = vmatprep.subr.mxu0 0.0
      %455 = vmatpush1.msra.mxu0 0.0
      %456 = vmatprep.subr.mxu0 0.0
      %457 = vmatpush1.msra.mxu0 0.0
      %458 = vmatprep.subr.mxu0 0.0
      %459 = vmatpush1.msra.mxu0 0.0
      %460 = vmatprep.subr.mxu0 0.0
      %461 = vmatpush1.msra.mxu0 0.0
      %462 = vmatprep.subr.mxu0 0.0
      %463 = vmatpush1.msra.mxu0 0.0
      %464 = vmatprep.subr.mxu0 0.0
      %465 = vmatpush1.msra.mxu0 0.0
      %466 = vmatprep.subr.mxu0 0.0
      %467 = vmatpush1.msra.mxu0 0.0
      %468 = vmatprep.subr.mxu0 0.0
      %469 = vmatpush1.msra.mxu0 0.0
      %470 = vmatprep.subr.mxu0 0.0
      %471 = vmatpush1.msra.mxu0 0.0
      %472 = vmatprep.subr.mxu0 0.0
      %473 = vmatpush1.msra.mxu0 0.0
      %474 = vmatprep.subr.mxu0 0.0
      %475 = vmatpush1.msra.mxu0 0.0
      %476 = vmatprep.subr.mxu0 0.0
      %477 = vmatpush1.msra.mxu0 0.0
      %478 = vmatprep.subr.mxu0 0.0
      %479 = vmatpush1.msra.mxu0 0.0
      %480 = vmatprep.subr.mxu0 0.0
      %481 = vmatpush1.msra.mxu0 0.0
      %482 = vmatprep.subr.mxu0 0.0
      %483 = vmatpush1.msra.mxu0 0.0
      %484 = vmatprep.subr.mxu0 0.0
      %485 = vmatpush1.msra.mxu0 0.0
      %486 = vmatprep.subr.mxu0 0.0
      %487 = vmatpush1.msra.mxu0 0.0
      %488 = vmatprep.subr.mxu0 0.0
      %489 = vmatpush1.msra.mxu0 0.0
      %490 = vmatprep.subr.mxu0 0.0
      %491 = vmatpush1.msra.mxu0 0.0
      %492 = vmatprep.subr.mxu0 0.0
      %493 = vmatpush1.msra.mxu0 0.0
      %494 = vmatprep.subr.mxu0 0.0
      %495 = vmatpush1.msra.mxu0 0.0
      %496 = vmatprep.subr.mxu0 0.0
      %497 = vmatpush1.msra.mxu0 0.0
      %498 = vmatprep.subr.mxu0 0.0
      %499 = vmatpush1.msra.mxu0 0.0
      %500 = vmatprep.subr.mxu0 0.0
      %501 = vmatpush1.msra.mxu0 0.0
      %502 = vmatprep.mubr.f32.mxu0 0.0
      %503 = vmatmul.mubr.f32.gmra.mrb[0].mxu0 %v432
      %v504 = vpop.f32.mrb[0].mxu0
      %v505 = vadd.f32 0.0, %v504
      %v506 = vpop.f32.mrb[0].mxu0
      %v507 = vadd.f32 0.0, %v506
      %508 = vdwg.mxu0
      %v509 = vadd.f32 %v411, %v505
      %v510 = vadd.f32 %v413, %v507
      %v511 = vld [vmem:[%s198] sm:$0xff]
      %v512 = vld [vmem:[%s198 + $0x8] sm:$0xf]
      %s513 = scalar_lea.vmem %s1, 4
      %v514 = vld [vmem:[%s513] sm:$0xf]
      %s515 = scalar_lea.vmem %s1, 16
      %v516 = vld [vmem:[%s515] sm:$0xf]
      %v519 = vcombine.high %v511, %v511
      %520 = vrot.lane.b32.xlu0 %v511, 111
      %v521 = vpop.permute.xlu0 %520
      %522 = vrot.lane.b32.xlu0 %v519, 111
      %v523 = vpop.permute.xlu0 %522
      %524 = vrot.lane.b32.xlu0 %v512, 111
      %v525 = vpop.permute.xlu0 %524
      %vm526 = vcmask 908288
      %v527 = vsel %vm526, %v521, %v523
      %v528 = vsel %vm526, %v523, %v525
      %v530 = vsel %vm257, %v516, 0
      %v532 = vsel %vm261, %v527, 0
      %v534 = vsel %vm261, %v528, 0
      %536 = vmatprep.subr.mxu0 %v534
      %537 = vmatpush1.msra.mxu0 %v532
      %538 = vmatprep.subr.mxu0 0.0
      %539 = vmatpush1.msra.mxu0 0.0
      %540 = vmatprep.subr.mxu0 0.0
      %541 = vmatpush1.msra.mxu0 0.0
      %542 = vmatprep.subr.mxu0 0.0
      %543 = vmatpush1.msra.mxu0 0.0
      %544 = vmatprep.subr.mxu0 0.0
      %545 = vmatpush1.msra.mxu0 0.0
      %546 = vmatprep.subr.mxu0 0.0
      %547 = vmatpush1.msra.mxu0 0.0
      %548 = vmatprep.subr.mxu0 0.0
      %549 = vmatpush1.msra.mxu0 0.0
      %550 = vmatprep.subr.mxu0 0.0
      %551 = vmatpush1.msra.mxu0 0.0
      %552 = vmatprep.subr.mxu0 0.0
      %553 = vmatpush1.msra.mxu0 0.0
      %554 = vmatprep.subr.mxu0 0.0
      %555 = vmatpush1.msra.mxu0 0.0
      %556 = vmatprep.subr.mxu0 0.0
      %557 = vmatpush1.msra.mxu0 0.0
      %558 = vmatprep.subr.mxu0 0.0
      %559 = vmatpush1.msra.mxu0 0.0
      %560 = vmatprep.subr.mxu0 0.0
      %561 = vmatpush1.msra.mxu0 0.0
      %562 = vmatprep.subr.mxu0 0.0
      %563 = vmatpush1.msra.mxu0 0.0
      %564 = vmatprep.subr.mxu0 0.0
      %565 = vmatpush1.msra.mxu0 0.0
      %566 = vmatprep.subr.mxu0 0.0
      %567 = vmatpush1.msra.mxu0 0.0
      %568 = vmatprep.subr.mxu0 0.0
      %569 = vmatpush1.msra.mxu0 0.0
      %570 = vmatprep.subr.mxu0 0.0
      %571 = vmatpush1.msra.mxu0 0.0
      %572 = vmatprep.subr.mxu0 0.0
      %573 = vmatpush1.msra.mxu0 0.0
      %574 = vmatprep.subr.mxu0 0.0
      %575 = vmatpush1.msra.mxu0 0.0
      %576 = vmatprep.subr.mxu0 0.0
      %577 = vmatpush1.msra.mxu0 0.0
      %578 = vmatprep.subr.mxu0 0.0
      %579 = vmatpush1.msra.mxu0 0.0
      %580 = vmatprep.subr.mxu0 0.0
      %581 = vmatpush1.msra.mxu0 0.0
      %582 = vmatprep.subr.mxu0 0.0
      %583 = vmatpush1.msra.mxu0 0.0
      %584 = vmatprep.subr.mxu0 0.0
      %585 = vmatpush1.msra.mxu0 0.0
      %586 = vmatprep.subr.mxu0 0.0
      %587 = vmatpush1.msra.mxu0 0.0
      %588 = vmatprep.subr.mxu0 0.0
      %589 = vmatpush1.msra.mxu0 0.0
      %590 = vmatprep.subr.mxu0 0.0
      %591 = vmatpush1.msra.mxu0 0.0
      %592 = vmatprep.subr.mxu0 0.0
      %593 = vmatpush1.msra.mxu0 0.0
      %594 = vmatprep.subr.mxu0 0.0
      %595 = vmatpush1.msra.mxu0 0.0
      %596 = vmatprep.subr.mxu0 0.0
      %597 = vmatpush1.msra.mxu0 0.0
      %598 = vmatprep.subr.mxu0 0.0
      %599 = vmatpush1.msra.mxu0 0.0
      %600 = vmatprep.mubr.f32.mxu0 0.0
      %601 = vmatmul.mubr.f32.gmra.mrb[0].mxu0 %v530
      %v602 = vpop.f32.mrb[0].mxu0
      %v603 = vadd.f32 0.0, %v602
      %v604 = vpop.f32.mrb[0].mxu0
      %v605 = vadd.f32 0.0, %v604
      %606 = vdwg.mxu0
      %607 = vrot.lane.b32.xlu0 %v511, 127
      %v608 = vpop.permute.xlu0 %607
      %609 = vrot.lane.b32.xlu0 %v519, 127
      %v610 = vpop.permute.xlu0 %609
      %611 = vrot.lane.b32.xlu0 %v512, 127
      %v612 = vpop.permute.xlu0 %611
      %vm613 = vcmask 1039360
      %v614 = vsel %vm613, %v608, %v610
      %v615 = vsel %vm613, %v610, %v612
      %v617 = vsel %vm257, %v514, 0
      %v619 = vsel %vm261, %v614, 0
      %v621 = vsel %vm261, %v615, 0
      %623 = vmatprep.subr.mxu0 %v621
      %624 = vmatpush1.msra.mxu0 %v619
      %625 = vmatprep.subr.mxu0 0.0
      %626 = vmatpush1.msra.mxu0 0.0
      %627 = vmatprep.subr.mxu0 0.0
      %628 = vmatpush1.msra.mxu0 0.0
      %629 = vmatprep.subr.mxu0 0.0
      %630 = vmatpush1.msra.mxu0 0.0
      %631 = vmatprep.subr.mxu0 0.0
      %632 = vmatpush1.msra.mxu0 0.0
      %633 = vmatprep.subr.mxu0 0.0
      %634 = vmatpush1.msra.mxu0 0.0
      %635 = vmatprep.subr.mxu0 0.0
      %636 = vmatpush1.msra.mxu0 0.0
      %637 = vmatprep.subr.mxu0 0.0
      %638 = vmatpush1.msra.mxu0 0.0
      %639 = vmatprep.subr.mxu0 0.0
      %640 = vmatpush1.msra.mxu0 0.0
      %641 = vmatprep.subr.mxu0 0.0
      %642 = vmatpush1.msra.mxu0 0.0
      %643 = vmatprep.subr.mxu0 0.0
      %644 = vmatpush1.msra.mxu0 0.0
      %645 = vmatprep.subr.mxu0 0.0
      %646 = vmatpush1.msra.mxu0 0.0
      %647 = vmatprep.subr.mxu0 0.0
      %648 = vmatpush1.msra.mxu0 0.0
      %649 = vmatprep.subr.mxu0 0.0
      %650 = vmatpush1.msra.mxu0 0.0
      %651 = vmatprep.subr.mxu0 0.0
      %652 = vmatpush1.msra.mxu0 0.0
      %653 = vmatprep.subr.mxu0 0.0
      %654 = vmatpush1.msra.mxu0 0.0
      %655 = vmatprep.subr.mxu0 0.0
      %656 = vmatpush1.msra.mxu0 0.0
      %657 = vmatprep.subr.mxu0 0.0
      %658 = vmatpush1.msra.mxu0 0.0
      %659 = vmatprep.subr.mxu0 0.0
      %660 = vmatpush1.msra.mxu0 0.0
      %661 = vmatprep.subr.mxu0 0.0
      %662 = vmatpush1.msra.mxu0 0.0
      %663 = vmatprep.subr.mxu0 0.0
      %664 = vmatpush1.msra.mxu0 0.0
      %665 = vmatprep.subr.mxu0 0.0
      %666 = vmatpush1.msra.mxu0 0.0
      %667 = vmatprep.subr.mxu0 0.0
      %668 = vmatpush1.msra.mxu0 0.0
      %669 = vmatprep.subr.mxu0 0.0
      %670 = vmatpush1.msra.mxu0 0.0
      %671 = vmatprep.subr.mxu0 0.0
      %672 = vmatpush1.msra.mxu0 0.0
      %673 = vmatprep.subr.mxu0 0.0
      %674 = vmatpush1.msra.mxu0 0.0
      %675 = vmatprep.subr.mxu0 0.0
      %676 = vmatpush1.msra.mxu0 0.0
      %677 = vmatprep.subr.mxu0 0.0
      %678 = vmatpush1.msra.mxu0 0.0
      %679 = vmatprep.subr.mxu0 0.0
      %680 = vmatpush1.msra.mxu0 0.0
      %681 = vmatprep.subr.mxu0 0.0
      %682 = vmatpush1.msra.mxu0 0.0
      %683 = vmatprep.subr.mxu0 0.0
      %684 = vmatpush1.msra.mxu0 0.0
      %685 = vmatprep.subr.mxu0 0.0
      %686 = vmatpush1.msra.mxu0 0.0
      %687 = vmatprep.mubr.f32.mxu0 0.0
      %688 = vmatmul.mubr.f32.gmra.mrb[0].mxu0 %v617
      %v689 = vpop.f32.mrb[0].mxu0
      %v690 = vadd.f32 %v603, %v689
      %v691 = vpop.f32.mrb[0].mxu0
      %v692 = vadd.f32 %v605, %v691
      %693 = vdwg.mxu0
      %v694 = vld [vmem:[%s198] sm:$0xff]
      %v695 = vld [vmem:[%s198 + $0x8] sm:$0xf]
      %s696 = scalar_lea.vmem %s1, 28
      %v697 = vld [vmem:[%s696] sm:$0xf]
      %v700 = vcombine.high %v694, %v694
      %701 = vrot.lane.b32.xlu0 %v694, 95
      %v702 = vpop.permute.xlu0 %701
      %703 = vrot.lane.b32.xlu0 %v700, 95
      %v704 = vpop.permute.xlu0 %703
      %705 = vrot.lane.b32.xlu0 %v695, 95
      %v706 = vpop.permute.xlu0 %705
      %vm707 = vcmask 777216
      %v708 = vsel %vm707, %v702, %v704
      %v709 = vsel %vm707, %v704, %v706
      %v711 = vsel %vm257, %v697, 0
      %v713 = vsel %vm261, %v708, 0
      %v715 = vsel %vm261, %v709, 0
      %717 = vmatprep.subr.mxu0 %v715
      %718 = vmatpush1.msra.mxu0 %v713
      %719 = vmatprep.subr.mxu0 0.0
      %720 = vmatpush1.msra.mxu0 0.0
      %721 = vmatprep.subr.mxu0 0.0
      %722 = vmatpush1.msra.mxu0 0.0
      %723 = vmatprep.subr.mxu0 0.0
      %724 = vmatpush1.msra.mxu0 0.0
      %725 = vmatprep.subr.mxu0 0.0
      %726 = vmatpush1.msra.mxu0 0.0
      %727 = vmatprep.subr.mxu0 0.0
      %728 = vmatpush1.msra.mxu0 0.0
      %729 = vmatprep.subr.mxu0 0.0
      %730 = vmatpush1.msra.mxu0 0.0
      %731 = vmatprep.subr.mxu0 0.0
      %732 = vmatpush1.msra.mxu0 0.0
      %733 = vmatprep.subr.mxu0 0.0
      %734 = vmatpush1.msra.mxu0 0.0
      %735 = vmatprep.subr.mxu0 0.0
      %736 = vmatpush1.msra.mxu0 0.0
      %737 = vmatprep.subr.mxu0 0.0
      %738 = vmatpush1.msra.mxu0 0.0
      %739 = vmatprep.subr.mxu0 0.0
      %740 = vmatpush1.msra.mxu0 0.0
      %741 = vmatprep.subr.mxu0 0.0
      %742 = vmatpush1.msra.mxu0 0.0
      %743 = vmatprep.subr.mxu0 0.0
      %744 = vmatpush1.msra.mxu0 0.0
      %745 = vmatprep.subr.mxu0 0.0
      %746 = vmatpush1.msra.mxu0 0.0
      %747 = vmatprep.subr.mxu0 0.0
      %748 = vmatpush1.msra.mxu0 0.0
      %749 = vmatprep.subr.mxu0 0.0
      %750 = vmatpush1.msra.mxu0 0.0
      %751 = vmatprep.subr.mxu0 0.0
      %752 = vmatpush1.msra.mxu0 0.0
      %753 = vmatprep.subr.mxu0 0.0
      %754 = vmatpush1.msra.mxu0 0.0
      %755 = vmatprep.subr.mxu0 0.0
      %756 = vmatpush1.msra.mxu0 0.0
      %757 = vmatprep.subr.mxu0 0.0
      %758 = vmatpush1.msra.mxu0 0.0
      %759 = vmatprep.subr.mxu0 0.0
      %760 = vmatpush1.msra.mxu0 0.0
      %761 = vmatprep.subr.mxu0 0.0
      %762 = vmatpush1.msra.mxu0 0.0
      %763 = vmatprep.subr.mxu0 0.0
      %764 = vmatpush1.msra.mxu0 0.0
      %765 = vmatprep.subr.mxu0 0.0
      %766 = vmatpush1.msra.mxu0 0.0
      %767 = vmatprep.subr.mxu0 0.0
      %768 = vmatpush1.msra.mxu0 0.0
      %769 = vmatprep.subr.mxu0 0.0
      %770 = vmatpush1.msra.mxu0 0.0
      %771 = vmatprep.subr.mxu0 0.0
      %772 = vmatpush1.msra.mxu0 0.0
      %773 = vmatprep.subr.mxu0 0.0
      %774 = vmatpush1.msra.mxu0 0.0
      %775 = vmatprep.subr.mxu0 0.0
      %776 = vmatpush1.msra.mxu0 0.0
      %777 = vmatprep.subr.mxu0 0.0
      %778 = vmatpush1.msra.mxu0 0.0
      %779 = vmatprep.subr.mxu0 0.0
      %780 = vmatpush1.msra.mxu0 0.0
      %781 = vmatprep.mubr.f32.mxu0 0.0
      %782 = vmatmul.mubr.f32.gmra.mrb[0].mxu0 %v711
      %v783 = vpop.f32.mrb[0].mxu0
      %v784 = vadd.f32 0.0, %v783
      %v785 = vpop.f32.mrb[0].mxu0
      %v786 = vadd.f32 0.0, %v785
      %787 = vdwg.mxu0
      %v788 = vadd.f32 %v690, %v784
      %v789 = vadd.f32 %v692, %v786
      %v790 = vld [vmem:[%s198] sm:$0xff]
      %v791 = vld [vmem:[%s198 + $0x8] sm:$0xf]
      %s792 = scalar_lea.vmem %s1, 8
      %v793 = vld [vmem:[%s792] sm:$0xf]
      %s794 = scalar_lea.vmem %s1, 20
      %v795 = vld [vmem:[%s794] sm:$0xf]
      %v798 = vcombine.high %v790, %v790
      %799 = vrot.lane.b32.xlu0 %v790, 110
      %v800 = vpop.permute.xlu0 %799
      %801 = vrot.lane.b32.xlu0 %v798, 110
      %v802 = vpop.permute.xlu0 %801
      %803 = vrot.lane.b32.xlu0 %v791, 110
      %v804 = vpop.permute.xlu0 %803
      %vm805 = vcmask 900096
      %v806 = vsel %vm805, %v800, %v802
      %v807 = vsel %vm805, %v802, %v804
      %v809 = vsel %vm257, %v795, 0
      %v811 = vsel %vm261, %v806, 0
      %v813 = vsel %vm261, %v807, 0
      %815 = vmatprep.subr.mxu0 %v813
      %816 = vmatpush1.msra.mxu0 %v811
      %817 = vmatprep.subr.mxu0 0.0
      %818 = vmatpush1.msra.mxu0 0.0
      %819 = vmatprep.subr.mxu0 0.0
      %820 = vmatpush1.msra.mxu0 0.0
      %821 = vmatprep.subr.mxu0 0.0
      %822 = vmatpush1.msra.mxu0 0.0
      %823 = vmatprep.subr.mxu0 0.0
      %824 = vmatpush1.msra.mxu0 0.0
      %825 = vmatprep.subr.mxu0 0.0
      %826 = vmatpush1.msra.mxu0 0.0
      %827 = vmatprep.subr.mxu0 0.0
      %828 = vmatpush1.msra.mxu0 0.0
      %829 = vmatprep.subr.mxu0 0.0
      %830 = vmatpush1.msra.mxu0 0.0
      %831 = vmatprep.subr.mxu0 0.0
      %832 = vmatpush1.msra.mxu0 0.0
      %833 = vmatprep.subr.mxu0 0.0
      %834 = vmatpush1.msra.mxu0 0.0
      %835 = vmatprep.subr.mxu0 0.0
      %836 = vmatpush1.msra.mxu0 0.0
      %837 = vmatprep.subr.mxu0 0.0
      %838 = vmatpush1.msra.mxu0 0.0
      %839 = vmatprep.subr.mxu0 0.0
      %840 = vmatpush1.msra.mxu0 0.0
      %841 = vmatprep.subr.mxu0 0.0
      %842 = vmatpush1.msra.mxu0 0.0
      %843 = vmatprep.subr.mxu0 0.0
      %844 = vmatpush1.msra.mxu0 0.0
      %845 = vmatprep.subr.mxu0 0.0
      %846 = vmatpush1.msra.mxu0 0.0
      %847 = vmatprep.subr.mxu0 0.0
      %848 = vmatpush1.msra.mxu0 0.0
      %849 = vmatprep.subr.mxu0 0.0
      %850 = vmatpush1.msra.mxu0 0.0
      %851 = vmatprep.subr.mxu0 0.0
      %852 = vmatpush1.msra.mxu0 0.0
      %853 = vmatprep.subr.mxu0 0.0
      %854 = vmatpush1.msra.mxu0 0.0
      %855 = vmatprep.subr.mxu0 0.0
      %856 = vmatpush1.msra.mxu0 0.0
      %857 = vmatprep.subr.mxu0 0.0
      %858 = vmatpush1.msra.mxu0 0.0
      %859 = vmatprep.subr.mxu0 0.0
      %860 = vmatpush1.msra.mxu0 0.0
      %861 = vmatprep.subr.mxu0 0.0
      %862 = vmatpush1.msra.mxu0 0.0
      %863 = vmatprep.subr.mxu0 0.0
      %864 = vmatpush1.msra.mxu0 0.0
      %865 = vmatprep.subr.mxu0 0.0
      %866 = vmatpush1.msra.mxu0 0.0
      %867 = vmatprep.subr.mxu0 0.0
      %868 = vmatpush1.msra.mxu0 0.0
      %869 = vmatprep.subr.mxu0 0.0
      %870 = vmatpush1.msra.mxu0 0.0
      %871 = vmatprep.subr.mxu0 0.0
      %872 = vmatpush1.msra.mxu0 0.0
      %873 = vmatprep.subr.mxu0 0.0
      %874 = vmatpush1.msra.mxu0 0.0
      %875 = vmatprep.subr.mxu0 0.0
      %876 = vmatpush1.msra.mxu0 0.0
      %877 = vmatprep.subr.mxu0 0.0
      %878 = vmatpush1.msra.mxu0 0.0
      %879 = vmatprep.mubr.f32.mxu0 0.0
      %880 = vmatmul.mubr.f32.gmra.mrb[0].mxu0 %v809
      %v881 = vpop.f32.mrb[0].mxu0
      %v882 = vadd.f32 0.0, %v881
      %v883 = vpop.f32.mrb[0].mxu0
      %v884 = vadd.f32 0.0, %v883
      %885 = vdwg.mxu0
      %886 = vrot.lane.b32.xlu0 %v790, 126
      %v887 = vpop.permute.xlu0 %886
      %888 = vrot.lane.b32.xlu0 %v798, 126
      %v889 = vpop.permute.xlu0 %888
      %890 = vrot.lane.b32.xlu0 %v791, 126
      %v891 = vpop.permute.xlu0 %890
      %vm892 = vcmask 1031168
      %v893 = vsel %vm892, %v887, %v889
      %v894 = vsel %vm892, %v889, %v891
      %v896 = vsel %vm257, %v793, 0
      %v898 = vsel %vm261, %v893, 0
      %v900 = vsel %vm261, %v894, 0
      %902 = vmatprep.subr.mxu0 %v900
      %903 = vmatpush1.msra.mxu0 %v898
      %904 = vmatprep.subr.mxu0 0.0
      %905 = vmatpush1.msra.mxu0 0.0
      %906 = vmatprep.subr.mxu0 0.0
      %907 = vmatpush1.msra.mxu0 0.0
      %908 = vmatprep.subr.mxu0 0.0
      %909 = vmatpush1.msra.mxu0 0.0
      %910 = vmatprep.subr.mxu0 0.0
      %911 = vmatpush1.msra.mxu0 0.0
      %912 = vmatprep.subr.mxu0 0.0
      %913 = vmatpush1.msra.mxu0 0.0
      %914 = vmatprep.subr.mxu0 0.0
      %915 = vmatpush1.msra.mxu0 0.0
      %916 = vmatprep.subr.mxu0 0.0
      %917 = vmatpush1.msra.mxu0 0.0
      %918 = vmatprep.subr.mxu0 0.0
      %919 = vmatpush1.msra.mxu0 0.0
      %920 = vmatprep.subr.mxu0 0.0
      %921 = vmatpush1.msra.mxu0 0.0
      %922 = vmatprep.subr.mxu0 0.0
      %923 = vmatpush1.msra.mxu0 0.0
      %924 = vmatprep.subr.mxu0 0.0
      %925 = vmatpush1.msra.mxu0 0.0
      %926 = vmatprep.subr.mxu0 0.0
      %927 = vmatpush1.msra.mxu0 0.0
      %928 = vmatprep.subr.mxu0 0.0
      %929 = vmatpush1.msra.mxu0 0.0
      %930 = vmatprep.subr.mxu0 0.0
      %931 = vmatpush1.msra.mxu0 0.0
      %932 = vmatprep.subr.mxu0 0.0
      %933 = vmatpush1.msra.mxu0 0.0
      %934 = vmatprep.subr.mxu0 0.0
      %935 = vmatpush1.msra.mxu0 0.0
      %936 = vmatprep.subr.mxu0 0.0
      %937 = vmatpush1.msra.mxu0 0.0
      %938 = vmatprep.subr.mxu0 0.0
      %939 = vmatpush1.msra.mxu0 0.0
      %940 = vmatprep.subr.mxu0 0.0
      %941 = vmatpush1.msra.mxu0 0.0
      %942 = vmatprep.subr.mxu0 0.0
      %943 = vmatpush1.msra.mxu0 0.0
      %944 = vmatprep.subr.mxu0 0.0
      %945 = vmatpush1.msra.mxu0 0.0
      %946 = vmatprep.subr.mxu0 0.0
      %947 = vmatpush1.msra.mxu0 0.0
      %948 = vmatprep.subr.mxu0 0.0
      %949 = vmatpush1.msra.mxu0 0.0
      %950 = vmatprep.subr.mxu0 0.0
      %951 = vmatpush1.msra.mxu0 0.0
      %952 = vmatprep.subr.mxu0 0.0
      %953 = vmatpush1.msra.mxu0 0.0
      %954 = vmatprep.subr.mxu0 0.0
      %955 = vmatpush1.msra.mxu0 0.0
      %956 = vmatprep.subr.mxu0 0.0
      %957 = vmatpush1.msra.mxu0 0.0
      %958 = vmatprep.subr.mxu0 0.0
      %959 = vmatpush1.msra.mxu0 0.0
      %960 = vmatprep.subr.mxu0 0.0
      %961 = vmatpush1.msra.mxu0 0.0
      %962 = vmatprep.subr.mxu0 0.0
      %963 = vmatpush1.msra.mxu0 0.0
      %964 = vmatprep.subr.mxu0 0.0
      %965 = vmatpush1.msra.mxu0 0.0
      %966 = vmatprep.mubr.f32.mxu0 0.0
      %967 = vmatmul.mubr.f32.gmra.mrb[0].mxu0 %v896
      %v968 = vpop.f32.mrb[0].mxu0
      %v969 = vadd.f32 %v882, %v968
      %v970 = vpop.f32.mrb[0].mxu0
      %v971 = vadd.f32 %v884, %v970
      %972 = vdwg.mxu0
      %v973 = vld [vmem:[%s198] sm:$0xff]
      %v974 = vld [vmem:[%s198 + $0x8] sm:$0xf]
      %s975 = scalar_lea.vmem %s1, 32
      %v976 = vld [vmem:[%s975] sm:$0xf]
      %v979 = vcombine.high %v973, %v973
      %980 = vrot.lane.b32.xlu0 %v973, 94
      %v981 = vpop.permute.xlu0 %980
      %982 = vrot.lane.b32.xlu0 %v979, 94
      %v983 = vpop.permute.xlu0 %982
      %984 = vrot.lane.b32.xlu0 %v974, 94
      %v985 = vpop.permute.xlu0 %984
      %vm986 = vcmask 769024
      %v987 = vsel %vm986, %v981, %v983
      %v988 = vsel %vm986, %v983, %v985
      %v990 = vsel %vm257, %v976, 0
      %v992 = vsel %vm261, %v987, 0
      %v994 = vsel %vm261, %v988, 0
      %996 = vmatprep.subr.mxu0 %v994
      %997 = vmatpush1.msra.mxu0 %v992
      %998 = vmatprep.subr.mxu0 0.0
      %999 = vmatpush1.msra.mxu0 0.0
      %1000 = vmatprep.subr.mxu0 0.0
      %1001 = vmatpush1.msra.mxu0 0.0
      %1002 = vmatprep.subr.mxu0 0.0
      %1003 = vmatpush1.msra.mxu0 0.0
      %1004 = vmatprep.subr.mxu0 0.0
      %1005 = vmatpush1.msra.mxu0 0.0
      %1006 = vmatprep.subr.mxu0 0.0
      %1007 = vmatpush1.msra.mxu0 0.0
      %1008 = vmatprep.subr.mxu0 0.0
      %1009 = vmatpush1.msra.mxu0 0.0
      %1010 = vmatprep.subr.mxu0 0.0
      %1011 = vmatpush1.msra.mxu0 0.0
      %1012 = vmatprep.subr.mxu0 0.0
      %1013 = vmatpush1.msra.mxu0 0.0
      %1014 = vmatprep.subr.mxu0 0.0
      %1015 = vmatpush1.msra.mxu0 0.0
      %1016 = vmatprep.subr.mxu0 0.0
      %1017 = vmatpush1.msra.mxu0 0.0
      %1018 = vmatprep.subr.mxu0 0.0
      %1019 = vmatpush1.msra.mxu0 0.0
      %1020 = vmatprep.subr.mxu0 0.0
      %1021 = vmatpush1.msra.mxu0 0.0
      %1022 = vmatprep.subr.mxu0 0.0
      %1023 = vmatpush1.msra.mxu0 0.0
      %1024 = vmatprep.subr.mxu0 0.0
      %1025 = vmatpush1.msra.mxu0 0.0
      %1026 = vmatprep.subr.mxu0 0.0
      %1027 = vmatpush1.msra.mxu0 0.0
      %1028 = vmatprep.subr.mxu0 0.0
      %1029 = vmatpush1.msra.mxu0 0.0
      %1030 = vmatprep.subr.mxu0 0.0
      %1031 = vmatpush1.msra.mxu0 0.0
      %1032 = vmatprep.subr.mxu0 0.0
      %1033 = vmatpush1.msra.mxu0 0.0
      %1034 = vmatprep.subr.mxu0 0.0
      %1035 = vmatpush1.msra.mxu0 0.0
      %1036 = vmatprep.subr.mxu0 0.0
      %1037 = vmatpush1.msra.mxu0 0.0
      %1038 = vmatprep.subr.mxu0 0.0
      %1039 = vmatpush1.msra.mxu0 0.0
      %1040 = vmatprep.subr.mxu0 0.0
      %1041 = vmatpush1.msra.mxu0 0.0
      %1042 = vmatprep.subr.mxu0 0.0
      %1043 = vmatpush1.msra.mxu0 0.0
      %1044 = vmatprep.subr.mxu0 0.0
      %1045 = vmatpush1.msra.mxu0 0.0
      %1046 = vmatprep.subr.mxu0 0.0
      %1047 = vmatpush1.msra.mxu0 0.0
      %1048 = vmatprep.subr.mxu0 0.0
      %1049 = vmatpush1.msra.mxu0 0.0
      %1050 = vmatprep.subr.mxu0 0.0
      %1051 = vmatpush1.msra.mxu0 0.0
      %1052 = vmatprep.subr.mxu0 0.0
      %1053 = vmatpush1.msra.mxu0 0.0
      %1054 = vmatprep.subr.mxu0 0.0
      %1055 = vmatpush1.msra.mxu0 0.0
      %1056 = vmatprep.subr.mxu0 0.0
      %1057 = vmatpush1.msra.mxu0 0.0
      %1058 = vmatprep.subr.mxu0 0.0
      %1059 = vmatpush1.msra.mxu0 0.0
      %1060 = vmatprep.mubr.f32.mxu0 0.0
      %1061 = vmatmul.mubr.f32.gmra.mrb[0].mxu0 %v990
      %v1062 = vpop.f32.mrb[0].mxu0
      %v1063 = vadd.f32 0.0, %v1062
      %v1064 = vpop.f32.mrb[0].mxu0
      %v1065 = vadd.f32 0.0, %v1064
      %1066 = vdwg.mxu0
      %v1067 = vadd.f32 %v969, %v1063
      %v1068 = vadd.f32 %v971, %v1065
      %v1069 = vsel %vm234, 1, 0
      %v1070 = vsel %vm235, 1, 0
      %vm1071 = vcmp.eq.s32.totalorder %v1069, 1
      %vm1072 = vcmp.eq.s32.totalorder %v1070, 1
      %v1073 = vsel %vm1071, %v509, 0.0
      %v1074 = vsel %vm1072, %v510, 0.0
      %v1075 = vadd.f32 %v788, %v1073
      %v1076 = vadd.f32 %v789, %v1074
      %v1077 = vsel %vm236, 1, 0
      %v1078 = vsel %vm237, 1, 0
      %vm1079 = vcmp.eq.s32.totalorder %v1077, 1
      %vm1080 = vcmp.eq.s32.totalorder %v1078, 1
      %v1081 = vsel %vm1079, %v1067, 0.0
      %v1082 = vsel %vm1080, %v1068, 0.0
      %v1083 = vadd.f32 %v1075, %v1081
      %v1084 = vadd.f32 %v1076, %v1082
      %1086 = vset.pattern.permute.xlu0 0
      %1087 = vperm.xlu0 %1086, %v238
      %v1088 = vpop.permute.xlu0 %1087
      %v1090 = vadd.f32 %v1083, %v1088
      %v1091 = vadd.f32 %v1084, %v1088
      %vm1092 = vcmp.ge.f32.partialorder %v1090, 0.0
      %vm1093 = vcmp.ge.f32.partialorder %v1091, 0.0
      %v1094 = vstv %s239
      %v1095 = vmul.f32 %v1094, %v1090
      %v1096 = vmul.f32 %v1094, %v1091
      %v1097 = vsel %vm1092, %v1090, %v1095
      %v1098 = vsel %vm1093, %v1091, %v1096
      %v1101 = vcombine.low %v1097, %v1098
      %1103 = vst [vmem:[%s205] sm:$0xff] %v1101
      %s1104 = scalar_lea.vmem %s198, 12
      %v1105 = vld [vmem:[%s1104] sm:$0xff]
      %v1106 = vld [vmem:[%s1] sm:$0xf]
      %v1107 = vld [vmem:[%s1104 + $0x8] sm:$0xf]
      %v1108 = vld [vmem:[%s243] sm:$0xf]
      %v1111 = vcombine.high %v1105, %v1105
      %1112 = vrot.lane.b32.xlu0 %v1105, 112
      %v1113 = vpop.permute.xlu0 %1112
      %1114 = vrot.lane.b32.xlu0 %v1111, 112
      %v1115 = vpop.permute.xlu0 %1114
      %1116 = vrot.lane.b32.xlu0 %v1107, 112
      %v1117 = vpop.permute.xlu0 %1116
      %v1118 = vsel %vm254, %v1113, %v1115
      %v1119 = vsel %vm254, %v1115, %v1117
      %v1121 = vsel %vm257, %v1108, 0
      %v1123 = vsel %vm261, %v1118, 0
      %v1125 = vsel %vm261, %v1119, 0
      %1127 = vmatprep.subr.mxu0 %v1125
      %1128 = vmatpush1.msra.mxu0 %v1123
      %1129 = vmatprep.subr.mxu0 0.0
      %1130 = vmatpush1.msra.mxu0 0.0
      %1131 = vmatprep.subr.mxu0 0.0
      %1132 = vmatpush1.msra.mxu0 0.0
      %1133 = vmatprep.subr.mxu0 0.0
      %1134 = vmatpush1.msra.mxu0 0.0
      %1135 = vmatprep.subr.mxu0 0.0
      %1136 = vmatpush1.msra.mxu0 0.0
      %1137 = vmatprep.subr.mxu0 0.0
      %1138 = vmatpush1.msra.mxu0 0.0
      %1139 = vmatprep.subr.mxu0 0.0
      %1140 = vmatpush1.msra.mxu0 0.0
      %1141 = vmatprep.subr.mxu0 0.0
      %1142 = vmatpush1.msra.mxu0 0.0
      %1143 = vmatprep.subr.mxu0 0.0
      %1144 = vmatpush1.msra.mxu0 0.0
      %1145 = vmatprep.subr.mxu0 0.0
      %1146 = vmatpush1.msra.mxu0 0.0
      %1147 = vmatprep.subr.mxu0 0.0
      %1148 = vmatpush1.msra.mxu0 0.0
      %1149 = vmatprep.subr.mxu0 0.0
      %1150 = vmatpush1.msra.mxu0 0.0
      %1151 = vmatprep.subr.mxu0 0.0
      %1152 = vmatpush1.msra.mxu0 0.0
      %1153 = vmatprep.subr.mxu0 0.0
      %1154 = vmatpush1.msra.mxu0 0.0
      %1155 = vmatprep.subr.mxu0 0.0
      %1156 = vmatpush1.msra.mxu0 0.0
      %1157 = vmatprep.subr.mxu0 0.0
      %1158 = vmatpush1.msra.mxu0 0.0
      %1159 = vmatprep.subr.mxu0 0.0
      %1160 = vmatpush1.msra.mxu0 0.0
      %1161 = vmatprep.subr.mxu0 0.0
      %1162 = vmatpush1.msra.mxu0 0.0
      %1163 = vmatprep.subr.mxu0 0.0
      %1164 = vmatpush1.msra.mxu0 0.0
      %1165 = vmatprep.subr.mxu0 0.0
      %1166 = vmatpush1.msra.mxu0 0.0
      %1167 = vmatprep.subr.mxu0 0.0
      %1168 = vmatpush1.msra.mxu0 0.0
      %1169 = vmatprep.subr.mxu0 0.0
      %1170 = vmatpush1.msra.mxu0 0.0
      %1171 = vmatprep.subr.mxu0 0.0
      %1172 = vmatpush1.msra.mxu0 0.0
      %1173 = vmatprep.subr.mxu0 0.0
      %1174 = vmatpush1.msra.mxu0 0.0
      %1175 = vmatprep.subr.mxu0 0.0
      %1176 = vmatpush1.msra.mxu0 0.0
      %1177 = vmatprep.subr.mxu0 0.0
      %1178 = vmatpush1.msra.mxu0 0.0
      %1179 = vmatprep.subr.mxu0 0.0
      %1180 = vmatpush1.msra.mxu0 0.0
      %1181 = vmatprep.subr.mxu0 0.0
      %1182 = vmatpush1.msra.mxu0 0.0
      %1183 = vmatprep.subr.mxu0 0.0
      %1184 = vmatpush1.msra.mxu0 0.0
      %1185 = vmatprep.subr.mxu0 0.0
      %1186 = vmatpush1.msra.mxu0 0.0
      %1187 = vmatprep.subr.mxu0 0.0
      %1188 = vmatpush1.msra.mxu0 0.0
      %1189 = vmatprep.subr.mxu0 0.0
      %1190 = vmatpush1.msra.mxu0 0.0
      %1191 = vmatprep.mubr.f32.mxu0 0.0
      %1192 = vmatmul.mubr.f32.gmra.mrb[0].mxu0 %v1121
      %v1193 = vpop.f32.mrb[0].mxu0
      %v1194 = vadd.f32 0.0, %v1193
      %v1195 = vpop.f32.mrb[0].mxu0
      %v1196 = vadd.f32 0.0, %v1195
      %1197 = vdwg.mxu0
      %v1199 = vsel %vm257, %v1106, 0
      %v1201 = vsel %vm261, %v1105, 0
      %v1203 = vsel %vm261, %v1111, 0
      %1205 = vmatprep.subr.mxu0 %v1203
      %1206 = vmatpush1.msra.mxu0 %v1201
      %1207 = vmatprep.subr.mxu0 0.0
      %1208 = vmatpush1.msra.mxu0 0.0
      %1209 = vmatprep.subr.mxu0 0.0
      %1210 = vmatpush1.msra.mxu0 0.0
      %1211 = vmatprep.subr.mxu0 0.0
      %1212 = vmatpush1.msra.mxu0 0.0
      %1213 = vmatprep.subr.mxu0 0.0
      %1214 = vmatpush1.msra.mxu0 0.0
      %1215 = vmatprep.subr.mxu0 0.0
      %1216 = vmatpush1.msra.mxu0 0.0
      %1217 = vmatprep.subr.mxu0 0.0
      %1218 = vmatpush1.msra.mxu0 0.0
      %1219 = vmatprep.subr.mxu0 0.0
      %1220 = vmatpush1.msra.mxu0 0.0
      %1221 = vmatprep.subr.mxu0 0.0
      %1222 = vmatpush1.msra.mxu0 0.0
      %1223 = vmatprep.subr.mxu0 0.0
      %1224 = vmatpush1.msra.mxu0 0.0
      %1225 = vmatprep.subr.mxu0 0.0
      %1226 = vmatpush1.msra.mxu0 0.0
      %1227 = vmatprep.subr.mxu0 0.0
      %1228 = vmatpush1.msra.mxu0 0.0
      %1229 = vmatprep.subr.mxu0 0.0
      %1230 = vmatpush1.msra.mxu0 0.0
      %1231 = vmatprep.subr.mxu0 0.0
      %1232 = vmatpush1.msra.mxu0 0.0
      %1233 = vmatprep.subr.mxu0 0.0
      %1234 = vmatpush1.msra.mxu0 0.0
      %1235 = vmatprep.subr.mxu0 0.0
      %1236 = vmatpush1.msra.mxu0 0.0
      %1237 = vmatprep.subr.mxu0 0.0
      %1238 = vmatpush1.msra.mxu0 0.0
      %1239 = vmatprep.subr.mxu0 0.0
      %1240 = vmatpush1.msra.mxu0 0.0
      %1241 = vmatprep.subr.mxu0 0.0
      %1242 = vmatpush1.msra.mxu0 0.0
      %1243 = vmatprep.subr.mxu0 0.0
      %1244 = vmatpush1.msra.mxu0 0.0
      %1245 = vmatprep.subr.mxu0 0.0
      %1246 = vmatpush1.msra.mxu0 0.0
      %1247 = vmatprep.subr.mxu0 0.0
      %1248 = vmatpush1.msra.mxu0 0.0
      %1249 = vmatprep.subr.mxu0 0.0
      %1250 = vmatpush1.msra.mxu0 0.0
      %1251 = vmatprep.subr.mxu0 0.0
      %1252 = vmatpush1.msra.mxu0 0.0
      %1253 = vmatprep.subr.mxu0 0.0
      %1254 = vmatpush1.msra.mxu0 0.0
      %1255 = vmatprep.subr.mxu0 0.0
      %1256 = vmatpush1.msra.mxu0 0.0
      %1257 = vmatprep.subr.mxu0 0.0
      %1258 = vmatpush1.msra.mxu0 0.0
      %1259 = vmatprep.subr.mxu0 0.0
      %1260 = vmatpush1.msra.mxu0 0.0
      %1261 = vmatprep.subr.mxu0 0.0
      %1262 = vmatpush1.msra.mxu0 0.0
      %1263 = vmatprep.subr.mxu0 0.0
      %1264 = vmatpush1.msra.mxu0 0.0
      %1265 = vmatprep.subr.mxu0 0.0
      %1266 = vmatpush1.msra.mxu0 0.0
      %1267 = vmatprep.subr.mxu0 0.0
      %1268 = vmatpush1.msra.mxu0 0.0
      %1269 = vmatprep.mubr.f32.mxu0 0.0
      %1270 = vmatmul.mubr.f32.gmra.mrb[0].mxu0 %v1199
      %v1271 = vpop.f32.mrb[0].mxu0
      %v1272 = vadd.f32 %v1194, %v1271
      %v1273 = vpop.f32.mrb[0].mxu0
      %v1274 = vadd.f32 %v1196, %v1273
      %1275 = vdwg.mxu0
      %v1276 = vld [vmem:[%s1104] sm:$0xff]
      %v1277 = vld [vmem:[%s1104 + $0x8] sm:$0xf]
      %v1278 = vld [vmem:[%s417] sm:$0xf]
      %v1281 = vcombine.high %v1276, %v1276
      %1282 = vrot.lane.b32.xlu0 %v1276, 96
      %v1283 = vpop.permute.xlu0 %1282
      %1284 = vrot.lane.b32.xlu0 %v1281, 96
      %v1285 = vpop.permute.xlu0 %1284
      %1286 = vrot.lane.b32.xlu0 %v1277, 96
      %v1287 = vpop.permute.xlu0 %1286
      %v1288 = vsel %vm428, %v1283, %v1285
      %v1289 = vsel %vm428, %v1285, %v1287
      %v1291 = vsel %vm257, %v1278, 0
      %v1293 = vsel %vm261, %v1288, 0
      %v1295 = vsel %vm261, %v1289, 0
      %1297 = vmatprep.subr.mxu0 %v1295
      %1298 = vmatpush1.msra.mxu0 %v1293
      %1299 = vmatprep.subr.mxu0 0.0
      %1300 = vmatpush1.msra.mxu0 0.0
      %1301 = vmatprep.subr.mxu0 0.0
      %1302 = vmatpush1.msra.mxu0 0.0
      %1303 = vmatprep.subr.mxu0 0.0
      %1304 = vmatpush1.msra.mxu0 0.0
      %1305 = vmatprep.subr.mxu0 0.0
      %1306 = vmatpush1.msra.mxu0 0.0
      %1307 = vmatprep.subr.mxu0 0.0
      %1308 = vmatpush1.msra.mxu0 0.0
      %1309 = vmatprep.subr.mxu0 0.0
      %1310 = vmatpush1.msra.mxu0 0.0
      %1311 = vmatprep.subr.mxu0 0.0
      %1312 = vmatpush1.msra.mxu0 0.0
      %1313 = vmatprep.subr.mxu0 0.0
      %1314 = vmatpush1.msra.mxu0 0.0
      %1315 = vmatprep.subr.mxu0 0.0
      %1316 = vmatpush1.msra.mxu0 0.0
      %1317 = vmatprep.subr.mxu0 0.0
      %1318 = vmatpush1.msra.mxu0 0.0
      %1319 = vmatprep.subr.mxu0 0.0
      %1320 = vmatpush1.msra.mxu0 0.0
      %1321 = vmatprep.subr.mxu0 0.0
      %1322 = vmatpush1.msra.mxu0 0.0
      %1323 = vmatprep.subr.mxu0 0.0
      %1324 = vmatpush1.msra.mxu0 0.0
      %1325 = vmatprep.subr.mxu0 0.0
      %1326 = vmatpush1.msra.mxu0 0.0
      %1327 = vmatprep.subr.mxu0 0.0
      %1328 = vmatpush1.msra.mxu0 0.0
      %1329 = vmatprep.subr.mxu0 0.0
      %1330 = vmatpush1.msra.mxu0 0.0
      %1331 = vmatprep.subr.mxu0 0.0
      %1332 = vmatpush1.msra.mxu0 0.0
      %1333 = vmatprep.subr.mxu0 0.0
      %1334 = vmatpush1.msra.mxu0 0.0
      %1335 = vmatprep.subr.mxu0 0.0
      %1336 = vmatpush1.msra.mxu0 0.0
      %1337 = vmatprep.subr.mxu0 0.0
      %1338 = vmatpush1.msra.mxu0 0.0
      %1339 = vmatprep.subr.mxu0 0.0
      %1340 = vmatpush1.msra.mxu0 0.0
      %1341 = vmatprep.subr.mxu0 0.0
      %1342 = vmatpush1.msra.mxu0 0.0
      %1343 = vmatprep.subr.mxu0 0.0
      %1344 = vmatpush1.msra.mxu0 0.0
      %1345 = vmatprep.subr.mxu0 0.0
      %1346 = vmatpush1.msra.mxu0 0.0
      %1347 = vmatprep.subr.mxu0 0.0
      %1348 = vmatpush1.msra.mxu0 0.0
      %1349 = vmatprep.subr.mxu0 0.0
      %1350 = vmatpush1.msra.mxu0 0.0
      %1351 = vmatprep.subr.mxu0 0.0
      %1352 = vmatpush1.msra.mxu0 0.0
      %1353 = vmatprep.subr.mxu0 0.0
      %1354 = vmatpush1.msra.mxu0 0.0
      %1355 = vmatprep.subr.mxu0 0.0
      %1356 = vmatpush1.msra.mxu0 0.0
      %1357 = vmatprep.subr.mxu0 0.0
      %1358 = vmatpush1.msra.mxu0 0.0
      %1359 = vmatprep.subr.mxu0 0.0
      %1360 = vmatpush1.msra.mxu0 0.0
      %1361 = vmatprep.mubr.f32.mxu0 0.0
      %1362 = vmatmul.mubr.f32.gmra.mrb[0].mxu0 %v1291
      %v1363 = vpop.f32.mrb[0].mxu0
      %v1364 = vadd.f32 0.0, %v1363
      %v1365 = vpop.f32.mrb[0].mxu0
      %v1366 = vadd.f32 0.0, %v1365
      %1367 = vdwg.mxu0
      %v1368 = vadd.f32 %v1272, %v1364
      %v1369 = vadd.f32 %v1274, %v1366
      %v1370 = vld [vmem:[%s1104] sm:$0xff]
      %v1371 = vld [vmem:[%s1104 + $0x8] sm:$0xf]
      %v1372 = vld [vmem:[%s513] sm:$0xf]
      %v1373 = vld [vmem:[%s515] sm:$0xf]
      %v1376 = vcombine.high %v1370, %v1370
      %1377 = vrot.lane.b32.xlu0 %v1370, 111
      %v1378 = vpop.permute.xlu0 %1377
      %1379 = vrot.lane.b32.xlu0 %v1376, 111
      %v1380 = vpop.permute.xlu0 %1379
      %1381 = vrot.lane.b32.xlu0 %v1371, 111
      %v1382 = vpop.permute.xlu0 %1381
      %v1383 = vsel %vm526, %v1378, %v1380
      %v1384 = vsel %vm526, %v1380, %v1382
      %v1386 = vsel %vm257, %v1373, 0
      %v1388 = vsel %vm261, %v1383, 0
      %v1390 = vsel %vm261, %v1384, 0
      %1392 = vmatprep.subr.mxu0 %v1390
      %1393 = vmatpush1.msra.mxu0 %v1388
      %1394 = vmatprep.subr.mxu0 0.0
      %1395 = vmatpush1.msra.mxu0 0.0
      %1396 = vmatprep.subr.mxu0 0.0
      %1397 = vmatpush1.msra.mxu0 0.0
      %1398 = vmatprep.subr.mxu0 0.0
      %1399 = vmatpush1.msra.mxu0 0.0
      %1400 = vmatprep.subr.mxu0 0.0
      %1401 = vmatpush1.msra.mxu0 0.0
      %1402 = vmatprep.subr.mxu0 0.0
      %1403 = vmatpush1.msra.mxu0 0.0
      %1404 = vmatprep.subr.mxu0 0.0
      %1405 = vmatpush1.msra.mxu0 0.0
      %1406 = vmatprep.subr.mxu0 0.0
      %1407 = vmatpush1.msra.mxu0 0.0
      %1408 = vmatprep.subr.mxu0 0.0
      %1409 = vmatpush1.msra.mxu0 0.0
      %1410 = vmatprep.subr.mxu0 0.0
      %1411 = vmatpush1.msra.mxu0 0.0
      %1412 = vmatprep.subr.mxu0 0.0
      %1413 = vmatpush1.msra.mxu0 0.0
      %1414 = vmatprep.subr.mxu0 0.0
      %1415 = vmatpush1.msra.mxu0 0.0
      %1416 = vmatprep.subr.mxu0 0.0
      %1417 = vmatpush1.msra.mxu0 0.0
      %1418 = vmatprep.subr.mxu0 0.0
      %1419 = vmatpush1.msra.mxu0 0.0
      %1420 = vmatprep.subr.mxu0 0.0
      %1421 = vmatpush1.msra.mxu0 0.0
      %1422 = vmatprep.subr.mxu0 0.0
      %1423 = vmatpush1.msra.mxu0 0.0
      %1424 = vmatprep.subr.mxu0 0.0
      %1425 = vmatpush1.msra.mxu0 0.0
      %1426 = vmatprep.subr.mxu0 0.0
      %1427 = vmatpush1.msra.mxu0 0.0
      %1428 = vmatprep.subr.mxu0 0.0
      %1429 = vmatpush1.msra.mxu0 0.0
      %1430 = vmatprep.subr.mxu0 0.0
      %1431 = vmatpush1.msra.mxu0 0.0
      %1432 = vmatprep.subr.mxu0 0.0
      %1433 = vmatpush1.msra.mxu0 0.0
      %1434 = vmatprep.subr.mxu0 0.0
      %1435 = vmatpush1.msra.mxu0 0.0
      %1436 = vmatprep.subr.mxu0 0.0
      %1437 = vmatpush1.msra.mxu0 0.0
      %1438 = vmatprep.subr.mxu0 0.0
      %1439 = vmatpush1.msra.mxu0 0.0
      %1440 = vmatprep.subr.mxu0 0.0
      %1441 = vmatpush1.msra.mxu0 0.0
      %1442 = vmatprep.subr.mxu0 0.0
      %1443 = vmatpush1.msra.mxu0 0.0
      %1444 = vmatprep.subr.mxu0 0.0
      %1445 = vmatpush1.msra.mxu0 0.0
      %1446 = vmatprep.subr.mxu0 0.0
      %1447 = vmatpush1.msra.mxu0 0.0
      %1448 = vmatprep.subr.mxu0 0.0
      %1449 = vmatpush1.msra.mxu0 0.0
      %1450 = vmatprep.subr.mxu0 0.0
      %1451 = vmatpush1.msra.mxu0 0.0
      %1452 = vmatprep.subr.mxu0 0.0
      %1453 = vmatpush1.msra.mxu0 0.0
      %1454 = vmatprep.subr.mxu0 0.0
      %1455 = vmatpush1.msra.mxu0 0.0
      %1456 = vmatprep.mubr.f32.mxu0 0.0
      %1457 = vmatmul.mubr.f32.gmra.mrb[0].mxu0 %v1386
      %v1458 = vpop.f32.mrb[0].mxu0
      %v1459 = vadd.f32 0.0, %v1458
      %v1460 = vpop.f32.mrb[0].mxu0
      %v1461 = vadd.f32 0.0, %v1460
      %1462 = vdwg.mxu0
      %1463 = vrot.lane.b32.xlu0 %v1370, 127
      %v1464 = vpop.permute.xlu0 %1463
      %1465 = vrot.lane.b32.xlu0 %v1376, 127
      %v1466 = vpop.permute.xlu0 %1465
      %1467 = vrot.lane.b32.xlu0 %v1371, 127
      %v1468 = vpop.permute.xlu0 %1467
      %v1469 = vsel %vm613, %v1464, %v1466
      %v1470 = vsel %vm613, %v1466, %v1468
      %v1472 = vsel %vm257, %v1372, 0
      %v1474 = vsel %vm261, %v1469, 0
      %v1476 = vsel %vm261, %v1470, 0
      %1478 = vmatprep.subr.mxu0 %v1476
      %1479 = vmatpush1.msra.mxu0 %v1474
      %1480 = vmatprep.subr.mxu0 0.0
      %1481 = vmatpush1.msra.mxu0 0.0
      %1482 = vmatprep.subr.mxu0 0.0
      %1483 = vmatpush1.msra.mxu0 0.0
      %1484 = vmatprep.subr.mxu0 0.0
      %1485 = vmatpush1.msra.mxu0 0.0
      %1486 = vmatprep.subr.mxu0 0.0
      %1487 = vmatpush1.msra.mxu0 0.0
      %1488 = vmatprep.subr.mxu0 0.0
      %1489 = vmatpush1.msra.mxu0 0.0
      %1490 = vmatprep.subr.mxu0 0.0
      %1491 = vmatpush1.msra.mxu0 0.0
      %1492 = vmatprep.subr.mxu0 0.0
      %1493 = vmatpush1.msra.mxu0 0.0
      %1494 = vmatprep.subr.mxu0 0.0
      %1495 = vmatpush1.msra.mxu0 0.0
      %1496 = vmatprep.subr.mxu0 0.0
      %1497 = vmatpush1.msra.mxu0 0.0
      %1498 = vmatprep.subr.mxu0 0.0
      %1499 = vmatpush1.msra.mxu0 0.0
      %1500 = vmatprep.subr.mxu0 0.0
      %1501 = vmatpush1.msra.mxu0 0.0
      %1502 = vmatprep.subr.mxu0 0.0
      %1503 = vmatpush1.msra.mxu0 0.0
      %1504 = vmatprep.subr.mxu0 0.0
      %1505 = vmatpush1.msra.mxu0 0.0
      %1506 = vmatprep.subr.mxu0 0.0
      %1507 = vmatpush1.msra.mxu0 0.0
      %1508 = vmatprep.subr.mxu0 0.0
      %1509 = vmatpush1.msra.mxu0 0.0
      %1510 = vmatprep.subr.mxu0 0.0
      %1511 = vmatpush1.msra.mxu0 0.0
      %1512 = vmatprep.subr.mxu0 0.0
      %1513 = vmatpush1.msra.mxu0 0.0
      %1514 = vmatprep.subr.mxu0 0.0
      %1515 = vmatpush1.msra.mxu0 0.0
      %1516 = vmatprep.subr.mxu0 0.0
      %1517 = vmatpush1.msra.mxu0 0.0
      %1518 = vmatprep.subr.mxu0 0.0
      %1519 = vmatpush1.msra.mxu0 0.0
      %1520 = vmatprep.subr.mxu0 0.0
      %1521 = vmatpush1.msra.mxu0 0.0
      %1522 = vmatprep.subr.mxu0 0.0
      %1523 = vmatpush1.msra.mxu0 0.0
      %1524 = vmatprep.subr.mxu0 0.0
      %1525 = vmatpush1.msra.mxu0 0.0
      %1526 = vmatprep.subr.mxu0 0.0
      %1527 = vmatpush1.msra.mxu0 0.0
      %1528 = vmatprep.subr.mxu0 0.0
      %1529 = vmatpush1.msra.mxu0 0.0
      %1530 = vmatprep.subr.mxu0 0.0
      %1531 = vmatpush1.msra.mxu0 0.0
      %1532 = vmatprep.subr.mxu0 0.0
      %1533 = vmatpush1.msra.mxu0 0.0
      %1534 = vmatprep.subr.mxu0 0.0
      %1535 = vmatpush1.msra.mxu0 0.0
      %1536 = vmatprep.subr.mxu0 0.0
      %1537 = vmatpush1.msra.mxu0 0.0
      %1538 = vmatprep.subr.mxu0 0.0
      %1539 = vmatpush1.msra.mxu0 0.0
      %1540 = vmatprep.subr.mxu0 0.0
      %1541 = vmatpush1.msra.mxu0 0.0
      %1542 = vmatprep.mubr.f32.mxu0 0.0
      %1543 = vmatmul.mubr.f32.gmra.mrb[0].mxu0 %v1472
      %v1544 = vpop.f32.mrb[0].mxu0
      %v1545 = vadd.f32 %v1459, %v1544
      %v1546 = vpop.f32.mrb[0].mxu0
      %v1547 = vadd.f32 %v1461, %v1546
      %1548 = vdwg.mxu0
      %v1549 = vld [vmem:[%s1104] sm:$0xff]
      %v1550 = vld [vmem:[%s1104 + $0x8] sm:$0xf]
      %v1551 = vld [vmem:[%s696] sm:$0xf]
      %v1554 = vcombine.high %v1549, %v1549
      %1555 = vrot.lane.b32.xlu0 %v1549, 95
      %v1556 = vpop.permute.xlu0 %1555
      %1557 = vrot.lane.b32.xlu0 %v1554, 95
      %v1558 = vpop.permute.xlu0 %1557
      %1559 = vrot.lane.b32.xlu0 %v1550, 95
      %v1560 = vpop.permute.xlu0 %1559
      %v1561 = vsel %vm707, %v1556, %v1558
      %v1562 = vsel %vm707, %v1558, %v1560
      %v1564 = vsel %vm257, %v1551, 0
      %v1566 = vsel %vm261, %v1561, 0
      %v1568 = vsel %vm261, %v1562, 0
      %1570 = vmatprep.subr.mxu0 %v1568
      %1571 = vmatpush1.msra.mxu0 %v1566
      %1572 = vmatprep.subr.mxu0 0.0
      %1573 = vmatpush1.msra.mxu0 0.0
      %1574 = vmatprep.subr.mxu0 0.0
      %1575 = vmatpush1.msra.mxu0 0.0
      %1576 = vmatprep.subr.mxu0 0.0
      %1577 = vmatpush1.msra.mxu0 0.0
      %1578 = vmatprep.subr.mxu0 0.0
      %1579 = vmatpush1.msra.mxu0 0.0
      %1580 = vmatprep.subr.mxu0 0.0
      %1581 = vmatpush1.msra.mxu0 0.0
      %1582 = vmatprep.subr.mxu0 0.0
      %1583 = vmatpush1.msra.mxu0 0.0
      %1584 = vmatprep.subr.mxu0 0.0
      %1585 = vmatpush1.msra.mxu0 0.0
      %1586 = vmatprep.subr.mxu0 0.0
      %1587 = vmatpush1.msra.mxu0 0.0
      %1588 = vmatprep.subr.mxu0 0.0
      %1589 = vmatpush1.msra.mxu0 0.0
      %1590 = vmatprep.subr.mxu0 0.0
      %1591 = vmatpush1.msra.mxu0 0.0
      %1592 = vmatprep.subr.mxu0 0.0
      %1593 = vmatpush1.msra.mxu0 0.0
      %1594 = vmatprep.subr.mxu0 0.0
      %1595 = vmatpush1.msra.mxu0 0.0
      %1596 = vmatprep.subr.mxu0 0.0
      %1597 = vmatpush1.msra.mxu0 0.0
      %1598 = vmatprep.subr.mxu0 0.0
      %1599 = vmatpush1.msra.mxu0 0.0
      %1600 = vmatprep.subr.mxu0 0.0
      %1601 = vmatpush1.msra.mxu0 0.0
      %1602 = vmatprep.subr.mxu0 0.0
      %1603 = vmatpush1.msra.mxu0 0.0
      %1604 = vmatprep.subr.mxu0 0.0
      %1605 = vmatpush1.msra.mxu0 0.0
      %1606 = vmatprep.subr.mxu0 0.0
      %1607 = vmatpush1.msra.mxu0 0.0
      %1608 = vmatprep.subr.mxu0 0.0
      %1609 = vmatpush1.msra.mxu0 0.0
      %1610 = vmatprep.subr.mxu0 0.0
      %1611 = vmatpush1.msra.mxu0 0.0
      %1612 = vmatprep.subr.mxu0 0.0
      %1613 = vmatpush1.msra.mxu0 0.0
      %1614 = vmatprep.subr.mxu0 0.0
      %1615 = vmatpush1.msra.mxu0 0.0
      %1616 = vmatprep.subr.mxu0 0.0
      %1617 = vmatpush1.msra.mxu0 0.0
      %1618 = vmatprep.subr.mxu0 0.0
      %1619 = vmatpush1.msra.mxu0 0.0
      %1620 = vmatprep.subr.mxu0 0.0
      %1621 = vmatpush1.msra.mxu0 0.0
      %1622 = vmatprep.subr.mxu0 0.0
      %1623 = vmatpush1.msra.mxu0 0.0
      %1624 = vmatprep.subr.mxu0 0.0
      %1625 = vmatpush1.msra.mxu0 0.0
      %1626 = vmatprep.subr.mxu0 0.0
      %1627 = vmatpush1.msra.mxu0 0.0
      %1628 = vmatprep.subr.mxu0 0.0
      %1629 = vmatpush1.msra.mxu0 0.0
      %1630 = vmatprep.subr.mxu0 0.0
      %1631 = vmatpush1.msra.mxu0 0.0
      %1632 = vmatprep.subr.mxu0 0.0
      %1633 = vmatpush1.msra.mxu0 0.0
      %1634 = vmatprep.mubr.f32.mxu0 0.0
      %1635 = vmatmul.mubr.f32.gmra.mrb[0].mxu0 %v1564
      %v1636 = vpop.f32.mrb[0].mxu0
      %v1637 = vadd.f32 0.0, %v1636
      %v1638 = vpop.f32.mrb[0].mxu0
      %v1639 = vadd.f32 0.0, %v1638
      %1640 = vdwg.mxu0
      %v1641 = vadd.f32 %v1545, %v1637
      %v1642 = vadd.f32 %v1547, %v1639
      %v1643 = vld [vmem:[%s1104] sm:$0xff]
      %v1644 = vld [vmem:[%s1104 + $0x8] sm:$0xf]
      %v1645 = vld [vmem:[%s792] sm:$0xf]
      %v1646 = vld [vmem:[%s794] sm:$0xf]
      %v1649 = vcombine.high %v1643, %v1643
      %1650 = vrot.lane.b32.xlu0 %v1643, 110
      %v1651 = vpop.permute.xlu0 %1650
      %1652 = vrot.lane.b32.xlu0 %v1649, 110
      %v1653 = vpop.permute.xlu0 %1652
      %1654 = vrot.lane.b32.xlu0 %v1644, 110
      %v1655 = vpop.permute.xlu0 %1654
      %v1656 = vsel %vm805, %v1651, %v1653
      %v1657 = vsel %vm805, %v1653, %v1655
      %v1659 = vsel %vm257, %v1646, 0
      %v1661 = vsel %vm261, %v1656, 0
      %v1663 = vsel %vm261, %v1657, 0
      %1665 = vmatprep.subr.mxu0 %v1663
      %1666 = vmatpush1.msra.mxu0 %v1661
      %1667 = vmatprep.subr.mxu0 0.0
      %1668 = vmatpush1.msra.mxu0 0.0
      %1669 = vmatprep.subr.mxu0 0.0
      %1670 = vmatpush1.msra.mxu0 0.0
      %1671 = vmatprep.subr.mxu0 0.0
      %1672 = vmatpush1.msra.mxu0 0.0
      %1673 = vmatprep.subr.mxu0 0.0
      %1674 = vmatpush1.msra.mxu0 0.0
      %1675 = vmatprep.subr.mxu0 0.0
      %1676 = vmatpush1.msra.mxu0 0.0
      %1677 = vmatprep.subr.mxu0 0.0
      %1678 = vmatpush1.msra.mxu0 0.0
      %1679 = vmatprep.subr.mxu0 0.0
      %1680 = vmatpush1.msra.mxu0 0.0
      %1681 = vmatprep.subr.mxu0 0.0
      %1682 = vmatpush1.msra.mxu0 0.0
      %1683 = vmatprep.subr.mxu0 0.0
      %1684 = vmatpush1.msra.mxu0 0.0
      %1685 = vmatprep.subr.mxu0 0.0
      %1686 = vmatpush1.msra.mxu0 0.0
      %1687 = vmatprep.subr.mxu0 0.0
      %1688 = vmatpush1.msra.mxu0 0.0
      %1689 = vmatprep.subr.mxu0 0.0
      %1690 = vmatpush1.msra.mxu0 0.0
      %1691 = vmatprep.subr.mxu0 0.0
      %1692 = vmatpush1.msra.mxu0 0.0
      %1693 = vmatprep.subr.mxu0 0.0
      %1694 = vmatpush1.msra.mxu0 0.0
      %1695 = vmatprep.subr.mxu0 0.0
      %1696 = vmatpush1.msra.mxu0 0.0
      %1697 = vmatprep.subr.mxu0 0.0
      %1698 = vmatpush1.msra.mxu0 0.0
      %1699 = vmatprep.subr.mxu0 0.0
      %1700 = vmatpush1.msra.mxu0 0.0
      %1701 = vmatprep.subr.mxu0 0.0
      %1702 = vmatpush1.msra.mxu0 0.0
      %1703 = vmatprep.subr.mxu0 0.0
      %1704 = vmatpush1.msra.mxu0 0.0
      %1705 = vmatprep.subr.mxu0 0.0
      %1706 = vmatpush1.msra.mxu0 0.0
      %1707 = vmatprep.subr.mxu0 0.0
      %1708 = vmatpush1.msra.mxu0 0.0
      %1709 = vmatprep.subr.mxu0 0.0
      %1710 = vmatpush1.msra.mxu0 0.0
      %1711 = vmatprep.subr.mxu0 0.0
      %1712 = vmatpush1.msra.mxu0 0.0
      %1713 = vmatprep.subr.mxu0 0.0
      %1714 = vmatpush1.msra.mxu0 0.0
      %1715 = vmatprep.subr.mxu0 0.0
      %1716 = vmatpush1.msra.mxu0 0.0
      %1717 = vmatprep.subr.mxu0 0.0
      %1718 = vmatpush1.msra.mxu0 0.0
      %1719 = vmatprep.subr.mxu0 0.0
      %1720 = vmatpush1.msra.mxu0 0.0
      %1721 = vmatprep.subr.mxu0 0.0
      %1722 = vmatpush1.msra.mxu0 0.0
      %1723 = vmatprep.subr.mxu0 0.0
      %1724 = vmatpush1.msra.mxu0 0.0
      %1725 = vmatprep.subr.mxu0 0.0
      %1726 = vmatpush1.msra.mxu0 0.0
      %1727 = vmatprep.subr.mxu0 0.0
      %1728 = vmatpush1.msra.mxu0 0.0
      %1729 = vmatprep.mubr.f32.mxu0 0.0
      %1730 = vmatmul.mubr.f32.gmra.mrb[0].mxu0 %v1659
      %v1731 = vpop.f32.mrb[0].mxu0
      %v1732 = vadd.f32 0.0, %v1731
      %v1733 = vpop.f32.mrb[0].mxu0
      %v1734 = vadd.f32 0.0, %v1733
      %1735 = vdwg.mxu0
      %1736 = vrot.lane.b32.xlu0 %v1643, 126
      %v1737 = vpop.permute.xlu0 %1736
      %1738 = vrot.lane.b32.xlu0 %v1649, 126
      %v1739 = vpop.permute.xlu0 %1738
      %1740 = vrot.lane.b32.xlu0 %v1644, 126
      %v1741 = vpop.permute.xlu0 %1740
      %v1742 = vsel %vm892, %v1737, %v1739
      %v1743 = vsel %vm892, %v1739, %v1741
      %v1745 = vsel %vm257, %v1645, 0
      %v1747 = vsel %vm261, %v1742, 0
      %v1749 = vsel %vm261, %v1743, 0
      %1751 = vmatprep.subr.mxu0 %v1749
      %1752 = vmatpush1.msra.mxu0 %v1747
      %1753 = vmatprep.subr.mxu0 0.0
      %1754 = vmatpush1.msra.mxu0 0.0
      %1755 = vmatprep.subr.mxu0 0.0
      %1756 = vmatpush1.msra.mxu0 0.0
      %1757 = vmatprep.subr.mxu0 0.0
      %1758 = vmatpush1.msra.mxu0 0.0
      %1759 = vmatprep.subr.mxu0 0.0
      %1760 = vmatpush1.msra.mxu0 0.0
      %1761 = vmatprep.subr.mxu0 0.0
      %1762 = vmatpush1.msra.mxu0 0.0
      %1763 = vmatprep.subr.mxu0 0.0
      %1764 = vmatpush1.msra.mxu0 0.0
      %1765 = vmatprep.subr.mxu0 0.0
      %1766 = vmatpush1.msra.mxu0 0.0
      %1767 = vmatprep.subr.mxu0 0.0
      %1768 = vmatpush1.msra.mxu0 0.0
      %1769 = vmatprep.subr.mxu0 0.0
      %1770 = vmatpush1.msra.mxu0 0.0
      %1771 = vmatprep.subr.mxu0 0.0
      %1772 = vmatpush1.msra.mxu0 0.0
      %1773 = vmatprep.subr.mxu0 0.0
      %1774 = vmatpush1.msra.mxu0 0.0
      %1775 = vmatprep.subr.mxu0 0.0
      %1776 = vmatpush1.msra.mxu0 0.0
      %1777 = vmatprep.subr.mxu0 0.0
      %1778 = vmatpush1.msra.mxu0 0.0
      %1779 = vmatprep.subr.mxu0 0.0
      %1780 = vmatpush1.msra.mxu0 0.0
      %1781 = vmatprep.subr.mxu0 0.0
      %1782 = vmatpush1.msra.mxu0 0.0
      %1783 = vmatprep.subr.mxu0 0.0
      %1784 = vmatpush1.msra.mxu0 0.0
      %1785 = vmatprep.subr.mxu0 0.0
      %1786 = vmatpush1.msra.mxu0 0.0
      %1787 = vmatprep.subr.mxu0 0.0
      %1788 = vmatpush1.msra.mxu0 0.0
      %1789 = vmatprep.subr.mxu0 0.0
      %1790 = vmatpush1.msra.mxu0 0.0
      %1791 = vmatprep.subr.mxu0 0.0
      %1792 = vmatpush1.msra.mxu0 0.0
      %1793 = vmatprep.subr.mxu0 0.0
      %1794 = vmatpush1.msra.mxu0 0.0
      %1795 = vmatprep.subr.mxu0 0.0
      %1796 = vmatpush1.msra.mxu0 0.0
      %1797 = vmatprep.subr.mxu0 0.0
      %1798 = vmatpush1.msra.mxu0 0.0
      %1799 = vmatprep.subr.mxu0 0.0
      %1800 = vmatpush1.msra.mxu0 0.0
      %1801 = vmatprep.subr.mxu0 0.0
      %1802 = vmatpush1.msra.mxu0 0.0
      %1803 = vmatprep.subr.mxu0 0.0
      %1804 = vmatpush1.msra.mxu0 0.0
      %1805 = vmatprep.subr.mxu0 0.0
      %1806 = vmatpush1.msra.mxu0 0.0
      %1807 = vmatprep.subr.mxu0 0.0
      %1808 = vmatpush1.msra.mxu0 0.0
      %1809 = vmatprep.subr.mxu0 0.0
      %1810 = vmatpush1.msra.mxu0 0.0
      %1811 = vmatprep.subr.mxu0 0.0
      %1812 = vmatpush1.msra.mxu0 0.0
      %1813 = vmatprep.subr.mxu0 0.0
      %1814 = vmatpush1.msra.mxu0 0.0
      %1815 = vmatprep.mubr.f32.mxu0 0.0
      %1816 = vmatmul.mubr.f32.gmra.mrb[0].mxu0 %v1745
      %v1817 = vpop.f32.mrb[0].mxu0
      %v1818 = vadd.f32 %v1732, %v1817
      %v1819 = vpop.f32.mrb[0].mxu0
      %v1820 = vadd.f32 %v1734, %v1819
      %1821 = vdwg.mxu0
      %v1822 = vld [vmem:[%s1104] sm:$0xff]
      %v1823 = vld [vmem:[%s1104 + $0x8] sm:$0xf]
      %v1824 = vld [vmem:[%s975] sm:$0xf]
      %v1827 = vcombine.high %v1822, %v1822
      %1828 = vrot.lane.b32.xlu0 %v1822, 94
      %v1829 = vpop.permute.xlu0 %1828
      %1830 = vrot.lane.b32.xlu0 %v1827, 94
      %v1831 = vpop.permute.xlu0 %1830
      %1832 = vrot.lane.b32.xlu0 %v1823, 94
      %v1833 = vpop.permute.xlu0 %1832
      %v1834 = vsel %vm986, %v1829, %v1831
      %v1835 = vsel %vm986, %v1831, %v1833
      %v1837 = vsel %vm257, %v1824, 0
      %v1839 = vsel %vm261, %v1834, 0
      %v1841 = vsel %vm261, %v1835, 0
      %1843 = vmatprep.subr.mxu0 %v1841
      %1844 = vmatpush1.msra.mxu0 %v1839
      %1845 = vmatprep.subr.mxu0 0.0
      %1846 = vmatpush1.msra.mxu0 0.0
      %1847 = vmatprep.subr.mxu0 0.0
      %1848 = vmatpush1.msra.mxu0 0.0
      %1849 = vmatprep.subr.mxu0 0.0
      %1850 = vmatpush1.msra.mxu0 0.0
      %1851 = vmatprep.subr.mxu0 0.0
      %1852 = vmatpush1.msra.mxu0 0.0
      %1853 = vmatprep.subr.mxu0 0.0
      %1854 = vmatpush1.msra.mxu0 0.0
      %1855 = vmatprep.subr.mxu0 0.0
      %1856 = vmatpush1.msra.mxu0 0.0
      %1857 = vmatprep.subr.mxu0 0.0
      %1858 = vmatpush1.msra.mxu0 0.0
      %1859 = vmatprep.subr.mxu0 0.0
      %1860 = vmatpush1.msra.mxu0 0.0
      %1861 = vmatprep.subr.mxu0 0.0
      %1862 = vmatpush1.msra.mxu0 0.0
      %1863 = vmatprep.subr.mxu0 0.0
      %1864 = vmatpush1.msra.mxu0 0.0
      %1865 = vmatprep.subr.mxu0 0.0
      %1866 = vmatpush1.msra.mxu0 0.0
      %1867 = vmatprep.subr.mxu0 0.0
      %1868 = vmatpush1.msra.mxu0 0.0
      %1869 = vmatprep.subr.mxu0 0.0
      %1870 = vmatpush1.msra.mxu0 0.0
      %1871 = vmatprep.subr.mxu0 0.0
      %1872 = vmatpush1.msra.mxu0 0.0
      %1873 = vmatprep.subr.mxu0 0.0
      %1874 = vmatpush1.msra.mxu0 0.0
      %1875 = vmatprep.subr.mxu0 0.0
      %1876 = vmatpush1.msra.mxu0 0.0
      %1877 = vmatprep.subr.mxu0 0.0
      %1878 = vmatpush1.msra.mxu0 0.0
      %1879 = vmatprep.subr.mxu0 0.0
      %1880 = vmatpush1.msra.mxu0 0.0
      %1881 = vmatprep.subr.mxu0 0.0
      %1882 = vmatpush1.msra.mxu0 0.0
      %1883 = vmatprep.subr.mxu0 0.0
      %1884 = vmatpush1.msra.mxu0 0.0
      %1885 = vmatprep.subr.mxu0 0.0
      %1886 = vmatpush1.msra.mxu0 0.0
      %1887 = vmatprep.subr.mxu0 0.0
      %1888 = vmatpush1.msra.mxu0 0.0
      %1889 = vmatprep.subr.mxu0 0.0
      %1890 = vmatpush1.msra.mxu0 0.0
      %1891 = vmatprep.subr.mxu0 0.0
      %1892 = vmatpush1.msra.mxu0 0.0
      %1893 = vmatprep.subr.mxu0 0.0
      %1894 = vmatpush1.msra.mxu0 0.0
      %1895 = vmatprep.subr.mxu0 0.0
      %1896 = vmatpush1.msra.mxu0 0.0
      %1897 = vmatprep.subr.mxu0 0.0
      %1898 = vmatpush1.msra.mxu0 0.0
      %1899 = vmatprep.subr.mxu0 0.0
      %1900 = vmatpush1.msra.mxu0 0.0
      %1901 = vmatprep.subr.mxu0 0.0
      %1902 = vmatpush1.msra.mxu0 0.0
      %1903 = vmatprep.subr.mxu0 0.0
      %1904 = vmatpush1.msra.mxu0 0.0
      %1905 = vmatprep.subr.mxu0 0.0
      %1906 = vmatpush1.msra.mxu0 0.0
      %1907 = vmatprep.mubr.f32.mxu0 0.0
      %1908 = vmatmul.mubr.f32.gmra.mrb[0].mxu0 %v1837
      %v1909 = vpop.f32.mrb[0].mxu0
      %v1910 = vadd.f32 0.0, %v1909
      %v1911 = vpop.f32.mrb[0].mxu0
      %v1912 = vadd.f32 0.0, %v1911
      %1913 = vdwg.mxu0
      %v1914 = vadd.f32 %v1818, %v1910
      %v1915 = vadd.f32 %v1820, %v1912
      %v1916 = vsel %vm1071, %v1368, 0.0
      %v1917 = vsel %vm1072, %v1369, 0.0
      %v1918 = vadd.f32 %v1641, %v1916
      %v1919 = vadd.f32 %v1642, %v1917
      %v1920 = vsel %vm1079, %v1914, 0.0
      %v1921 = vsel %vm1080, %v1915, 0.0
      %v1922 = vadd.f32 %v1918, %v1920
      %v1923 = vadd.f32 %v1919, %v1921
      %v1924 = vadd.f32 %v1922, %v1088
      %v1925 = vadd.f32 %v1923, %v1088
      %vm1926 = vcmp.ge.f32.partialorder %v1924, 0.0
      %vm1927 = vcmp.ge.f32.partialorder %v1925, 0.0
      %v1928 = vmul.f32 %v1094, %v1924
      %v1929 = vmul.f32 %v1094, %v1925
      %v1930 = vsel %vm1926, %v1924, %v1928
      %v1931 = vsel %vm1927, %v1925, %v1929
      %v1934 = vcombine.low %v1930, %v1931
      %s1936 = scalar_lea.vmem %s205, 8
      %1937 = vst [vmem:[%s1936] sm:$0xff] %v1934
      %s1938 = scalar_lea.vmem %s198, 24
      %v1939 = vld [vmem:[%s1938] sm:$0xff]
      %v1940 = vld [vmem:[%s1] sm:$0xf]
      %v1941 = vld [vmem:[%s1938 + $0x8] sm:$0xf]
      %v1942 = vld [vmem:[%s243] sm:$0xf]
      %v1945 = vcombine.high %v1939, %v1939
      %1946 = vrot.lane.b32.xlu0 %v1939, 112
      %v1947 = vpop.permute.xlu0 %1946
      %1948 = vrot.lane.b32.xlu0 %v1945, 112
      %v1949 = vpop.permute.xlu0 %1948
      %1950 = vrot.lane.b32.xlu0 %v1941, 112
      %v1951 = vpop.permute.xlu0 %1950
      %v1952 = vsel %vm254, %v1947, %v1949
      %v1953 = vsel %vm254, %v1949, %v1951
      %v1955 = vsel %vm257, %v1942, 0
      %v1957 = vsel %vm261, %v1952, 0
      %v1959 = vsel %vm261, %v1953, 0
      %1961 = vmatprep.subr.mxu0 %v1959
      %1962 = vmatpush1.msra.mxu0 %v1957
      %1963 = vmatprep.subr.mxu0 0.0
      %1964 = vmatpush1.msra.mxu0 0.0
      %1965 = vmatprep.subr.mxu0 0.0
      %1966 = vmatpush1.msra.mxu0 0.0
      %1967 = vmatprep.subr.mxu0 0.0
      %1968 = vmatpush1.msra.mxu0 0.0
      %1969 = vmatprep.subr.mxu0 0.0
      %1970 = vmatpush1.msra.mxu0 0.0
      %1971 = vmatprep.subr.mxu0 0.0
      %1972 = vmatpush1.msra.mxu0 0.0
      %1973 = vmatprep.subr.mxu0 0.0
      %1974 = vmatpush1.msra.mxu0 0.0
      %1975 = vmatprep.subr.mxu0 0.0
      %1976 = vmatpush1.msra.mxu0 0.0
      %1977 = vmatprep.subr.mxu0 0.0
      %1978 = vmatpush1.msra.mxu0 0.0
      %1979 = vmatprep.subr.mxu0 0.0
      %1980 = vmatpush1.msra.mxu0 0.0
      %1981 = vmatprep.subr.mxu0 0.0
      %1982 = vmatpush1.msra.mxu0 0.0
      %1983 = vmatprep.subr.mxu0 0.0
      %1984 = vmatpush1.msra.mxu0 0.0
      %1985 = vmatprep.subr.mxu0 0.0
      %1986 = vmatpush1.msra.mxu0 0.0
      %1987 = vmatprep.subr.mxu0 0.0
      %1988 = vmatpush1.msra.mxu0 0.0
      %1989 = vmatprep.subr.mxu0 0.0
      %1990 = vmatpush1.msra.mxu0 0.0
      %1991 = vmatprep.subr.mxu0 0.0
      %1992 = vmatpush1.msra.mxu0 0.0
      %1993 = vmatprep.subr.mxu0 0.0
      %1994 = vmatpush1.msra.mxu0 0.0
      %1995 = vmatprep.subr.mxu0 0.0
      %1996 = vmatpush1.msra.mxu0 0.0
      %1997 = vmatprep.subr.mxu0 0.0
      %1998 = vmatpush1.msra.mxu0 0.0
      %1999 = vmatprep.subr.mxu0 0.0
      %2000 = vmatpush1.msra.mxu0 0.0
      %2001 = vmatprep.subr.mxu0 0.0
      %2002 = vmatpush1.msra.mxu0 0.0
      %2003 = vmatprep.subr.mxu0 0.0
      %2004 = vmatpush1.msra.mxu0 0.0
      %2005 = vmatprep.subr.mxu0 0.0
      %2006 = vmatpush1.msra.mxu0 0.0
      %2007 = vmatprep.subr.mxu0 0.0
      %2008 = vmatpush1.msra.mxu0 0.0
      %2009 = vmatprep.subr.mxu0 0.0
      %2010 = vmatpush1.msra.mxu0 0.0
      %2011 = vmatprep.subr.mxu0 0.0
      %2012 = vmatpush1.msra.mxu0 0.0
      %2013 = vmatprep.subr.mxu0 0.0
      %2014 = vmatpush1.msra.mxu0 0.0
      %2015 = vmatprep.subr.mxu0 0.0
      %2016 = vmatpush1.msra.mxu0 0.0
      %2017 = vmatprep.subr.mxu0 0.0
      %2018 = vmatpush1.msra.mxu0 0.0
      %2019 = vmatprep.subr.mxu0 0.0
      %2020 = vmatpush1.msra.mxu0 0.0
      %2021 = vmatprep.subr.mxu0 0.0
      %2022 = vmatpush1.msra.mxu0 0.0
      %2023 = vmatprep.subr.mxu0 0.0
      %2024 = vmatpush1.msra.mxu0 0.0
      %2025 = vmatprep.mubr.f32.mxu0 0.0
      %2026 = vmatmul.mubr.f32.gmra.mrb[0].mxu0 %v1955
      %v2027 = vpop.f32.mrb[0].mxu0
      %v2028 = vadd.f32 0.0, %v2027
      %v2029 = vpop.f32.mrb[0].mxu0
      %v2030 = vadd.f32 0.0, %v2029
      %2031 = vdwg.mxu0
      %v2033 = vsel %vm257, %v1940, 0
      %v2035 = vsel %vm261, %v1939, 0
      %v2037 = vsel %vm261, %v1945, 0
      %2039 = vmatprep.subr.mxu0 %v2037
      %2040 = vmatpush1.msra.mxu0 %v2035
      %2041 = vmatprep.subr.mxu0 0.0
      %2042 = vmatpush1.msra.mxu0 0.0
      %2043 = vmatprep.subr.mxu0 0.0
      %2044 = vmatpush1.msra.mxu0 0.0
      %2045 = vmatprep.subr.mxu0 0.0
      %2046 = vmatpush1.msra.mxu0 0.0
      %2047 = vmatprep.subr.mxu0 0.0
      %2048 = vmatpush1.msra.mxu0 0.0
      %2049 = vmatprep.subr.mxu0 0.0
      %2050 = vmatpush1.msra.mxu0 0.0
      %2051 = vmatprep.subr.mxu0 0.0
      %2052 = vmatpush1.msra.mxu0 0.0
      %2053 = vmatprep.subr.mxu0 0.0
      %2054 = vmatpush1.msra.mxu0 0.0
      %2055 = vmatprep.subr.mxu0 0.0
      %2056 = vmatpush1.msra.mxu0 0.0
      %2057 = vmatprep.subr.mxu0 0.0
      %2058 = vmatpush1.msra.mxu0 0.0
      %2059 = vmatprep.subr.mxu0 0.0
      %2060 = vmatpush1.msra.mxu0 0.0
      %2061 = vmatprep.subr.mxu0 0.0
      %2062 = vmatpush1.msra.mxu0 0.0
      %2063 = vmatprep.subr.mxu0 0.0
      %2064 = vmatpush1.msra.mxu0 0.0
      %2065 = vmatprep.subr.mxu0 0.0
      %2066 = vmatpush1.msra.mxu0 0.0
      %2067 = vmatprep.subr.mxu0 0.0
      %2068 = vmatpush1.msra.mxu0 0.0
      %2069 = vmatprep.subr.mxu0 0.0
      %2070 = vmatpush1.msra.mxu0 0.0
      %2071 = vmatprep.subr.mxu0 0.0
      %2072 = vmatpush1.msra.mxu0 0.0
      %2073 = vmatprep.subr.mxu0 0.0
      %2074 = vmatpush1.msra.mxu0 0.0
      %2075 = vmatprep.subr.mxu0 0.0
      %2076 = vmatpush1.msra.mxu0 0.0
      %2077 = vmatprep.subr.mxu0 0.0
      %2078 = vmatpush1.msra.mxu0 0.0
      %2079 = vmatprep.subr.mxu0 0.0
      %2080 = vmatpush1.msra.mxu0 0.0
      %2081 = vmatprep.subr.mxu0 0.0
      %2082 = vmatpush1.msra.mxu0 0.0
      %2083 = vmatprep.subr.mxu0 0.0
      %2084 = vmatpush1.msra.mxu0 0.0
      %2085 = vmatprep.subr.mxu0 0.0
      %2086 = vmatpush1.msra.mxu0 0.0
      %2087 = vmatprep.subr.mxu0 0.0
      %2088 = vmatpush1.msra.mxu0 0.0
      %2089 = vmatprep.subr.mxu0 0.0
      %2090 = vmatpush1.msra.mxu0 0.0
      %2091 = vmatprep.subr.mxu0 0.0
      %2092 = vmatpush1.msra.mxu0 0.0
      %2093 = vmatprep.subr.mxu0 0.0
      %2094 = vmatpush1.msra.mxu0 0.0
      %2095 = vmatprep.subr.mxu0 0.0
      %2096 = vmatpush1.msra.mxu0 0.0
      %2097 = vmatprep.subr.mxu0 0.0
      %2098 = vmatpush1.msra.mxu0 0.0
      %2099 = vmatprep.subr.mxu0 0.0
      %2100 = vmatpush1.msra.mxu0 0.0
      %2101 = vmatprep.subr.mxu0 0.0
      %2102 = vmatpush1.msra.mxu0 0.0
      %2103 = vmatprep.mubr.f32.mxu0 0.0
      %2104 = vmatmul.mubr.f32.gmra.mrb[0].mxu0 %v2033
      %v2105 = vpop.f32.mrb[0].mxu0
      %v2106 = vadd.f32 %v2028, %v2105
      %v2107 = vpop.f32.mrb[0].mxu0
      %v2108 = vadd.f32 %v2030, %v2107
      %2109 = vdwg.mxu0
      %v2110 = vld [vmem:[%s1938] sm:$0xff]
      %v2111 = vld [vmem:[%s1938 + $0x8] sm:$0xf]
      %v2112 = vld [vmem:[%s417] sm:$0xf]
      %v2115 = vcombine.high %v2110, %v2110
      %2116 = vrot.lane.b32.xlu0 %v2110, 96
      %v2117 = vpop.permute.xlu0 %2116
      %2118 = vrot.lane.b32.xlu0 %v2115, 96
      %v2119 = vpop.permute.xlu0 %2118
      %2120 = vrot.lane.b32.xlu0 %v2111, 96
      %v2121 = vpop.permute.xlu0 %2120
      %v2122 = vsel %vm428, %v2117, %v2119
      %v2123 = vsel %vm428, %v2119, %v2121
      %v2125 = vsel %vm257, %v2112, 0
      %v2127 = vsel %vm261, %v2122, 0
      %v2129 = vsel %vm261, %v2123, 0
      %2131 = vmatprep.subr.mxu0 %v2129
      %2132 = vmatpush1.msra.mxu0 %v2127
      %2133 = vmatprep.subr.mxu0 0.0
      %2134 = vmatpush1.msra.mxu0 0.0
      %2135 = vmatprep.subr.mxu0 0.0
      %2136 = vmatpush1.msra.mxu0 0.0
      %2137 = vmatprep.subr.mxu0 0.0
      %2138 = vmatpush1.msra.mxu0 0.0
      %2139 = vmatprep.subr.mxu0 0.0
      %2140 = vmatpush1.msra.mxu0 0.0
      %2141 = vmatprep.subr.mxu0 0.0
      %2142 = vmatpush1.msra.mxu0 0.0
      %2143 = vmatprep.subr.mxu0 0.0
      %2144 = vmatpush1.msra.mxu0 0.0
      %2145 = vmatprep.subr.mxu0 0.0
      %2146 = vmatpush1.msra.mxu0 0.0
      %2147 = vmatprep.subr.mxu0 0.0
      %2148 = vmatpush1.msra.mxu0 0.0
      %2149 = vmatprep.subr.mxu0 0.0
      %2150 = vmatpush1.msra.mxu0 0.0
      %2151 = vmatprep.subr.mxu0 0.0
      %2152 = vmatpush1.msra.mxu0 0.0
      %2153 = vmatprep.subr.mxu0 0.0
      %2154 = vmatpush1.msra.mxu0 0.0
      %2155 = vmatprep.subr.mxu0 0.0
      %2156 = vmatpush1.msra.mxu0 0.0
      %2157 = vmatprep.subr.mxu0 0.0
      %2158 = vmatpush1.msra.mxu0 0.0
      %2159 = vmatprep.subr.mxu0 0.0
      %2160 = vmatpush1.msra.mxu0 0.0
      %2161 = vmatprep.subr.mxu0 0.0
      %2162 = vmatpush1.msra.mxu0 0.0
      %2163 = vmatprep.subr.mxu0 0.0
      %2164 = vmatpush1.msra.mxu0 0.0
      %2165 = vmatprep.subr.mxu0 0.0
      %2166 = vmatpush1.msra.mxu0 0.0
      %2167 = vmatprep.subr.mxu0 0.0
      %2168 = vmatpush1.msra.mxu0 0.0
      %2169 = vmatprep.subr.mxu0 0.0
      %2170 = vmatpush1.msra.mxu0 0.0
      %2171 = vmatprep.subr.mxu0 0.0
      %2172 = vmatpush1.msra.mxu0 0.0
      %2173 = vmatprep.subr.mxu0 0.0
      %2174 = vmatpush1.msra.mxu0 0.0
      %2175 = vmatprep.subr.mxu0 0.0
      %2176 = vmatpush1.msra.mxu0 0.0
      %2177 = vmatprep.subr.mxu0 0.0
      %2178 = vmatpush1.msra.mxu0 0.0
      %2179 = vmatprep.subr.mxu0 0.0
      %2180 = vmatpush1.msra.mxu0 0.0
      %2181 = vmatprep.subr.mxu0 0.0
      %2182 = vmatpush1.msra.mxu0 0.0
      %2183 = vmatprep.subr.mxu0 0.0
      %2184 = vmatpush1.msra.mxu0 0.0
      %2185 = vmatprep.subr.mxu0 0.0
      %2186 = vmatpush1.msra.mxu0 0.0
      %2187 = vmatprep.subr.mxu0 0.0
      %2188 = vmatpush1.msra.mxu0 0.0
      %2189 = vmatprep.subr.mxu0 0.0
      %2190 = vmatpush1.msra.mxu0 0.0
      %2191 = vmatprep.subr.mxu0 0.0
      %2192 = vmatpush1.msra.mxu0 0.0
      %2193 = vmatprep.subr.mxu0 0.0
      %2194 = vmatpush1.msra.mxu0 0.0
      %2195 = vmatprep.mubr.f32.mxu0 0.0
      %2196 = vmatmul.mubr.f32.gmra.mrb[0].mxu0 %v2125
      %v2197 = vpop.f32.mrb[0].mxu0
      %v2198 = vadd.f32 0.0, %v2197
      %v2199 = vpop.f32.mrb[0].mxu0
      %v2200 = vadd.f32 0.0, %v2199
      %2201 = vdwg.mxu0
      %v2202 = vadd.f32 %v2106, %v2198
      %v2203 = vadd.f32 %v2108, %v2200
      %v2204 = vld [vmem:[%s1938] sm:$0xff]
      %v2205 = vld [vmem:[%s1938 + $0x8] sm:$0xf]
      %v2206 = vld [vmem:[%s513] sm:$0xf]
      %v2207 = vld [vmem:[%s515] sm:$0xf]
      %v2210 = vcombine.high %v2204, %v2204
      %2211 = vrot.lane.b32.xlu0 %v2204, 111
      %v2212 = vpop.permute.xlu0 %2211
      %2213 = vrot.lane.b32.xlu0 %v2210, 111
      %v2214 = vpop.permute.xlu0 %2213
      %2215 = vrot.lane.b32.xlu0 %v2205, 111
      %v2216 = vpop.permute.xlu0 %2215
      %v2217 = vsel %vm526, %v2212, %v2214
      %v2218 = vsel %vm526, %v2214, %v2216
      %v2220 = vsel %vm257, %v2207, 0
      %v2222 = vsel %vm261, %v2217, 0
      %v2224 = vsel %vm261, %v2218, 0
      %2226 = vmatprep.subr.mxu0 %v2224
      %2227 = vmatpush1.msra.mxu0 %v2222
      %2228 = vmatprep.subr.mxu0 0.0
      %2229 = vmatpush1.msra.mxu0 0.0
      %2230 = vmatprep.subr.mxu0 0.0
      %2231 = vmatpush1.msra.mxu0 0.0
      %2232 = vmatprep.subr.mxu0 0.0
      %2233 = vmatpush1.msra.mxu0 0.0
      %2234 = vmatprep.subr.mxu0 0.0
      %2235 = vmatpush1.msra.mxu0 0.0
      %2236 = vmatprep.subr.mxu0 0.0
      %2237 = vmatpush1.msra.mxu0 0.0
      %2238 = vmatprep.subr.mxu0 0.0
      %2239 = vmatpush1.msra.mxu0 0.0
      %2240 = vmatprep.subr.mxu0 0.0
      %2241 = vmatpush1.msra.mxu0 0.0
      %2242 = vmatprep.subr.mxu0 0.0
      %2243 = vmatpush1.msra.mxu0 0.0
      %2244 = vmatprep.subr.mxu0 0.0
      %2245 = vmatpush1.msra.mxu0 0.0
      %2246 = vmatprep.subr.mxu0 0.0
      %2247 = vmatpush1.msra.mxu0 0.0
      %2248 = vmatprep.subr.mxu0 0.0
      %2249 = vmatpush1.msra.mxu0 0.0
      %2250 = vmatprep.subr.mxu0 0.0
      %2251 = vmatpush1.msra.mxu0 0.0
      %2252 = vmatprep.subr.mxu0 0.0
      %2253 = vmatpush1.msra.mxu0 0.0
      %2254 = vmatprep.subr.mxu0 0.0
      %2255 = vmatpush1.msra.mxu0 0.0
      %2256 = vmatprep.subr.mxu0 0.0
      %2257 = vmatpush1.msra.mxu0 0.0
      %2258 = vmatprep.subr.mxu0 0.0
      %2259 = vmatpush1.msra.mxu0 0.0
      %2260 = vmatprep.subr.mxu0 0.0
      %2261 = vmatpush1.msra.mxu0 0.0
      %2262 = vmatprep.subr.mxu0 0.0
      %2263 = vmatpush1.msra.mxu0 0.0
      %2264 = vmatprep.subr.mxu0 0.0
      %2265 = vmatpush1.msra.mxu0 0.0
      %2266 = vmatprep.subr.mxu0 0.0
      %2267 = vmatpush1.msra.mxu0 0.0
      %2268 = vmatprep.subr.mxu0 0.0
      %2269 = vmatpush1.msra.mxu0 0.0
      %2270 = vmatprep.subr.mxu0 0.0
      %2271 = vmatpush1.msra.mxu0 0.0
      %2272 = vmatprep.subr.mxu0 0.0
      %2273 = vmatpush1.msra.mxu0 0.0
      %2274 = vmatprep.subr.mxu0 0.0
      %2275 = vmatpush1.msra.mxu0 0.0
      %2276 = vmatprep.subr.mxu0 0.0
      %2277 = vmatpush1.msra.mxu0 0.0
      %2278 = vmatprep.subr.mxu0 0.0
      %2279 = vmatpush1.msra.mxu0 0.0
      %2280 = vmatprep.subr.mxu0 0.0
      %2281 = vmatpush1.msra.mxu0 0.0
      %2282 = vmatprep.subr.mxu0 0.0
      %2283 = vmatpush1.msra.mxu0 0.0
      %2284 = vmatprep.subr.mxu0 0.0
      %2285 = vmatpush1.msra.mxu0 0.0
      %2286 = vmatprep.subr.mxu0 0.0
      %2287 = vmatpush1.msra.mxu0 0.0
      %2288 = vmatprep.subr.mxu0 0.0
      %2289 = vmatpush1.msra.mxu0 0.0
      %2290 = vmatprep.mubr.f32.mxu0 0.0
      %2291 = vmatmul.mubr.f32.gmra.mrb[0].mxu0 %v2220
      %v2292 = vpop.f32.mrb[0].mxu0
      %v2293 = vadd.f32 0.0, %v2292
      %v2294 = vpop.f32.mrb[0].mxu0
      %v2295 = vadd.f32 0.0, %v2294
      %2296 = vdwg.mxu0
      %2297 = vrot.lane.b32.xlu0 %v2204, 127
      %v2298 = vpop.permute.xlu0 %2297
      %2299 = vrot.lane.b32.xlu0 %v2210, 127
      %v2300 = vpop.permute.xlu0 %2299
      %2301 = vrot.lane.b32.xlu0 %v2205, 127
      %v2302 = vpop.permute.xlu0 %2301
      %v2303 = vsel %vm613, %v2298, %v2300
      %v2304 = vsel %vm613, %v2300, %v2302
      %v2306 = vsel %vm257, %v2206, 0
      %v2308 = vsel %vm261, %v2303, 0
      %v2310 = vsel %vm261, %v2304, 0
      %2312 = vmatprep.subr.mxu0 %v2310
      %2313 = vmatpush1.msra.mxu0 %v2308
      %2314 = vmatprep.subr.mxu0 0.0
      %2315 = vmatpush1.msra.mxu0 0.0
      %2316 = vmatprep.subr.mxu0 0.0
      %2317 = vmatpush1.msra.mxu0 0.0
      %2318 = vmatprep.subr.mxu0 0.0
      %2319 = vmatpush1.msra.mxu0 0.0
      %2320 = vmatprep.subr.mxu0 0.0
      %2321 = vmatpush1.msra.mxu0 0.0
      %2322 = vmatprep.subr.mxu0 0.0
      %2323 = vmatpush1.msra.mxu0 0.0
      %2324 = vmatprep.subr.mxu0 0.0
      %2325 = vmatpush1.msra.mxu0 0.0
      %2326 = vmatprep.subr.mxu0 0.0
      %2327 = vmatpush1.msra.mxu0 0.0
      %2328 = vmatprep.subr.mxu0 0.0
      %2329 = vmatpush1.msra.mxu0 0.0
      %2330 = vmatprep.subr.mxu0 0.0
      %2331 = vmatpush1.msra.mxu0 0.0
      %2332 = vmatprep.subr.mxu0 0.0
      %2333 = vmatpush1.msra.mxu0 0.0
      %2334 = vmatprep.subr.mxu0 0.0
      %2335 = vmatpush1.msra.mxu0 0.0
      %2336 = vmatprep.subr.mxu0 0.0
      %2337 = vmatpush1.msra.mxu0 0.0
      %2338 = vmatprep.subr.mxu0 0.0
      %2339 = vmatpush1.msra.mxu0 0.0
      %2340 = vmatprep.subr.mxu0 0.0
      %2341 = vmatpush1.msra.mxu0 0.0
      %2342 = vmatprep.subr.mxu0 0.0
      %2343 = vmatpush1.msra.mxu0 0.0
      %2344 = vmatprep.subr.mxu0 0.0
      %2345 = vmatpush1.msra.mxu0 0.0
      %2346 = vmatprep.subr.mxu0 0.0
      %2347 = vmatpush1.msra.mxu0 0.0
      %2348 = vmatprep.subr.mxu0 0.0
      %2349 = vmatpush1.msra.mxu0 0.0
      %2350 = vmatprep.subr.mxu0 0.0
      %2351 = vmatpush1.msra.mxu0 0.0
      %2352 = vmatprep.subr.mxu0 0.0
      %2353 = vmatpush1.msra.mxu0 0.0
      %2354 = vmatprep.subr.mxu0 0.0
      %2355 = vmatpush1.msra.mxu0 0.0
      %2356 = vmatprep.subr.mxu0 0.0
      %2357 = vmatpush1.msra.mxu0 0.0
      %2358 = vmatprep.subr.mxu0 0.0
      %2359 = vmatpush1.msra.mxu0 0.0
      %2360 = vmatprep.subr.mxu0 0.0
      %2361 = vmatpush1.msra.mxu0 0.0
      %2362 = vmatprep.subr.mxu0 0.0
      %2363 = vmatpush1.msra.mxu0 0.0
      %2364 = vmatprep.subr.mxu0 0.0
      %2365 = vmatpush1.msra.mxu0 0.0
      %2366 = vmatprep.subr.mxu0 0.0
      %2367 = vmatpush1.msra.mxu0 0.0
      %2368 = vmatprep.subr.mxu0 0.0
      %2369 = vmatpush1.msra.mxu0 0.0
      %2370 = vmatprep.subr.mxu0 0.0
      %2371 = vmatpush1.msra.mxu0 0.0
      %2372 = vmatprep.subr.mxu0 0.0
      %2373 = vmatpush1.msra.mxu0 0.0
      %2374 = vmatprep.subr.mxu0 0.0
      %2375 = vmatpush1.msra.mxu0 0.0
      %2376 = vmatprep.mubr.f32.mxu0 0.0
      %2377 = vmatmul.mubr.f32.gmra.mrb[0].mxu0 %v2306
      %v2378 = vpop.f32.mrb[0].mxu0
      %v2379 = vadd.f32 %v2293, %v2378
      %v2380 = vpop.f32.mrb[0].mxu0
      %v2381 = vadd.f32 %v2295, %v2380
      %2382 = vdwg.mxu0
      %v2383 = vld [vmem:[%s1938] sm:$0xff]
      %v2384 = vld [vmem:[%s1938 + $0x8] sm:$0xf]
      %v2385 = vld [vmem:[%s696] sm:$0xf]
      %v2388 = vcombine.high %v2383, %v2383
      %2389 = vrot.lane.b32.xlu0 %v2383, 95
      %v2390 = vpop.permute.xlu0 %2389
      %2391 = vrot.lane.b32.xlu0 %v2388, 95
      %v2392 = vpop.permute.xlu0 %2391
      %2393 = vrot.lane.b32.xlu0 %v2384, 95
      %v2394 = vpop.permute.xlu0 %2393
      %v2395 = vsel %vm707, %v2390, %v2392
      %v2396 = vsel %vm707, %v2392, %v2394
      %v2398 = vsel %vm257, %v2385, 0
      %v2400 = vsel %vm261, %v2395, 0
      %v2402 = vsel %vm261, %v2396, 0
      %2404 = vmatprep.subr.mxu0 %v2402
      %2405 = vmatpush1.msra.mxu0 %v2400
      %2406 = vmatprep.subr.mxu0 0.0
      %2407 = vmatpush1.msra.mxu0 0.0
      %2408 = vmatprep.subr.mxu0 0.0
      %2409 = vmatpush1.msra.mxu0 0.0
      %2410 = vmatprep.subr.mxu0 0.0
      %2411 = vmatpush1.msra.mxu0 0.0
      %2412 = vmatprep.subr.mxu0 0.0
      %2413 = vmatpush1.msra.mxu0 0.0
      %2414 = vmatprep.subr.mxu0 0.0
      %2415 = vmatpush1.msra.mxu0 0.0
      %2416 = vmatprep.subr.mxu0 0.0
      %2417 = vmatpush1.msra.mxu0 0.0
      %2418 = vmatprep.subr.mxu0 0.0
      %2419 = vmatpush1.msra.mxu0 0.0
      %2420 = vmatprep.subr.mxu0 0.0
      %2421 = vmatpush1.msra.mxu0 0.0
      %2422 = vmatprep.subr.mxu0 0.0
      %2423 = vmatpush1.msra.mxu0 0.0
      %2424 = vmatprep.subr.mxu0 0.0
      %2425 = vmatpush1.msra.mxu0 0.0
      %2426 = vmatprep.subr.mxu0 0.0
      %2427 = vmatpush1.msra.mxu0 0.0
      %2428 = vmatprep.subr.mxu0 0.0
      %2429 = vmatpush1.msra.mxu0 0.0
      %2430 = vmatprep.subr.mxu0 0.0
      %2431 = vmatpush1.msra.mxu0 0.0
      %2432 = vmatprep.subr.mxu0 0.0
      %2433 = vmatpush1.msra.mxu0 0.0
      %2434 = vmatprep.subr.mxu0 0.0
      %2435 = vmatpush1.msra.mxu0 0.0
      %2436 = vmatprep.subr.mxu0 0.0
      %2437 = vmatpush1.msra.mxu0 0.0
      %2438 = vmatprep.subr.mxu0 0.0
      %2439 = vmatpush1.msra.mxu0 0.0
      %2440 = vmatprep.subr.mxu0 0.0
      %2441 = vmatpush1.msra.mxu0 0.0
      %2442 = vmatprep.subr.mxu0 0.0
      %2443 = vmatpush1.msra.mxu0 0.0
      %2444 = vmatprep.subr.mxu0 0.0
      %2445 = vmatpush1.msra.mxu0 0.0
      %2446 = vmatprep.subr.mxu0 0.0
      %2447 = vmatpush1.msra.mxu0 0.0
      %2448 = vmatprep.subr.mxu0 0.0
      %2449 = vmatpush1.msra.mxu0 0.0
      %2450 = vmatprep.subr.mxu0 0.0
      %2451 = vmatpush1.msra.mxu0 0.0
      %2452 = vmatprep.subr.mxu0 0.0
      %2453 = vmatpush1.msra.mxu0 0.0
      %2454 = vmatprep.subr.mxu0 0.0
      %2455 = vmatpush1.msra.mxu0 0.0
      %2456 = vmatprep.subr.mxu0 0.0
      %2457 = vmatpush1.msra.mxu0 0.0
      %2458 = vmatprep.subr.mxu0 0.0
      %2459 = vmatpush1.msra.mxu0 0.0
      %2460 = vmatprep.subr.mxu0 0.0
      %2461 = vmatpush1.msra.mxu0 0.0
      %2462 = vmatprep.subr.mxu0 0.0
      %2463 = vmatpush1.msra.mxu0 0.0
      %2464 = vmatprep.subr.mxu0 0.0
      %2465 = vmatpush1.msra.mxu0 0.0
      %2466 = vmatprep.subr.mxu0 0.0
      %2467 = vmatpush1.msra.mxu0 0.0
      %2468 = vmatprep.mubr.f32.mxu0 0.0
      %2469 = vmatmul.mubr.f32.gmra.mrb[0].mxu0 %v2398
      %v2470 = vpop.f32.mrb[0].mxu0
      %v2471 = vadd.f32 0.0, %v2470
      %v2472 = vpop.f32.mrb[0].mxu0
      %v2473 = vadd.f32 0.0, %v2472
      %2474 = vdwg.mxu0
      %v2475 = vadd.f32 %v2379, %v2471
      %v2476 = vadd.f32 %v2381, %v2473
      %v2477 = vld [vmem:[%s1938] sm:$0xff]
      %v2478 = vld [vmem:[%s1938 + $0x8] sm:$0xf]
      %v2479 = vld [vmem:[%s792] sm:$0xf]
      %v2480 = vld [vmem:[%s794] sm:$0xf]
      %v2483 = vcombine.high %v2477, %v2477
      %2484 = vrot.lane.b32.xlu0 %v2477, 110
      %v2485 = vpop.permute.xlu0 %2484
      %2486 = vrot.lane.b32.xlu0 %v2483, 110
      %v2487 = vpop.permute.xlu0 %2486
      %2488 = vrot.lane.b32.xlu0 %v2478, 110
      %v2489 = vpop.permute.xlu0 %2488
      %v2490 = vsel %vm805, %v2485, %v2487
      %v2491 = vsel %vm805, %v2487, %v2489
      %v2493 = vsel %vm257, %v2480, 0
      %v2495 = vsel %vm261, %v2490, 0
      %v2497 = vsel %vm261, %v2491, 0
      %2499 = vmatprep.subr.mxu0 %v2497
      %2500 = vmatpush1.msra.mxu0 %v2495
      %2501 = vmatprep.subr.mxu0 0.0
      %2502 = vmatpush1.msra.mxu0 0.0
      %2503 = vmatprep.subr.mxu0 0.0
      %2504 = vmatpush1.msra.mxu0 0.0
      %2505 = vmatprep.subr.mxu0 0.0
      %2506 = vmatpush1.msra.mxu0 0.0
      %2507 = vmatprep.subr.mxu0 0.0
      %2508 = vmatpush1.msra.mxu0 0.0
      %2509 = vmatprep.subr.mxu0 0.0
      %2510 = vmatpush1.msra.mxu0 0.0
      %2511 = vmatprep.subr.mxu0 0.0
      %2512 = vmatpush1.msra.mxu0 0.0
      %2513 = vmatprep.subr.mxu0 0.0
      %2514 = vmatpush1.msra.mxu0 0.0
      %2515 = vmatprep.subr.mxu0 0.0
      %2516 = vmatpush1.msra.mxu0 0.0
      %2517 = vmatprep.subr.mxu0 0.0
      %2518 = vmatpush1.msra.mxu0 0.0
      %2519 = vmatprep.subr.mxu0 0.0
      %2520 = vmatpush1.msra.mxu0 0.0
      %2521 = vmatprep.subr.mxu0 0.0
      %2522 = vmatpush1.msra.mxu0 0.0
      %2523 = vmatprep.subr.mxu0 0.0
      %2524 = vmatpush1.msra.mxu0 0.0
      %2525 = vmatprep.subr.mxu0 0.0
      %2526 = vmatpush1.msra.mxu0 0.0
      %2527 = vmatprep.subr.mxu0 0.0
      %2528 = vmatpush1.msra.mxu0 0.0
      %2529 = vmatprep.subr.mxu0 0.0
      %2530 = vmatpush1.msra.mxu0 0.0
      %2531 = vmatprep.subr.mxu0 0.0
      %2532 = vmatpush1.msra.mxu0 0.0
      %2533 = vmatprep.subr.mxu0 0.0
      %2534 = vmatpush1.msra.mxu0 0.0
      %2535 = vmatprep.subr.mxu0 0.0
      %2536 = vmatpush1.msra.mxu0 0.0
      %2537 = vmatprep.subr.mxu0 0.0
      %2538 = vmatpush1.msra.mxu0 0.0
      %2539 = vmatprep.subr.mxu0 0.0
      %2540 = vmatpush1.msra.mxu0 0.0
      %2541 = vmatprep.subr.mxu0 0.0
      %2542 = vmatpush1.msra.mxu0 0.0
      %2543 = vmatprep.subr.mxu0 0.0
      %2544 = vmatpush1.msra.mxu0 0.0
      %2545 = vmatprep.subr.mxu0 0.0
      %2546 = vmatpush1.msra.mxu0 0.0
      %2547 = vmatprep.subr.mxu0 0.0
      %2548 = vmatpush1.msra.mxu0 0.0
      %2549 = vmatprep.subr.mxu0 0.0
      %2550 = vmatpush1.msra.mxu0 0.0
      %2551 = vmatprep.subr.mxu0 0.0
      %2552 = vmatpush1.msra.mxu0 0.0
      %2553 = vmatprep.subr.mxu0 0.0
      %2554 = vmatpush1.msra.mxu0 0.0
      %2555 = vmatprep.subr.mxu0 0.0
      %2556 = vmatpush1.msra.mxu0 0.0
      %2557 = vmatprep.subr.mxu0 0.0
      %2558 = vmatpush1.msra.mxu0 0.0
      %2559 = vmatprep.subr.mxu0 0.0
      %2560 = vmatpush1.msra.mxu0 0.0
      %2561 = vmatprep.subr.mxu0 0.0
      %2562 = vmatpush1.msra.mxu0 0.0
      %2563 = vmatprep.mubr.f32.mxu0 0.0
      %2564 = vmatmul.mubr.f32.gmra.mrb[0].mxu0 %v2493
      %v2565 = vpop.f32.mrb[0].mxu0
      %v2566 = vadd.f32 0.0, %v2565
      %v2567 = vpop.f32.mrb[0].mxu0
      %v2568 = vadd.f32 0.0, %v2567
      %2569 = vdwg.mxu0
      %2570 = vrot.lane.b32.xlu0 %v2477, 126
      %v2571 = vpop.permute.xlu0 %2570
      %2572 = vrot.lane.b32.xlu0 %v2483, 126
      %v2573 = vpop.permute.xlu0 %2572
      %2574 = vrot.lane.b32.xlu0 %v2478, 126
      %v2575 = vpop.permute.xlu0 %2574
      %v2576 = vsel %vm892, %v2571, %v2573
      %v2577 = vsel %vm892, %v2573, %v2575
      %v2579 = vsel %vm257, %v2479, 0
      %v2581 = vsel %vm261, %v2576, 0
      %v2583 = vsel %vm261, %v2577, 0
      %2585 = vmatprep.subr.mxu0 %v2583
      %2586 = vmatpush1.msra.mxu0 %v2581
      %2587 = vmatprep.subr.mxu0 0.0
      %2588 = vmatpush1.msra.mxu0 0.0
      %2589 = vmatprep.subr.mxu0 0.0
      %2590 = vmatpush1.msra.mxu0 0.0
      %2591 = vmatprep.subr.mxu0 0.0
      %2592 = vmatpush1.msra.mxu0 0.0
      %2593 = vmatprep.subr.mxu0 0.0
      %2594 = vmatpush1.msra.mxu0 0.0
      %2595 = vmatprep.subr.mxu0 0.0
      %2596 = vmatpush1.msra.mxu0 0.0
      %2597 = vmatprep.subr.mxu0 0.0
      %2598 = vmatpush1.msra.mxu0 0.0
      %2599 = vmatprep.subr.mxu0 0.0
      %2600 = vmatpush1.msra.mxu0 0.0
      %2601 = vmatprep.subr.mxu0 0.0
      %2602 = vmatpush1.msra.mxu0 0.0
      %2603 = vmatprep.subr.mxu0 0.0
      %2604 = vmatpush1.msra.mxu0 0.0
      %2605 = vmatprep.subr.mxu0 0.0
      %2606 = vmatpush1.msra.mxu0 0.0
      %2607 = vmatprep.subr.mxu0 0.0
      %2608 = vmatpush1.msra.mxu0 0.0
      %2609 = vmatprep.subr.mxu0 0.0
      %2610 = vmatpush1.msra.mxu0 0.0
      %2611 = vmatprep.subr.mxu0 0.0
      %2612 = vmatpush1.msra.mxu0 0.0
      %2613 = vmatprep.subr.mxu0 0.0
      %2614 = vmatpush1.msra.mxu0 0.0
      %2615 = vmatprep.subr.mxu0 0.0
      %2616 = vmatpush1.msra.mxu0 0.0
      %2617 = vmatprep.subr.mxu0 0.0
      %2618 = vmatpush1.msra.mxu0 0.0
      %2619 = vmatprep.subr.mxu0 0.0
      %2620 = vmatpush1.msra.mxu0 0.0
      %2621 = vmatprep.subr.mxu0 0.0
      %2622 = vmatpush1.msra.mxu0 0.0
      %2623 = vmatprep.subr.mxu0 0.0
      %2624 = vmatpush1.msra.mxu0 0.0
      %2625 = vmatprep.subr.mxu0 0.0
      %2626 = vmatpush1.msra.mxu0 0.0
      %2627 = vmatprep.subr.mxu0 0.0
      %2628 = vmatpush1.msra.mxu0 0.0
      %2629 = vmatprep.subr.mxu0 0.0
      %2630 = vmatpush1.msra.mxu0 0.0
      %2631 = vmatprep.subr.mxu0 0.0
      %2632 = vmatpush1.msra.mxu0 0.0
      %2633 = vmatprep.subr.mxu0 0.0
      %2634 = vmatpush1.msra.mxu0 0.0
      %2635 = vmatprep.subr.mxu0 0.0
      %2636 = vmatpush1.msra.mxu0 0.0
      %2637 = vmatprep.subr.mxu0 0.0
      %2638 = vmatpush1.msra.mxu0 0.0
      %2639 = vmatprep.subr.mxu0 0.0
      %2640 = vmatpush1.msra.mxu0 0.0
      %2641 = vmatprep.subr.mxu0 0.0
      %2642 = vmatpush1.msra.mxu0 0.0
      %2643 = vmatprep.subr.mxu0 0.0
      %2644 = vmatpush1.msra.mxu0 0.0
      %2645 = vmatprep.subr.mxu0 0.0
      %2646 = vmatpush1.msra.mxu0 0.0
      %2647 = vmatprep.subr.mxu0 0.0
      %2648 = vmatpush1.msra.mxu0 0.0
      %2649 = vmatprep.mubr.f32.mxu0 0.0
      %2650 = vmatmul.mubr.f32.gmra.mrb[0].mxu0 %v2579
      %v2651 = vpop.f32.mrb[0].mxu0
      %v2652 = vadd.f32 %v2566, %v2651
      %v2653 = vpop.f32.mrb[0].mxu0
      %v2654 = vadd.f32 %v2568, %v2653
      %2655 = vdwg.mxu0
      %v2656 = vld [vmem:[%s1938] sm:$0xff]
      %v2657 = vld [vmem:[%s1938 + $0x8] sm:$0xf]
      %v2658 = vld [vmem:[%s975] sm:$0xf]
      %v2661 = vcombine.high %v2656, %v2656
      %2662 = vrot.lane.b32.xlu0 %v2656, 94
      %v2663 = vpop.permute.xlu0 %2662
      %2664 = vrot.lane.b32.xlu0 %v2661, 94
      %v2665 = vpop.permute.xlu0 %2664
      %2666 = vrot.lane.b32.xlu0 %v2657, 94
      %v2667 = vpop.permute.xlu0 %2666
      %v2668 = vsel %vm986, %v2663, %v2665
      %v2669 = vsel %vm986, %v2665, %v2667
      %v2671 = vsel %vm257, %v2658, 0
      %v2673 = vsel %vm261, %v2668, 0
      %v2675 = vsel %vm261, %v2669, 0
      %2677 = vmatprep.subr.mxu0 %v2675
      %2678 = vmatpush1.msra.mxu0 %v2673
      %2679 = vmatprep.subr.mxu0 0.0
      %2680 = vmatpush1.msra.mxu0 0.0
      %2681 = vmatprep.subr.mxu0 0.0
      %2682 = vmatpush1.msra.mxu0 0.0
      %2683 = vmatprep.subr.mxu0 0.0
      %2684 = vmatpush1.msra.mxu0 0.0
      %2685 = vmatprep.subr.mxu0 0.0
      %2686 = vmatpush1.msra.mxu0 0.0
      %2687 = vmatprep.subr.mxu0 0.0
      %2688 = vmatpush1.msra.mxu0 0.0
      %2689 = vmatprep.subr.mxu0 0.0
      %2690 = vmatpush1.msra.mxu0 0.0
      %2691 = vmatprep.subr.mxu0 0.0
      %2692 = vmatpush1.msra.mxu0 0.0
      %2693 = vmatprep.subr.mxu0 0.0
      %2694 = vmatpush1.msra.mxu0 0.0
      %2695 = vmatprep.subr.mxu0 0.0
      %2696 = vmatpush1.msra.mxu0 0.0
      %2697 = vmatprep.subr.mxu0 0.0
      %2698 = vmatpush1.msra.mxu0 0.0
      %2699 = vmatprep.subr.mxu0 0.0
      %2700 = vmatpush1.msra.mxu0 0.0
      %2701 = vmatprep.subr.mxu0 0.0
      %2702 = vmatpush1.msra.mxu0 0.0
      %2703 = vmatprep.subr.mxu0 0.0
      %2704 = vmatpush1.msra.mxu0 0.0
      %2705 = vmatprep.subr.mxu0 0.0
      %2706 = vmatpush1.msra.mxu0 0.0
      %2707 = vmatprep.subr.mxu0 0.0
      %2708 = vmatpush1.msra.mxu0 0.0
      %2709 = vmatprep.subr.mxu0 0.0
      %2710 = vmatpush1.msra.mxu0 0.0
      %2711 = vmatprep.subr.mxu0 0.0
      %2712 = vmatpush1.msra.mxu0 0.0
      %2713 = vmatprep.subr.mxu0 0.0
      %2714 = vmatpush1.msra.mxu0 0.0
      %2715 = vmatprep.subr.mxu0 0.0
      %2716 = vmatpush1.msra.mxu0 0.0
      %2717 = vmatprep.subr.mxu0 0.0
      %2718 = vmatpush1.msra.mxu0 0.0
      %2719 = vmatprep.subr.mxu0 0.0
      %2720 = vmatpush1.msra.mxu0 0.0
      %2721 = vmatprep.subr.mxu0 0.0
      %2722 = vmatpush1.msra.mxu0 0.0
      %2723 = vmatprep.subr.mxu0 0.0
      %2724 = vmatpush1.msra.mxu0 0.0
      %2725 = vmatprep.subr.mxu0 0.0
      %2726 = vmatpush1.msra.mxu0 0.0
      %2727 = vmatprep.subr.mxu0 0.0
      %2728 = vmatpush1.msra.mxu0 0.0
      %2729 = vmatprep.subr.mxu0 0.0
      %2730 = vmatpush1.msra.mxu0 0.0
      %2731 = vmatprep.subr.mxu0 0.0
      %2732 = vmatpush1.msra.mxu0 0.0
      %2733 = vmatprep.subr.mxu0 0.0
      %2734 = vmatpush1.msra.mxu0 0.0
      %2735 = vmatprep.subr.mxu0 0.0
      %2736 = vmatpush1.msra.mxu0 0.0
      %2737 = vmatprep.subr.mxu0 0.0
      %2738 = vmatpush1.msra.mxu0 0.0
      %2739 = vmatprep.subr.mxu0 0.0
      %2740 = vmatpush1.msra.mxu0 0.0
      %2741 = vmatprep.mubr.f32.mxu0 0.0
      %2742 = vmatmul.mubr.f32.gmra.mrb[0].mxu0 %v2671
      %v2743 = vpop.f32.mrb[0].mxu0
      %v2744 = vadd.f32 0.0, %v2743
      %v2745 = vpop.f32.mrb[0].mxu0
      %v2746 = vadd.f32 0.0, %v2745
      %2747 = vdwg.mxu0
      %v2748 = vadd.f32 %v2652, %v2744
      %v2749 = vadd.f32 %v2654, %v2746
      %v2750 = vsel %vm1071, %v2202, 0.0
      %v2751 = vsel %vm1072, %v2203, 0.0
      %v2752 = vadd.f32 %v2475, %v2750
      %v2753 = vadd.f32 %v2476, %v2751
      %v2754 = vsel %vm1079, %v2748, 0.0
      %v2755 = vsel %vm1080, %v2749, 0.0
      %v2756 = vadd.f32 %v2752, %v2754
      %v2757 = vadd.f32 %v2753, %v2755
      %v2758 = vadd.f32 %v2756, %v1088
      %v2759 = vadd.f32 %v2757, %v1088
      %vm2760 = vcmp.ge.f32.partialorder %v2758, 0.0
      %vm2761 = vcmp.ge.f32.partialorder %v2759, 0.0
      %v2762 = vmul.f32 %v1094, %v2758
      %v2763 = vmul.f32 %v1094, %v2759
      %v2764 = vsel %vm2760, %v2758, %v2762
      %v2765 = vsel %vm2761, %v2759, %v2763
      %v2768 = vcombine.low %v2764, %v2765
      %s2770 = scalar_lea.vmem %s205, 16
      %2771 = vst [vmem:[%s2770] sm:$0xff] %v2768
      %s2772 = scalar_lea.vmem %s198, 36
      %v2773 = vld [vmem:[%s2772] sm:$0xff]
      %v2774 = vld [vmem:[%s1] sm:$0xf]
      %v2775 = vld [vmem:[%s2772 + $0x8] sm:$0xf]
      %v2776 = vld [vmem:[%s243] sm:$0xf]
      %v2779 = vcombine.high %v2773, %v2773
      %2780 = vrot.lane.b32.xlu0 %v2773, 112
      %v2781 = vpop.permute.xlu0 %2780
      %2782 = vrot.lane.b32.xlu0 %v2779, 112
      %v2783 = vpop.permute.xlu0 %2782
      %2784 = vrot.lane.b32.xlu0 %v2775, 112
      %v2785 = vpop.permute.xlu0 %2784
      %v2786 = vsel %vm254, %v2781, %v2783
      %v2787 = vsel %vm254, %v2783, %v2785
      %v2789 = vsel %vm257, %v2776, 0
      %v2791 = vsel %vm261, %v2786, 0
      %v2793 = vsel %vm261, %v2787, 0
      %2795 = vmatprep.subr.mxu0 %v2793
      %2796 = vmatpush1.msra.mxu0 %v2791
      %2797 = vmatprep.subr.mxu0 0.0
      %2798 = vmatpush1.msra.mxu0 0.0
      %2799 = vmatprep.subr.mxu0 0.0
      %2800 = vmatpush1.msra.mxu0 0.0
      %2801 = vmatprep.subr.mxu0 0.0
      %2802 = vmatpush1.msra.mxu0 0.0
      %2803 = vmatprep.subr.mxu0 0.0
      %2804 = vmatpush1.msra.mxu0 0.0
      %2805 = vmatprep.subr.mxu0 0.0
      %2806 = vmatpush1.msra.mxu0 0.0
      %2807 = vmatprep.subr.mxu0 0.0
      %2808 = vmatpush1.msra.mxu0 0.0
      %2809 = vmatprep.subr.mxu0 0.0
      %2810 = vmatpush1.msra.mxu0 0.0
      %2811 = vmatprep.subr.mxu0 0.0
      %2812 = vmatpush1.msra.mxu0 0.0
      %2813 = vmatprep.subr.mxu0 0.0
      %2814 = vmatpush1.msra.mxu0 0.0
      %2815 = vmatprep.subr.mxu0 0.0
      %2816 = vmatpush1.msra.mxu0 0.0
      %2817 = vmatprep.subr.mxu0 0.0
      %2818 = vmatpush1.msra.mxu0 0.0
      %2819 = vmatprep.subr.mxu0 0.0
      %2820 = vmatpush1.msra.mxu0 0.0
      %2821 = vmatprep.subr.mxu0 0.0
      %2822 = vmatpush1.msra.mxu0 0.0
      %2823 = vmatprep.subr.mxu0 0.0
      %2824 = vmatpush1.msra.mxu0 0.0
      %2825 = vmatprep.subr.mxu0 0.0
      %2826 = vmatpush1.msra.mxu0 0.0
      %2827 = vmatprep.subr.mxu0 0.0
      %2828 = vmatpush1.msra.mxu0 0.0
      %2829 = vmatprep.subr.mxu0 0.0
      %2830 = vmatpush1.msra.mxu0 0.0
      %2831 = vmatprep.subr.mxu0 0.0
      %2832 = vmatpush1.msra.mxu0 0.0
      %2833 = vmatprep.subr.mxu0 0.0
      %2834 = vmatpush1.msra.mxu0 0.0
      %2835 = vmatprep.subr.mxu0 0.0
      %2836 = vmatpush1.msra.mxu0 0.0
      %2837 = vmatprep.subr.mxu0 0.0
      %2838 = vmatpush1.msra.mxu0 0.0
      %2839 = vmatprep.subr.mxu0 0.0
      %2840 = vmatpush1.msra.mxu0 0.0
      %2841 = vmatprep.subr.mxu0 0.0
      %2842 = vmatpush1.msra.mxu0 0.0
      %2843 = vmatprep.subr.mxu0 0.0
      %2844 = vmatpush1.msra.mxu0 0.0
      %2845 = vmatprep.subr.mxu0 0.0
      %2846 = vmatpush1.msra.mxu0 0.0
      %2847 = vmatprep.subr.mxu0 0.0
      %2848 = vmatpush1.msra.mxu0 0.0
      %2849 = vmatprep.subr.mxu0 0.0
      %2850 = vmatpush1.msra.mxu0 0.0
      %2851 = vmatprep.subr.mxu0 0.0
      %2852 = vmatpush1.msra.mxu0 0.0
      %2853 = vmatprep.subr.mxu0 0.0
      %2854 = vmatpush1.msra.mxu0 0.0
      %2855 = vmatprep.subr.mxu0 0.0
      %2856 = vmatpush1.msra.mxu0 0.0
      %2857 = vmatprep.subr.mxu0 0.0
      %2858 = vmatpush1.msra.mxu0 0.0
      %2859 = vmatprep.mubr.f32.mxu0 0.0
      %2860 = vmatmul.mubr.f32.gmra.mrb[0].mxu0 %v2789
      %v2861 = vpop.f32.mrb[0].mxu0
      %v2862 = vadd.f32 0.0, %v2861
      %v2863 = vpop.f32.mrb[0].mxu0
      %v2864 = vadd.f32 0.0, %v2863
      %2865 = vdwg.mxu0
      %v2867 = vsel %vm257, %v2774, 0
      %v2869 = vsel %vm261, %v2773, 0
      %v2871 = vsel %vm261, %v2779, 0
      %2873 = vmatprep.subr.mxu0 %v2871
      %2874 = vmatpush1.msra.mxu0 %v2869
      %2875 = vmatprep.subr.mxu0 0.0
      %2876 = vmatpush1.msra.mxu0 0.0
      %2877 = vmatprep.subr.mxu0 0.0
      %2878 = vmatpush1.msra.mxu0 0.0
      %2879 = vmatprep.subr.mxu0 0.0
      %2880 = vmatpush1.msra.mxu0 0.0
      %2881 = vmatprep.subr.mxu0 0.0
      %2882 = vmatpush1.msra.mxu0 0.0
      %2883 = vmatprep.subr.mxu0 0.0
      %2884 = vmatpush1.msra.mxu0 0.0
      %2885 = vmatprep.subr.mxu0 0.0
      %2886 = vmatpush1.msra.mxu0 0.0
      %2887 = vmatprep.subr.mxu0 0.0
      %2888 = vmatpush1.msra.mxu0 0.0
      %2889 = vmatprep.subr.mxu0 0.0
      %2890 = vmatpush1.msra.mxu0 0.0
      %2891 = vmatprep.subr.mxu0 0.0
      %2892 = vmatpush1.msra.mxu0 0.0
      %2893 = vmatprep.subr.mxu0 0.0
      %2894 = vmatpush1.msra.mxu0 0.0
      %2895 = vmatprep.subr.mxu0 0.0
      %2896 = vmatpush1.msra.mxu0 0.0
      %2897 = vmatprep.subr.mxu0 0.0
      %2898 = vmatpush1.msra.mxu0 0.0
      %2899 = vmatprep.subr.mxu0 0.0
      %2900 = vmatpush1.msra.mxu0 0.0
      %2901 = vmatprep.subr.mxu0 0.0
      %2902 = vmatpush1.msra.mxu0 0.0
      %2903 = vmatprep.subr.mxu0 0.0
      %2904 = vmatpush1.msra.mxu0 0.0
      %2905 = vmatprep.subr.mxu0 0.0
      %2906 = vmatpush1.msra.mxu0 0.0
      %2907 = vmatprep.subr.mxu0 0.0
      %2908 = vmatpush1.msra.mxu0 0.0
      %2909 = vmatprep.subr.mxu0 0.0
      %2910 = vmatpush1.msra.mxu0 0.0
      %2911 = vmatprep.subr.mxu0 0.0
      %2912 = vmatpush1.msra.mxu0 0.0
      %2913 = vmatprep.subr.mxu0 0.0
      %2914 = vmatpush1.msra.mxu0 0.0
      %2915 = vmatprep.subr.mxu0 0.0
      %2916 = vmatpush1.msra.mxu0 0.0
      %2917 = vmatprep.subr.mxu0 0.0
      %2918 = vmatpush1.msra.mxu0 0.0
      %2919 = vmatprep.subr.mxu0 0.0
      %2920 = vmatpush1.msra.mxu0 0.0
      %2921 = vmatprep.subr.mxu0 0.0
      %2922 = vmatpush1.msra.mxu0 0.0
      %2923 = vmatprep.subr.mxu0 0.0
      %2924 = vmatpush1.msra.mxu0 0.0
      %2925 = vmatprep.subr.mxu0 0.0
      %2926 = vmatpush1.msra.mxu0 0.0
      %2927 = vmatprep.subr.mxu0 0.0
      %2928 = vmatpush1.msra.mxu0 0.0
      %2929 = vmatprep.subr.mxu0 0.0
      %2930 = vmatpush1.msra.mxu0 0.0
      %2931 = vmatprep.subr.mxu0 0.0
      %2932 = vmatpush1.msra.mxu0 0.0
      %2933 = vmatprep.subr.mxu0 0.0
      %2934 = vmatpush1.msra.mxu0 0.0
      %2935 = vmatprep.subr.mxu0 0.0
      %2936 = vmatpush1.msra.mxu0 0.0
      %2937 = vmatprep.mubr.f32.mxu0 0.0
      %2938 = vmatmul.mubr.f32.gmra.mrb[0].mxu0 %v2867
      %v2939 = vpop.f32.mrb[0].mxu0
      %v2940 = vadd.f32 %v2862, %v2939
      %v2941 = vpop.f32.mrb[0].mxu0
      %v2942 = vadd.f32 %v2864, %v2941
      %2943 = vdwg.mxu0
      %v2944 = vld [vmem:[%s2772] sm:$0xff]
      %v2945 = vld [vmem:[%s2772 + $0x8] sm:$0xf]
      %v2946 = vld [vmem:[%s417] sm:$0xf]
      %v2949 = vcombine.high %v2944, %v2944
      %2950 = vrot.lane.b32.xlu0 %v2944, 96
      %v2951 = vpop.permute.xlu0 %2950
      %2952 = vrot.lane.b32.xlu0 %v2949, 96
      %v2953 = vpop.permute.xlu0 %2952
      %2954 = vrot.lane.b32.xlu0 %v2945, 96
      %v2955 = vpop.permute.xlu0 %2954
      %v2956 = vsel %vm428, %v2951, %v2953
      %v2957 = vsel %vm428, %v2953, %v2955
      %v2959 = vsel %vm257, %v2946, 0
      %v2961 = vsel %vm261, %v2956, 0
      %v2963 = vsel %vm261, %v2957, 0
      %2965 = vmatprep.subr.mxu0 %v2963
      %2966 = vmatpush1.msra.mxu0 %v2961
      %2967 = vmatprep.subr.mxu0 0.0
      %2968 = vmatpush1.msra.mxu0 0.0
      %2969 = vmatprep.subr.mxu0 0.0
      %2970 = vmatpush1.msra.mxu0 0.0
      %2971 = vmatprep.subr.mxu0 0.0
      %2972 = vmatpush1.msra.mxu0 0.0
      %2973 = vmatprep.subr.mxu0 0.0
      %2974 = vmatpush1.msra.mxu0 0.0
      %2975 = vmatprep.subr.mxu0 0.0
      %2976 = vmatpush1.msra.mxu0 0.0
      %2977 = vmatprep.subr.mxu0 0.0
      %2978 = vmatpush1.msra.mxu0 0.0
      %2979 = vmatprep.subr.mxu0 0.0
      %2980 = vmatpush1.msra.mxu0 0.0
      %2981 = vmatprep.subr.mxu0 0.0
      %2982 = vmatpush1.msra.mxu0 0.0
      %2983 = vmatprep.subr.mxu0 0.0
      %2984 = vmatpush1.msra.mxu0 0.0
      %2985 = vmatprep.subr.mxu0 0.0
      %2986 = vmatpush1.msra.mxu0 0.0
      %2987 = vmatprep.subr.mxu0 0.0
      %2988 = vmatpush1.msra.mxu0 0.0
      %2989 = vmatprep.subr.mxu0 0.0
      %2990 = vmatpush1.msra.mxu0 0.0
      %2991 = vmatprep.subr.mxu0 0.0
      %2992 = vmatpush1.msra.mxu0 0.0
      %2993 = vmatprep.subr.mxu0 0.0
      %2994 = vmatpush1.msra.mxu0 0.0
      %2995 = vmatprep.subr.mxu0 0.0
      %2996 = vmatpush1.msra.mxu0 0.0
      %2997 = vmatprep.subr.mxu0 0.0
      %2998 = vmatpush1.msra.mxu0 0.0
      %2999 = vmatprep.subr.mxu0 0.0
      %3000 = vmatpush1.msra.mxu0 0.0
      %3001 = vmatprep.subr.mxu0 0.0
      %3002 = vmatpush1.msra.mxu0 0.0
      %3003 = vmatprep.subr.mxu0 0.0
      %3004 = vmatpush1.msra.mxu0 0.0
      %3005 = vmatprep.subr.mxu0 0.0
      %3006 = vmatpush1.msra.mxu0 0.0
      %3007 = vmatprep.subr.mxu0 0.0
      %3008 = vmatpush1.msra.mxu0 0.0
      %3009 = vmatprep.subr.mxu0 0.0
      %3010 = vmatpush1.msra.mxu0 0.0
      %3011 = vmatprep.subr.mxu0 0.0
      %3012 = vmatpush1.msra.mxu0 0.0
      %3013 = vmatprep.subr.mxu0 0.0
      %3014 = vmatpush1.msra.mxu0 0.0
      %3015 = vmatprep.subr.mxu0 0.0
      %3016 = vmatpush1.msra.mxu0 0.0
      %3017 = vmatprep.subr.mxu0 0.0
      %3018 = vmatpush1.msra.mxu0 0.0
      %3019 = vmatprep.subr.mxu0 0.0
      %3020 = vmatpush1.msra.mxu0 0.0
      %3021 = vmatprep.subr.mxu0 0.0
      %3022 = vmatpush1.msra.mxu0 0.0
      %3023 = vmatprep.subr.mxu0 0.0
      %3024 = vmatpush1.msra.mxu0 0.0
      %3025 = vmatprep.subr.mxu0 0.0
      %3026 = vmatpush1.msra.mxu0 0.0
      %3027 = vmatprep.subr.mxu0 0.0
      %3028 = vmatpush1.msra.mxu0 0.0
      %3029 = vmatprep.mubr.f32.mxu0 0.0
      %3030 = vmatmul.mubr.f32.gmra.mrb[0].mxu0 %v2959
      %v3031 = vpop.f32.mrb[0].mxu0
      %v3032 = vadd.f32 0.0, %v3031
      %v3033 = vpop.f32.mrb[0].mxu0
      %v3034 = vadd.f32 0.0, %v3033
      %3035 = vdwg.mxu0
      %v3036 = vadd.f32 %v2940, %v3032
      %v3037 = vadd.f32 %v2942, %v3034
      %v3038 = vld [vmem:[%s2772] sm:$0xff]
      %v3039 = vld [vmem:[%s2772 + $0x8] sm:$0xf]
      %v3040 = vld [vmem:[%s513] sm:$0xf]
      %v3041 = vld [vmem:[%s515] sm:$0xf]
      %v3044 = vcombine.high %v3038, %v3038
      %3045 = vrot.lane.b32.xlu0 %v3038, 111
      %v3046 = vpop.permute.xlu0 %3045
      %3047 = vrot.lane.b32.xlu0 %v3044, 111
      %v3048 = vpop.permute.xlu0 %3047
      %3049 = vrot.lane.b32.xlu0 %v3039, 111
      %v3050 = vpop.permute.xlu0 %3049
      %v3051 = vsel %vm526, %v3046, %v3048
      %v3052 = vsel %vm526, %v3048, %v3050
      %v3054 = vsel %vm257, %v3041, 0
      %v3056 = vsel %vm261, %v3051, 0
      %v3058 = vsel %vm261, %v3052, 0
      %3060 = vmatprep.subr.mxu0 %v3058
      %3061 = vmatpush1.msra.mxu0 %v3056
      %3062 = vmatprep.subr.mxu0 0.0
      %3063 = vmatpush1.msra.mxu0 0.0
      %3064 = vmatprep.subr.mxu0 0.0
      %3065 = vmatpush1.msra.mxu0 0.0
      %3066 = vmatprep.subr.mxu0 0.0
      %3067 = vmatpush1.msra.mxu0 0.0
      %3068 = vmatprep.subr.mxu0 0.0
      %3069 = vmatpush1.msra.mxu0 0.0
      %3070 = vmatprep.subr.mxu0 0.0
      %3071 = vmatpush1.msra.mxu0 0.0
      %3072 = vmatprep.subr.mxu0 0.0
      %3073 = vmatpush1.msra.mxu0 0.0
      %3074 = vmatprep.subr.mxu0 0.0
      %3075 = vmatpush1.msra.mxu0 0.0
      %3076 = vmatprep.subr.mxu0 0.0
      %3077 = vmatpush1.msra.mxu0 0.0
      %3078 = vmatprep.subr.mxu0 0.0
      %3079 = vmatpush1.msra.mxu0 0.0
      %3080 = vmatprep.subr.mxu0 0.0
      %3081 = vmatpush1.msra.mxu0 0.0
      %3082 = vmatprep.subr.mxu0 0.0
      %3083 = vmatpush1.msra.mxu0 0.0
      %3084 = vmatprep.subr.mxu0 0.0
      %3085 = vmatpush1.msra.mxu0 0.0
      %3086 = vmatprep.subr.mxu0 0.0
      %3087 = vmatpush1.msra.mxu0 0.0
      %3088 = vmatprep.subr.mxu0 0.0
      %3089 = vmatpush1.msra.mxu0 0.0
      %3090 = vmatprep.subr.mxu0 0.0
      %3091 = vmatpush1.msra.mxu0 0.0
      %3092 = vmatprep.subr.mxu0 0.0
      %3093 = vmatpush1.msra.mxu0 0.0
      %3094 = vmatprep.subr.mxu0 0.0
      %3095 = vmatpush1.msra.mxu0 0.0
      %3096 = vmatprep.subr.mxu0 0.0
      %3097 = vmatpush1.msra.mxu0 0.0
      %3098 = vmatprep.subr.mxu0 0.0
      %3099 = vmatpush1.msra.mxu0 0.0
      %3100 = vmatprep.subr.mxu0 0.0
      %3101 = vmatpush1.msra.mxu0 0.0
      %3102 = vmatprep.subr.mxu0 0.0
      %3103 = vmatpush1.msra.mxu0 0.0
      %3104 = vmatprep.subr.mxu0 0.0
      %3105 = vmatpush1.msra.mxu0 0.0
      %3106 = vmatprep.subr.mxu0 0.0
      %3107 = vmatpush1.msra.mxu0 0.0
      %3108 = vmatprep.subr.mxu0 0.0
      %3109 = vmatpush1.msra.mxu0 0.0
      %3110 = vmatprep.subr.mxu0 0.0
      %3111 = vmatpush1.msra.mxu0 0.0
      %3112 = vmatprep.subr.mxu0 0.0
      %3113 = vmatpush1.msra.mxu0 0.0
      %3114 = vmatprep.subr.mxu0 0.0
      %3115 = vmatpush1.msra.mxu0 0.0
      %3116 = vmatprep.subr.mxu0 0.0
      %3117 = vmatpush1.msra.mxu0 0.0
      %3118 = vmatprep.subr.mxu0 0.0
      %3119 = vmatpush1.msra.mxu0 0.0
      %3120 = vmatprep.subr.mxu0 0.0
      %3121 = vmatpush1.msra.mxu0 0.0
      %3122 = vmatprep.subr.mxu0 0.0
      %3123 = vmatpush1.msra.mxu0 0.0
      %3124 = vmatprep.mubr.f32.mxu0 0.0
      %3125 = vmatmul.mubr.f32.gmra.mrb[0].mxu0 %v3054
      %v3126 = vpop.f32.mrb[0].mxu0
      %v3127 = vadd.f32 0.0, %v3126
      %v3128 = vpop.f32.mrb[0].mxu0
      %v3129 = vadd.f32 0.0, %v3128
      %3130 = vdwg.mxu0
      %3131 = vrot.lane.b32.xlu0 %v3038, 127
      %v3132 = vpop.permute.xlu0 %3131
      %3133 = vrot.lane.b32.xlu0 %v3044, 127
      %v3134 = vpop.permute.xlu0 %3133
      %3135 = vrot.lane.b32.xlu0 %v3039, 127
      %v3136 = vpop.permute.xlu0 %3135
      %v3137 = vsel %vm613, %v3132, %v3134
      %v3138 = vsel %vm613, %v3134, %v3136
      %v3140 = vsel %vm257, %v3040, 0
      %v3142 = vsel %vm261, %v3137, 0
      %v3144 = vsel %vm261, %v3138, 0
      %3146 = vmatprep.subr.mxu0 %v3144
      %3147 = vmatpush1.msra.mxu0 %v3142
      %3148 = vmatprep.subr.mxu0 0.0
      %3149 = vmatpush1.msra.mxu0 0.0
      %3150 = vmatprep.subr.mxu0 0.0
      %3151 = vmatpush1.msra.mxu0 0.0
      %3152 = vmatprep.subr.mxu0 0.0
      %3153 = vmatpush1.msra.mxu0 0.0
      %3154 = vmatprep.subr.mxu0 0.0
      %3155 = vmatpush1.msra.mxu0 0.0
      %3156 = vmatprep.subr.mxu0 0.0
      %3157 = vmatpush1.msra.mxu0 0.0
      %3158 = vmatprep.subr.mxu0 0.0
      %3159 = vmatpush1.msra.mxu0 0.0
      %3160 = vmatprep.subr.mxu0 0.0
      %3161 = vmatpush1.msra.mxu0 0.0
      %3162 = vmatprep.subr.mxu0 0.0
      %3163 = vmatpush1.msra.mxu0 0.0
      %3164 = vmatprep.subr.mxu0 0.0
      %3165 = vmatpush1.msra.mxu0 0.0
      %3166 = vmatprep.subr.mxu0 0.0
      %3167 = vmatpush1.msra.mxu0 0.0
      %3168 = vmatprep.subr.mxu0 0.0
      %3169 = vmatpush1.msra.mxu0 0.0
      %3170 = vmatprep.subr.mxu0 0.0
      %3171 = vmatpush1.msra.mxu0 0.0
      %3172 = vmatprep.subr.mxu0 0.0
      %3173 = vmatpush1.msra.mxu0 0.0
      %3174 = vmatprep.subr.mxu0 0.0
      %3175 = vmatpush1.msra.mxu0 0.0
      %3176 = vmatprep.subr.mxu0 0.0
      %3177 = vmatpush1.msra.mxu0 0.0
      %3178 = vmatprep.subr.mxu0 0.0
      %3179 = vmatpush1.msra.mxu0 0.0
      %3180 = vmatprep.subr.mxu0 0.0
      %3181 = vmatpush1.msra.mxu0 0.0
      %3182 = vmatprep.subr.mxu0 0.0
      %3183 = vmatpush1.msra.mxu0 0.0
      %3184 = vmatprep.subr.mxu0 0.0
      %3185 = vmatpush1.msra.mxu0 0.0
      %3186 = vmatprep.subr.mxu0 0.0
      %3187 = vmatpush1.msra.mxu0 0.0
      %3188 = vmatprep.subr.mxu0 0.0
      %3189 = vmatpush1.msra.mxu0 0.0
      %3190 = vmatprep.subr.mxu0 0.0
      %3191 = vmatpush1.msra.mxu0 0.0
      %3192 = vmatprep.subr.mxu0 0.0
      %3193 = vmatpush1.msra.mxu0 0.0
      %3194 = vmatprep.subr.mxu0 0.0
      %3195 = vmatpush1.msra.mxu0 0.0
      %3196 = vmatprep.subr.mxu0 0.0
      %3197 = vmatpush1.msra.mxu0 0.0
      %3198 = vmatprep.subr.mxu0 0.0
      %3199 = vmatpush1.msra.mxu0 0.0
      %3200 = vmatprep.subr.mxu0 0.0
      %3201 = vmatpush1.msra.mxu0 0.0
      %3202 = vmatprep.subr.mxu0 0.0
      %3203 = vmatpush1.msra.mxu0 0.0
      %3204 = vmatprep.subr.mxu0 0.0
      %3205 = vmatpush1.msra.mxu0 0.0
      %3206 = vmatprep.subr.mxu0 0.0
      %3207 = vmatpush1.msra.mxu0 0.0
      %3208 = vmatprep.subr.mxu0 0.0
      %3209 = vmatpush1.msra.mxu0 0.0
      %3210 = vmatprep.mubr.f32.mxu0 0.0
      %3211 = vmatmul.mubr.f32.gmra.mrb[0].mxu0 %v3140
      %v3212 = vpop.f32.mrb[0].mxu0
      %v3213 = vadd.f32 %v3127, %v3212
      %v3214 = vpop.f32.mrb[0].mxu0
      %v3215 = vadd.f32 %v3129, %v3214
      %3216 = vdwg.mxu0
      %v3217 = vld [vmem:[%s2772] sm:$0xff]
      %v3218 = vld [vmem:[%s2772 + $0x8] sm:$0xf]
      %v3219 = vld [vmem:[%s696] sm:$0xf]
      %v3222 = vcombine.high %v3217, %v3217
      %3223 = vrot.lane.b32.xlu0 %v3217, 95
      %v3224 = vpop.permute.xlu0 %3223
      %3225 = vrot.lane.b32.xlu0 %v3222, 95
      %v3226 = vpop.permute.xlu0 %3225
      %3227 = vrot.lane.b32.xlu0 %v3218, 95
      %v3228 = vpop.permute.xlu0 %3227
      %v3229 = vsel %vm707, %v3224, %v3226
      %v3230 = vsel %vm707, %v3226, %v3228
      %v3232 = vsel %vm257, %v3219, 0
      %v3234 = vsel %vm261, %v3229, 0
      %v3236 = vsel %vm261, %v3230, 0
      %3238 = vmatprep.subr.mxu0 %v3236
      %3239 = vmatpush1.msra.mxu0 %v3234
      %3240 = vmatprep.subr.mxu0 0.0
      %3241 = vmatpush1.msra.mxu0 0.0
      %3242 = vmatprep.subr.mxu0 0.0
      %3243 = vmatpush1.msra.mxu0 0.0
      %3244 = vmatprep.subr.mxu0 0.0
      %3245 = vmatpush1.msra.mxu0 0.0
      %3246 = vmatprep.subr.mxu0 0.0
      %3247 = vmatpush1.msra.mxu0 0.0
      %3248 = vmatprep.subr.mxu0 0.0
      %3249 = vmatpush1.msra.mxu0 0.0
      %3250 = vmatprep.subr.mxu0 0.0
      %3251 = vmatpush1.msra.mxu0 0.0
      %3252 = vmatprep.subr.mxu0 0.0
      %3253 = vmatpush1.msra.mxu0 0.0
      %3254 = vmatprep.subr.mxu0 0.0
      %3255 = vmatpush1.msra.mxu0 0.0
      %3256 = vmatprep.subr.mxu0 0.0
      %3257 = vmatpush1.msra.mxu0 0.0
      %3258 = vmatprep.subr.mxu0 0.0
      %3259 = vmatpush1.msra.mxu0 0.0
      %3260 = vmatprep.subr.mxu0 0.0
      %3261 = vmatpush1.msra.mxu0 0.0
      %3262 = vmatprep.subr.mxu0 0.0
      %3263 = vmatpush1.msra.mxu0 0.0
      %3264 = vmatprep.subr.mxu0 0.0
      %3265 = vmatpush1.msra.mxu0 0.0
      %3266 = vmatprep.subr.mxu0 0.0
      %3267 = vmatpush1.msra.mxu0 0.0
      %3268 = vmatprep.subr.mxu0 0.0
      %3269 = vmatpush1.msra.mxu0 0.0
      %3270 = vmatprep.subr.mxu0 0.0
      %3271 = vmatpush1.msra.mxu0 0.0
      %3272 = vmatprep.subr.mxu0 0.0
      %3273 = vmatpush1.msra.mxu0 0.0
      %3274 = vmatprep.subr.mxu0 0.0
      %3275 = vmatpush1.msra.mxu0 0.0
      %3276 = vmatprep.subr.mxu0 0.0
      %3277 = vmatpush1.msra.mxu0 0.0
      %3278 = vmatprep.subr.mxu0 0.0
      %3279 = vmatpush1.msra.mxu0 0.0
      %3280 = vmatprep.subr.mxu0 0.0
      %3281 = vmatpush1.msra.mxu0 0.0
      %3282 = vmatprep.subr.mxu0 0.0
      %3283 = vmatpush1.msra.mxu0 0.0
      %3284 = vmatprep.subr.mxu0 0.0
      %3285 = vmatpush1.msra.mxu0 0.0
      %3286 = vmatprep.subr.mxu0 0.0
      %3287 = vmatpush1.msra.mxu0 0.0
      %3288 = vmatprep.subr.mxu0 0.0
      %3289 = vmatpush1.msra.mxu0 0.0
      %3290 = vmatprep.subr.mxu0 0.0
      %3291 = vmatpush1.msra.mxu0 0.0
      %3292 = vmatprep.subr.mxu0 0.0
      %3293 = vmatpush1.msra.mxu0 0.0
      %3294 = vmatprep.subr.mxu0 0.0
      %3295 = vmatpush1.msra.mxu0 0.0
      %3296 = vmatprep.subr.mxu0 0.0
      %3297 = vmatpush1.msra.mxu0 0.0
      %3298 = vmatprep.subr.mxu0 0.0
      %3299 = vmatpush1.msra.mxu0 0.0
      %3300 = vmatprep.subr.mxu0 0.0
      %3301 = vmatpush1.msra.mxu0 0.0
      %3302 = vmatprep.mubr.f32.mxu0 0.0
      %3303 = vmatmul.mubr.f32.gmra.mrb[0].mxu0 %v3232
      %v3304 = vpop.f32.mrb[0].mxu0
      %v3305 = vadd.f32 0.0, %v3304
      %v3306 = vpop.f32.mrb[0].mxu0
      %v3307 = vadd.f32 0.0, %v3306
      %3308 = vdwg.mxu0
      %v3309 = vadd.f32 %v3213, %v3305
      %v3310 = vadd.f32 %v3215, %v3307
      %v3311 = vld [vmem:[%s2772] sm:$0xff]
      %v3312 = vld [vmem:[%s2772 + $0x8] sm:$0xf]
      %v3313 = vld [vmem:[%s792] sm:$0xf]
      %v3314 = vld [vmem:[%s794] sm:$0xf]
      %v3317 = vcombine.high %v3311, %v3311
      %3318 = vrot.lane.b32.xlu0 %v3311, 110
      %v3319 = vpop.permute.xlu0 %3318
      %3320 = vrot.lane.b32.xlu0 %v3317, 110
      %v3321 = vpop.permute.xlu0 %3320
      %3322 = vrot.lane.b32.xlu0 %v3312, 110
      %v3323 = vpop.permute.xlu0 %3322
      %v3324 = vsel %vm805, %v3319, %v3321
      %v3325 = vsel %vm805, %v3321, %v3323
      %v3327 = vsel %vm257, %v3314, 0
      %v3329 = vsel %vm261, %v3324, 0
      %v3331 = vsel %vm261, %v3325, 0
      %3333 = vmatprep.subr.mxu0 %v3331
      %3334 = vmatpush1.msra.mxu0 %v3329
      %3335 = vmatprep.subr.mxu0 0.0
      %3336 = vmatpush1.msra.mxu0 0.0
      %3337 = vmatprep.subr.mxu0 0.0
      %3338 = vmatpush1.msra.mxu0 0.0
      %3339 = vmatprep.subr.mxu0 0.0
      %3340 = vmatpush1.msra.mxu0 0.0
      %3341 = vmatprep.subr.mxu0 0.0
      %3342 = vmatpush1.msra.mxu0 0.0
      %3343 = vmatprep.subr.mxu0 0.0
      %3344 = vmatpush1.msra.mxu0 0.0
      %3345 = vmatprep.subr.mxu0 0.0
      %3346 = vmatpush1.msra.mxu0 0.0
      %3347 = vmatprep.subr.mxu0 0.0
      %3348 = vmatpush1.msra.mxu0 0.0
      %3349 = vmatprep.subr.mxu0 0.0
      %3350 = vmatpush1.msra.mxu0 0.0
      %3351 = vmatprep.subr.mxu0 0.0
      %3352 = vmatpush1.msra.mxu0 0.0
      %3353 = vmatprep.subr.mxu0 0.0
      %3354 = vmatpush1.msra.mxu0 0.0
      %3355 = vmatprep.subr.mxu0 0.0
      %3356 = vmatpush1.msra.mxu0 0.0
      %3357 = vmatprep.subr.mxu0 0.0
      %3358 = vmatpush1.msra.mxu0 0.0
      %3359 = vmatprep.subr.mxu0 0.0
      %3360 = vmatpush1.msra.mxu0 0.0
      %3361 = vmatprep.subr.mxu0 0.0
      %3362 = vmatpush1.msra.mxu0 0.0
      %3363 = vmatprep.subr.mxu0 0.0
      %3364 = vmatpush1.msra.mxu0 0.0
      %3365 = vmatprep.subr.mxu0 0.0
      %3366 = vmatpush1.msra.mxu0 0.0
      %3367 = vmatprep.subr.mxu0 0.0
      %3368 = vmatpush1.msra.mxu0 0.0
      %3369 = vmatprep.subr.mxu0 0.0
      %3370 = vmatpush1.msra.mxu0 0.0
      %3371 = vmatprep.subr.mxu0 0.0
      %3372 = vmatpush1.msra.mxu0 0.0
      %3373 = vmatprep.subr.mxu0 0.0
      %3374 = vmatpush1.msra.mxu0 0.0
      %3375 = vmatprep.subr.mxu0 0.0
      %3376 = vmatpush1.msra.mxu0 0.0
      %3377 = vmatprep.subr.mxu0 0.0
      %3378 = vmatpush1.msra.mxu0 0.0
      %3379 = vmatprep.subr.mxu0 0.0
      %3380 = vmatpush1.msra.mxu0 0.0
      %3381 = vmatprep.subr.mxu0 0.0
      %3382 = vmatpush1.msra.mxu0 0.0
      %3383 = vmatprep.subr.mxu0 0.0
      %3384 = vmatpush1.msra.mxu0 0.0
      %3385 = vmatprep.subr.mxu0 0.0
      %3386 = vmatpush1.msra.mxu0 0.0
      %3387 = vmatprep.subr.mxu0 0.0
      %3388 = vmatpush1.msra.mxu0 0.0
      %3389 = vmatprep.subr.mxu0 0.0
      %3390 = vmatpush1.msra.mxu0 0.0
      %3391 = vmatprep.subr.mxu0 0.0
      %3392 = vmatpush1.msra.mxu0 0.0
      %3393 = vmatprep.subr.mxu0 0.0
      %3394 = vmatpush1.msra.mxu0 0.0
      %3395 = vmatprep.subr.mxu0 0.0
      %3396 = vmatpush1.msra.mxu0 0.0
      %3397 = vmatprep.mubr.f32.mxu0 0.0
      %3398 = vmatmul.mubr.f32.gmra.mrb[0].mxu0 %v3327
      %v3399 = vpop.f32.mrb[0].mxu0
      %v3400 = vadd.f32 0.0, %v3399
      %v3401 = vpop.f32.mrb[0].mxu0
      %v3402 = vadd.f32 0.0, %v3401
      %3403 = vdwg.mxu0
      %3404 = vrot.lane.b32.xlu0 %v3311, 126
      %v3405 = vpop.permute.xlu0 %3404
      %3406 = vrot.lane.b32.xlu0 %v3317, 126
      %v3407 = vpop.permute.xlu0 %3406
      %3408 = vrot.lane.b32.xlu0 %v3312, 126
      %v3409 = vpop.permute.xlu0 %3408
      %v3410 = vsel %vm892, %v3405, %v3407
      %v3411 = vsel %vm892, %v3407, %v3409
      %v3413 = vsel %vm257, %v3313, 0
      %v3415 = vsel %vm261, %v3410, 0
      %v3417 = vsel %vm261, %v3411, 0
      %3419 = vmatprep.subr.mxu0 %v3417
      %3420 = vmatpush1.msra.mxu0 %v3415
      %3421 = vmatprep.subr.mxu0 0.0
      %3422 = vmatpush1.msra.mxu0 0.0
      %3423 = vmatprep.subr.mxu0 0.0
      %3424 = vmatpush1.msra.mxu0 0.0
      %3425 = vmatprep.subr.mxu0 0.0
      %3426 = vmatpush1.msra.mxu0 0.0
      %3427 = vmatprep.subr.mxu0 0.0
      %3428 = vmatpush1.msra.mxu0 0.0
      %3429 = vmatprep.subr.mxu0 0.0
      %3430 = vmatpush1.msra.mxu0 0.0
      %3431 = vmatprep.subr.mxu0 0.0
      %3432 = vmatpush1.msra.mxu0 0.0
      %3433 = vmatprep.subr.mxu0 0.0
      %3434 = vmatpush1.msra.mxu0 0.0
      %3435 = vmatprep.subr.mxu0 0.0
      %3436 = vmatpush1.msra.mxu0 0.0
      %3437 = vmatprep.subr.mxu0 0.0
      %3438 = vmatpush1.msra.mxu0 0.0
      %3439 = vmatprep.subr.mxu0 0.0
      %3440 = vmatpush1.msra.mxu0 0.0
      %3441 = vmatprep.subr.mxu0 0.0
      %3442 = vmatpush1.msra.mxu0 0.0
      %3443 = vmatprep.subr.mxu0 0.0
      %3444 = vmatpush1.msra.mxu0 0.0
      %3445 = vmatprep.subr.mxu0 0.0
      %3446 = vmatpush1.msra.mxu0 0.0
      %3447 = vmatprep.subr.mxu0 0.0
      %3448 = vmatpush1.msra.mxu0 0.0
      %3449 = vmatprep.subr.mxu0 0.0
      %3450 = vmatpush1.msra.mxu0 0.0
      %3451 = vmatprep.subr.mxu0 0.0
      %3452 = vmatpush1.msra.mxu0 0.0
      %3453 = vmatprep.subr.mxu0 0.0
      %3454 = vmatpush1.msra.mxu0 0.0
      %3455 = vmatprep.subr.mxu0 0.0
      %3456 = vmatpush1.msra.mxu0 0.0
      %3457 = vmatprep.subr.mxu0 0.0
      %3458 = vmatpush1.msra.mxu0 0.0
      %3459 = vmatprep.subr.mxu0 0.0
      %3460 = vmatpush1.msra.mxu0 0.0
      %3461 = vmatprep.subr.mxu0 0.0
      %3462 = vmatpush1.msra.mxu0 0.0
      %3463 = vmatprep.subr.mxu0 0.0
      %3464 = vmatpush1.msra.mxu0 0.0
      %3465 = vmatprep.subr.mxu0 0.0
      %3466 = vmatpush1.msra.mxu0 0.0
      %3467 = vmatprep.subr.mxu0 0.0
      %3468 = vmatpush1.msra.mxu0 0.0
      %3469 = vmatprep.subr.mxu0 0.0
      %3470 = vmatpush1.msra.mxu0 0.0
      %3471 = vmatprep.subr.mxu0 0.0
      %3472 = vmatpush1.msra.mxu0 0.0
      %3473 = vmatprep.subr.mxu0 0.0
      %3474 = vmatpush1.msra.mxu0 0.0
      %3475 = vmatprep.subr.mxu0 0.0
      %3476 = vmatpush1.msra.mxu0 0.0
      %3477 = vmatprep.subr.mxu0 0.0
      %3478 = vmatpush1.msra.mxu0 0.0
      %3479 = vmatprep.subr.mxu0 0.0
      %3480 = vmatpush1.msra.mxu0 0.0
      %3481 = vmatprep.subr.mxu0 0.0
      %3482 = vmatpush1.msra.mxu0 0.0
      %3483 = vmatprep.mubr.f32.mxu0 0.0
      %3484 = vmatmul.mubr.f32.gmra.mrb[0].mxu0 %v3413
      %v3485 = vpop.f32.mrb[0].mxu0
      %v3486 = vadd.f32 %v3400, %v3485
      %v3487 = vpop.f32.mrb[0].mxu0
      %v3488 = vadd.f32 %v3402, %v3487
      %3489 = vdwg.mxu0
      %v3490 = vld [vmem:[%s2772] sm:$0xff]
      %v3491 = vld [vmem:[%s2772 + $0x8] sm:$0xf]
      %v3492 = vld [vmem:[%s975] sm:$0xf]
      %v3495 = vcombine.high %v3490, %v3490
      %3496 = vrot.lane.b32.xlu0 %v3490, 94
      %v3497 = vpop.permute.xlu0 %3496
      %3498 = vrot.lane.b32.xlu0 %v3495, 94
      %v3499 = vpop.permute.xlu0 %3498
      %3500 = vrot.lane.b32.xlu0 %v3491, 94
      %v3501 = vpop.permute.xlu0 %3500
      %v3502 = vsel %vm986, %v3497, %v3499
      %v3503 = vsel %vm986, %v3499, %v3501
      %v3505 = vsel %vm257, %v3492, 0
      %v3507 = vsel %vm261, %v3502, 0
      %v3509 = vsel %vm261, %v3503, 0
      %3511 = vmatprep.subr.mxu0 %v3509
      %3512 = vmatpush1.msra.mxu0 %v3507
      %3513 = vmatprep.subr.mxu0 0.0
      %3514 = vmatpush1.msra.mxu0 0.0
      %3515 = vmatprep.subr.mxu0 0.0
      %3516 = vmatpush1.msra.mxu0 0.0
      %3517 = vmatprep.subr.mxu0 0.0
      %3518 = vmatpush1.msra.mxu0 0.0
      %3519 = vmatprep.subr.mxu0 0.0
      %3520 = vmatpush1.msra.mxu0 0.0
      %3521 = vmatprep.subr.mxu0 0.0
      %3522 = vmatpush1.msra.mxu0 0.0
      %3523 = vmatprep.subr.mxu0 0.0
      %3524 = vmatpush1.msra.mxu0 0.0
      %3525 = vmatprep.subr.mxu0 0.0
      %3526 = vmatpush1.msra.mxu0 0.0
      %3527 = vmatprep.subr.mxu0 0.0
      %3528 = vmatpush1.msra.mxu0 0.0
      %3529 = vmatprep.subr.mxu0 0.0
      %3530 = vmatpush1.msra.mxu0 0.0
      %3531 = vmatprep.subr.mxu0 0.0
      %3532 = vmatpush1.msra.mxu0 0.0
      %3533 = vmatprep.subr.mxu0 0.0
      %3534 = vmatpush1.msra.mxu0 0.0
      %3535 = vmatprep.subr.mxu0 0.0
      %3536 = vmatpush1.msra.mxu0 0.0
      %3537 = vmatprep.subr.mxu0 0.0
      %3538 = vmatpush1.msra.mxu0 0.0
      %3539 = vmatprep.subr.mxu0 0.0
      %3540 = vmatpush1.msra.mxu0 0.0
      %3541 = vmatprep.subr.mxu0 0.0
      %3542 = vmatpush1.msra.mxu0 0.0
      %3543 = vmatprep.subr.mxu0 0.0
      %3544 = vmatpush1.msra.mxu0 0.0
      %3545 = vmatprep.subr.mxu0 0.0
      %3546 = vmatpush1.msra.mxu0 0.0
      %3547 = vmatprep.subr.mxu0 0.0
      %3548 = vmatpush1.msra.mxu0 0.0
      %3549 = vmatprep.subr.mxu0 0.0
      %3550 = vmatpush1.msra.mxu0 0.0
      %3551 = vmatprep.subr.mxu0 0.0
      %3552 = vmatpush1.msra.mxu0 0.0
      %3553 = vmatprep.subr.mxu0 0.0
      %3554 = vmatpush1.msra.mxu0 0.0
      %3555 = vmatprep.subr.mxu0 0.0
      %3556 = vmatpush1.msra.mxu0 0.0
      %3557 = vmatprep.subr.mxu0 0.0
      %3558 = vmatpush1.msra.mxu0 0.0
      %3559 = vmatprep.subr.mxu0 0.0
      %3560 = vmatpush1.msra.mxu0 0.0
      %3561 = vmatprep.subr.mxu0 0.0
      %3562 = vmatpush1.msra.mxu0 0.0
      %3563 = vmatprep.subr.mxu0 0.0
      %3564 = vmatpush1.msra.mxu0 0.0
      %3565 = vmatprep.subr.mxu0 0.0
      %3566 = vmatpush1.msra.mxu0 0.0
      %3567 = vmatprep.subr.mxu0 0.0
      %3568 = vmatpush1.msra.mxu0 0.0
      %3569 = vmatprep.subr.mxu0 0.0
      %3570 = vmatpush1.msra.mxu0 0.0
      %3571 = vmatprep.subr.mxu0 0.0
      %3572 = vmatpush1.msra.mxu0 0.0
      %3573 = vmatprep.subr.mxu0 0.0
      %3574 = vmatpush1.msra.mxu0 0.0
      %3575 = vmatprep.mubr.f32.mxu0 0.0
      %3576 = vmatmul.mubr.f32.gmra.mrb[0].mxu0 %v3505
      %v3577 = vpop.f32.mrb[0].mxu0
      %v3578 = vadd.f32 0.0, %v3577
      %v3579 = vpop.f32.mrb[0].mxu0
      %v3580 = vadd.f32 0.0, %v3579
      %3581 = vdwg.mxu0
      %v3582 = vadd.f32 %v3486, %v3578
      %v3583 = vadd.f32 %v3488, %v3580
      %v3584 = vsel %vm1071, %v3036, 0.0
      %v3585 = vsel %vm1072, %v3037, 0.0
      %v3586 = vadd.f32 %v3309, %v3584
      %v3587 = vadd.f32 %v3310, %v3585
      %v3588 = vsel %vm1079, %v3582, 0.0
      %v3589 = vsel %vm1080, %v3583, 0.0
      %v3590 = vadd.f32 %v3586, %v3588
      %v3591 = vadd.f32 %v3587, %v3589
      %v3592 = vadd.f32 %v3590, %v1088
      %v3593 = vadd.f32 %v3591, %v1088
      %vm3594 = vcmp.ge.f32.partialorder %v3592, 0.0
      %vm3595 = vcmp.ge.f32.partialorder %v3593, 0.0
      %v3596 = vmul.f32 %v1094, %v3592
      %v3597 = vmul.f32 %v1094, %v3593
      %v3598 = vsel %vm3594, %v3592, %v3596
      %v3599 = vsel %vm3595, %v3593, %v3597
      %v3602 = vcombine.low %v3598, %v3599
      %s3604 = scalar_lea.vmem %s205, 24
      %3605 = vst [vmem:[%s3604] sm:$0xff] %v3602
      %s3606 = smul.u32 4, %s16
      %p3607 = scmp.lt.s32.totalorder %s3606, 7
      %s3608 = scalar_select %p3607, %s3606, 7
      %s3609 = smul.addr %s3608, 2
      %s3610 = smul.addr %s3609, 4
      %s3611 = scalar_lea.vmem %s4, %s3610
      // Predicated region
      $region37: #{conv_prelu_forward.1} parent=35 // pred_check
        %p3612 = pneg %p123
      $region38: #{conv_prelu_forward.1} parent=35 // pred_check_branch
        %3614 = sbr.rel (%p3612) target = $region40
      $region39: #{conv_prelu_forward.1} parent=35 // pred_region
        %s3615 = smul.u32 4, %s16
      $region40: #{conv_prelu_forward.1} parent=35 // pred_fallthru
        _
    $region36: #{conv_prelu_forward.1} parent=5 // pred_fallthru
      _
    %p3616 = scmp.le.s32.totalorder 2, %s11
    // Predicated region
    $region41: #{conv_prelu_forward.1} parent=5 // pred_check
      %p3617 = pneg %p3616
    $region42: #{conv_prelu_forward.1} parent=5 // pred_check_branch
      %3619 = sbr.rel (%p3617) target = $region44
    $region43: #{conv_prelu_forward.1} parent=5 // pred_region
      %s3620 = ssub.s32 %s11, 2
      // Predicated region
      $region45: #{conv_prelu_forward.1} parent=43 // pred_check
        %p3621 = pneg %p129
      $region46: #{conv_prelu_forward.1} parent=43 // pred_check_branch
        %3623 = sbr.rel (%p3621) target = $region48
      $region47: #{conv_prelu_forward.1} parent=43 // pred_region
        %s3624 = smul.u32 4, %s17
        %p3625 = scmp.lt.s32.totalorder %s3624, 7
        %s3626 = scalar_select %p3625, %s3624, 7
        %s3627 = smul.addr %s3626, 2
        %s3628 = smul.addr %s3627, 4
        %s3629 = scalar_lea.vmem %s4, %s3628
      $region48: #{conv_prelu_forward.1} parent=43 // pred_fallthru
        _
    $region44: #{conv_prelu_forward.1} parent=5 // pred_fallthru
      _
  $region6: #{conv_prelu_forward.1} parent=0 // loop_footer
    %s15 = sadd.s32 1, %s11
  $region7: #{conv_prelu_forward.1} parent=0 // loop_footer_branch
    %10 = sbr.rel target = $region3
  $region8: #{conv_prelu_forward.1} parent=0 // loop_exit
    _

</llo_original>
